<compile_context>
chip_gen: v5e
topology: v5e:2x2
jax: 0.10.0
libtpu: 0.0.40
codegen_flags: <defaults>
</compile_context>

<pallas_src>
import functools

import jax
import jax.numpy as jnp
from jax import lax
from jax.experimental import pallas as pl
from jax.experimental.pallas import tpu as pltpu

LANE = 128  # TPU lane width; channels are padded to a multiple of this.


# --------------------------------------------------------------------------- #
# Kernel 1: conv1 (9 shifted MXU matmuls) + BN1 sum / sum-of-squares.
# --------------------------------------------------------------------------- #
def _conv_stats_kernel(xp_ref, w_ref, z_ref, stats_ref):
    """One image per grid step.

    xp_ref:    (1, H+2, W+2, Cp)  halo-padded, channel-padded input
    w_ref:     (9, Cp, Cp)        3x3 weights laid out as (dy*3+dx, Cin, Cout)
    z_ref:     (1, H, W, Cp)      pre-BN conv output for this image
    stats_ref: (2, Cp)            [sum, sumsq] accumulated over the whole batch
                                  (resident accumulator: constant block index).
    """
    n = pl.program_id(0)

    @pl.when(n == 0)
    def _init():
        stats_ref[...] = jnp.zeros_like(stats_ref)

    _, H, W, Cp = z_ref.shape
    acc = jnp.zeros((H * W, Cp), jnp.float32)
    # 3x3 "same" conv == sum over 9 shifted (H*W, Cp) x (Cp, Cp) matmuls.
    for dy in range(3):
        for dx in range(3):
            patch = xp_ref[0, dy:dy + H, dx:dx + W, :].reshape(H * W, Cp)
            acc = acc + jnp.dot(patch, w_ref[dy * 3 + dx],
                                preferred_element_type=jnp.float32)

    z_ref[...] = acc.reshape(1, H, W, Cp)
    # One-pass BN stats (var = E[x^2] - E[x]^2): no second sweep over acc later.
    stats_ref[0:1, :] += jnp.sum(acc, axis=0, keepdims=True)
    stats_ref[1:2, :] += jnp.sum(acc * acc, axis=0, keepdims=True)


# --------------------------------------------------------------------------- #
# Kernel 2: BN1 + ReLU -> conv2 + BN2 stats, fused (h1 stays in VMEM scratch).
# --------------------------------------------------------------------------- #
def _bn_relu_conv_stats_kernel(z1_ref, stats1_ref, g1_ref, b1_ref, w2_ref,
                               z2_ref, stats2_ref, hpad_ref, *, eps, count):
    n = pl.program_id(0)
    _, H, W, Cp = z1_ref.shape

    @pl.when(n == 0)
    def _init():
        stats2_ref[...] = jnp.zeros_like(stats2_ref)
        hpad_ref[...] = jnp.zeros_like(hpad_ref)   # zero halo border once

    inv_count = 1.0 / count
    mean = stats1_ref[0:1, :] * inv_count                       # (1, Cp)
    var = stats1_ref[1:2, :] * inv_count - mean * mean          # biased (training)
    scale = lax.rsqrt(var + eps) * g1_ref[...]
    shift = b1_ref[...] - mean * scale

    h1 = jnp.maximum(z1_ref[0] * scale.reshape(1, 1, Cp)
                     + shift.reshape(1, 1, Cp), 0.0)            # (H, W, Cp)
    hpad_ref[1:H + 1, 1:W + 1, :] = h1        # interior store; border stays 0

    acc = jnp.zeros((H * W, Cp), jnp.float32)
    for dy in range(3):
        for dx in range(3):
            patch = hpad_ref[dy:dy + H, dx:dx + W, :].reshape(H * W, Cp)
            acc = acc + jnp.dot(patch, w2_ref[dy * 3 + dx],
                                preferred_element_type=jnp.float32)

    z2_ref[...] = acc.reshape(1, H, W, Cp)
    stats2_ref[0:1, :] += jnp.sum(acc, axis=0, keepdims=True)
    stats2_ref[1:2, :] += jnp.sum(acc * acc, axis=0, keepdims=True)


# --------------------------------------------------------------------------- #
# Kernel 3: BN2 + residual add + ReLU (purely per-image -> parallel axis).
# --------------------------------------------------------------------------- #
def _bn_res_relu_kernel(z2_ref, stats2_ref, g2_ref, b2_ref, xp_ref, out_ref,
                        *, eps, count):
    _, H, W, Cp = out_ref.shape
    inv_count = 1.0 / count
    mean = stats2_ref[0:1, :] * inv_count
    var = stats2_ref[1:2, :] * inv_count - mean * mean
    scale = lax.rsqrt(var + eps) * g2_ref[...]
    shift = b2_ref[...] - mean * scale

    res = xp_ref[0, 1:H + 1, 1:W + 1, :]      # interior of padded x = residual
    y = z2_ref[0] * scale.reshape(1, 1, Cp) + shift.reshape(1, 1, Cp) + res
    out_ref[...] = jnp.maximum(y, 0.0).reshape(1, H, W, Cp)


# ------------------------------- Wrapper / API ------------------------------ #
def resnet_block(x_nchw, params, eps=1e-5):
    """ResNetBlock forward (subsample=False). NCHW in/out like PyTorch."""
    N, C, H, W = x_nchw.shape
    Cp = max(LANE, ((C + LANE - 1) // LANE) * LANE)
    count = float(N * H * W)

    # Layout plumbing (outside the kernels): NCHW -> NHWC, lane-pad channels,
    # spatial halo pad for the 3x3 convs.
    x = jnp.transpose(x_nchw, (0, 2, 3, 1)).astype(jnp.float32)        # NHWC
    xp = jnp.pad(x, ((0, 0), (1, 1), (1, 1), (0, Cp - C)))             # halo+chan

    def pad_w(w_hwio):                         # (3,3,C,C) -> (9, Cp, Cp)
        w = jnp.pad(w_hwio.astype(jnp.float32),
                    ((0, 0), (0, 0), (0, Cp - C), (0, Cp - C)))
        return w.reshape(9, Cp, Cp)

    def pad_v(v, fill):
        return jnp.pad(v.astype(jnp.float32).reshape(1, C),
                       ((0, 0), (0, Cp - C)), constant_values=fill)

    w1, w2 = pad_w(params["w1"]), pad_w(params["w2"])
    g1, b1 = pad_v(params["g1"], 1.0), pad_v(params["b1"], 0.0)
    g2, b2 = pad_v(params["g2"], 1.0), pad_v(params["b2"], 0.0)

    img_spec = pl.BlockSpec((1, H, W, Cp), lambda n: (n, 0, 0, 0))
    halo_spec = pl.BlockSpec((1, H + 2, W + 2, Cp), lambda n: (n, 0, 0, 0))
    w_spec = pl.BlockSpec((9, Cp, Cp), lambda n: (0, 0, 0))
    stats_spec = pl.BlockSpec((2, Cp), lambda n: (0, 0))
    vec_spec = pl.BlockSpec((1, Cp), lambda n: (0, 0))

    # ---- conv1 + bn1 batch stats ------------------------------------------ #
    z1, stats1 = pl.pallas_call(
        _conv_stats_kernel,
        out_shape=(jax.ShapeDtypeStruct((N, H, W, Cp), jnp.float32),
                   jax.ShapeDtypeStruct((2, Cp), jnp.float32)),
        grid_spec=pltpu.PrefetchScalarGridSpec(
            num_scalar_prefetch=0, grid=(N,),
            in_specs=[halo_spec, w_spec],
            out_specs=[img_spec, stats_spec]),
        compiler_params=pltpu.CompilerParams(
            dimension_semantics=("arbitrary",)),   # stats accumulate across n
    )(xp, w1)

    # ---- bn1 + relu -> conv2 + bn2 stats (fused; h1 never hits HBM) -------- #
    z2, stats2 = pl.pallas_call(
        functools.partial(_bn_relu_conv_stats_kernel, eps=eps, count=count),
        out_shape=(jax.ShapeDtypeStruct((N, H, W, Cp), jnp.float32),
                   jax.ShapeDtypeStruct((2, Cp), jnp.float32)),
        grid_spec=pltpu.PrefetchScalarGridSpec(
            num_scalar_prefetch=0, grid=(N,),
            in_specs=[img_spec, stats_spec, vec_spec, vec_spec, w_spec],
            out_specs=[img_spec, stats_spec],
            scratch_shapes=[pltpu.VMEM((H + 2, W + 2, Cp), jnp.float32)]),
        compiler_params=pltpu.CompilerParams(
            dimension_semantics=("arbitrary",)),
    )(z1, stats1, g1, b1, w2)

    # ---- bn2 + residual + relu --------------------------------------------- #
    out_p = pl.pallas_call(
        functools.partial(_bn_res_relu_kernel, eps=eps, count=count),
        out_shape=jax.ShapeDtypeStruct((N, H, W, Cp), jnp.float32),
        grid_spec=pltpu.PrefetchScalarGridSpec(
            num_scalar_prefetch=0, grid=(N,),
            in_specs=[img_spec, stats_spec, vec_spec, vec_spec, halo_spec],
            out_specs=img_spec),
        compiler_params=pltpu.CompilerParams(
            dimension_semantics=("parallel",)),
    )(z2, stats2, g2, b2, xp)

    out = out_p[:, :, :, :C]                           # drop channel padding
    return jnp.transpose(out, (0, 3, 1, 2))            # NHWC -> NCHW


# ---------------------------- Pure-JAX reference --------------------------- #
def resnet_block_ref(x_nchw, params, eps=1e-5):
    def conv(x, w_hwio):
        return lax.conv_general_dilated(
            x, w_hwio, window_strides=(1, 1), padding=((1, 1), (1, 1)),
            dimension_numbers=("NCHW", "HWIO", "NCHW"))

    def bn(x, g, b):
        mean = x.mean(axis=(0, 2, 3), keepdims=True)
        var = ((x - mean) ** 2).mean(axis=(0, 2, 3), keepdims=True)
        return ((x - mean) * lax.rsqrt(var + eps)
                * g.reshape(1, -1, 1, 1) + b.reshape(1, -1, 1, 1))

    z = conv(x_nchw, params["w1"])
    z = jnp.maximum(bn(z, params["g1"], params["b1"]), 0.0)
    z = conv(z, params["w2"])
    z = bn(z, params["g2"], params["b2"])
    return jnp.maximum(z + x_nchw, 0.0)


# ---------------------------------- Main ----------------------------------- #
if __name__ == "__main__":
    N, C, H, W = 2, 4, 16, 16        # input_features=4, subsample=False
    key = jax.random.PRNGKey(0)
    k_x, k_w1, k_w2, k_g1, k_b1, k_g2, k_b2 = jax.random.split(key, 7)

    x = jax.random.normal(k_x, (N, C, H, W), dtype=jnp.float32)

    params = {
        "w1": 0.1 * jax.random.normal(k_w1, (3, 3, C, C), dtype=jnp.float32),
        "g1": 1.0 + 0.1 * jax.random.normal(k_g1, (C,), dtype=jnp.float32),
        "b1": 0.1 * jax.random.normal(k_b1, (C,), dtype=jnp.float32),
        "w2": 0.1 * jax.random.normal(k_w2, (3, 3, C, C), dtype=jnp.float32),
        "g2": 1.0 + 0.1 * jax.random.normal(k_g2, (C,), dtype=jnp.float32),
        "b2": 0.1 * jax.random.normal(k_b2, (C,), dtype=jnp.float32),
    }

    out = jax.block_until_ready(jax.jit(resnet_block)(x, params))
    ref = jax.block_until_ready(resnet_block_ref(x, params))

    assert out.shape == (N, C, H, W) and out.dtype == jnp.float32
    assert jnp.allclose(out, ref, atol=1e-4, rtol=1e-4), (
        float(jnp.max(jnp.abs(out - ref))))

    print("KERNEL_OK")
</pallas_src>

<mosaic_0001>
module attributes {stable_mosaic.version = 11 : i64} {
  func.func @_conv_stats_kernel(%arg0: i32, %arg1: memref<1x18x18x128xf32, #tpu.memory_space<vmem>>, %arg2: memref<9x128x128xf32, #tpu.memory_space<vmem>>, %arg3: memref<1x16x16x128xf32, #tpu.memory_space<vmem>>, %arg4: memref<2x128xf32, #tpu.memory_space<vmem>>) attributes {dimension_semantics = [#tpu.dimension_semantics<arbitrary>], iteration_bounds = array<i64: 2>, scalar_prefetch = 0 : i64, scratch_operands = 0 : i64, tpu.core_type = #tpu.core_type<tc>, window_params = [{transform_indices = @transform_0, window_bounds = array<i64: 1, 18, 18, 128>}, {pipeline_mode = #tpu.pipeline_mode<synchronous>, transform_indices = @transform_1, window_bounds = array<i64: 9, 128, 128>}, {transform_indices = @transform_2, window_bounds = array<i64: 1, 16, 16, 128>}, {pipeline_mode = #tpu.pipeline_mode<synchronous>, transform_indices = @transform_3, window_bounds = array<i64: 2, 128>}]} {
    %c0_i32 = arith.constant 0 : i32
    %0 = arith.cmpi eq, %arg0, %c0_i32 : i32
    %1 = arith.extui %0 : i1 to i32
    %c0_i32_0 = arith.constant 0 : i32
    %2 = arith.cmpi ne, %1, %c0_i32_0 : i32
    scf.if %2 {
      %cst_78 = arith.constant 0.000000e+00 : f32
      %80 = vector.broadcast %cst_78 : f32 to vector<2x128xf32>
      %c0_79 = arith.constant 0 : index
      %c0_80 = arith.constant 0 : index
      %81 = vector.load %arg4[%c0_79, %c0_80] : memref<2x128xf32, #tpu.memory_space<vmem>>, vector<2x128xf32>
      tpu.vector_store %arg4[%c0_79, %c0_80], %80 {strides = array<i32>} : memref<2x128xf32, #tpu.memory_space<vmem>>, vector<2x128xf32>,
    } else {
    }
    %cst = arith.constant 0.000000e+00 : f32
    %3 = vector.broadcast %cst : f32 to vector<256x128xf32>
    %c0 = arith.constant 0 : index
    %c0_1 = arith.constant 0 : index
    %c0_2 = arith.constant 0 : index
    %c0_3 = arith.constant 0 : index
    %4 = vector.load %arg1[%c0, %c0_1, %c0_2, %c0_3] : memref<1x18x18x128xf32, #tpu.memory_space<vmem>>, vector<1x16x16x128xf32>
    %5 = vector.shape_cast %4 : vector<1x16x16x128xf32> to vector<16x16x128xf32>
    %6 = vector.shape_cast %5 : vector<16x16x128xf32> to vector<256x128xf32>
    %c0_4 = arith.constant 0 : index
    %c0_5 = arith.constant 0 : index
    %c0_6 = arith.constant 0 : index
    %7 = vector.load %arg2[%c0_4, %c0_5, %c0_6] : memref<9x128x128xf32, #tpu.memory_space<vmem>>, vector<1x128x128xf32>
    %8 = vector.shape_cast %7 : vector<1x128x128xf32> to vector<128x128xf32>
    %cst_7 = arith.constant dense<0.000000e+00> : vector<256x128xf32>
    %9 = tpu.matmul %6, %8, %cst_7 {dimension_numbers = #tpu.dot_dimension_numbers<[1], [0], [0], [1], [0, 0, 1, 1], [], []>} : vector<256x128xf32>, vector<128x128xf32>, vector<256x128xf32> -> vector<256x128xf32>
    %10 = arith.addf %3, %9 : vector<256x128xf32>
    %c0_8 = arith.constant 0 : index
    %c0_9 = arith.constant 0 : index
    %c1 = arith.constant 1 : index
    %c0_10 = arith.constant 0 : index
    %11 = vector.load %arg1[%c0_8, %c0_9, %c1, %c0_10] : memref<1x18x18x128xf32, #tpu.memory_space<vmem>>, vector<1x16x16x128xf32>
    %12 = vector.shape_cast %11 : vector<1x16x16x128xf32> to vector<16x16x128xf32>
    %13 = vector.shape_cast %12 : vector<16x16x128xf32> to vector<256x128xf32>
    %c1_11 = arith.constant 1 : index
    %c0_12 = arith.constant 0 : index
    %c0_13 = arith.constant 0 : index
    %14 = vector.load %arg2[%c1_11, %c0_12, %c0_13] : memref<9x128x128xf32, #tpu.memory_space<vmem>>, vector<1x128x128xf32>
    %15 = vector.shape_cast %14 : vector<1x128x128xf32> to vector<128x128xf32>
    %cst_14 = arith.constant dense<0.000000e+00> : vector<256x128xf32>
    %16 = tpu.matmul %13, %15, %cst_14 {dimension_numbers = #tpu.dot_dimension_numbers<[1], [0], [0], [1], [0, 0, 1, 1], [], []>} : vector<256x128xf32>, vector<128x128xf32>, vector<256x128xf32> -> vector<256x128xf32>
    %17 = arith.addf %10, %16 : vector<256x128xf32>
    %c0_15 = arith.constant 0 : index
    %c0_16 = arith.constant 0 : index
    %c2 = arith.constant 2 : index
    %c0_17 = arith.constant 0 : index
    %18 = vector.load %arg1[%c0_15, %c0_16, %c2, %c0_17] : memref<1x18x18x128xf32, #tpu.memory_space<vmem>>, vector<1x16x16x128xf32>
    %19 = vector.shape_cast %18 : vector<1x16x16x128xf32> to vector<16x16x128xf32>
    %20 = vector.shape_cast %19 : vector<16x16x128xf32> to vector<256x128xf32>
    %c2_18 = arith.constant 2 : index
    %c0_19 = arith.constant 0 : index
    %c0_20 = arith.constant 0 : index
    %21 = vector.load %arg2[%c2_18, %c0_19, %c0_20] : memref<9x128x128xf32, #tpu.memory_space<vmem>>, vector<1x128x128xf32>
    %22 = vector.shape_cast %21 : vector<1x128x128xf32> to vector<128x128xf32>
    %cst_21 = arith.constant dense<0.000000e+00> : vector<256x128xf32>
    %23 = tpu.matmul %20, %22, %cst_21 {dimension_numbers = #tpu.dot_dimension_numbers<[1], [0], [0], [1], [0, 0, 1, 1], [], []>} : vector<256x128xf32>, vector<128x128xf32>, vector<256x128xf32> -> vector<256x128xf32>
    %24 = arith.addf %17, %23 : vector<256x128xf32>
    %c0_22 = arith.constant 0 : index
    %c1_23 = arith.constant 1 : index
    %c0_24 = arith.constant 0 : index
    %c0_25 = arith.constant 0 : index
    %25 = vector.load %arg1[%c0_22, %c1_23, %c0_24, %c0_25] : memref<1x18x18x128xf32, #tpu.memory_space<vmem>>, vector<1x16x16x128xf32>
    %26 = vector.shape_cast %25 : vector<1x16x16x128xf32> to vector<16x16x128xf32>
    %27 = vector.shape_cast %26 : vector<16x16x128xf32> to vector<256x128xf32>
    %c3 = arith.constant 3 : index
    %c0_26 = arith.constant 0 : index
    %c0_27 = arith.constant 0 : index
    %28 = vector.load %arg2[%c3, %c0_26, %c0_27] : memref<9x128x128xf32, #tpu.memory_space<vmem>>, vector<1x128x128xf32>
    %29 = vector.shape_cast %28 : vector<1x128x128xf32> to vector<128x128xf32>
    %cst_28 = arith.constant dense<0.000000e+00> : vector<256x128xf32>
    %30 = tpu.matmul %27, %29, %cst_28 {dimension_numbers = #tpu.dot_dimension_numbers<[1], [0], [0], [1], [0, 0, 1, 1], [], []>} : vector<256x128xf32>, vector<128x128xf32>, vector<256x128xf32> -> vector<256x128xf32>
    %31 = arith.addf %24, %30 : vector<256x128xf32>
    %c0_29 = arith.constant 0 : index
    %c1_30 = arith.constant 1 : index
    %c1_31 = arith.constant 1 : index
    %c0_32 = arith.constant 0 : index
    %32 = vector.load %arg1[%c0_29, %c1_30, %c1_31, %c0_32] : memref<1x18x18x128xf32, #tpu.memory_space<vmem>>, vector<1x16x16x128xf32>
    %33 = vector.shape_cast %32 : vector<1x16x16x128xf32> to vector<16x16x128xf32>
    %34 = vector.shape_cast %33 : vector<16x16x128xf32> to vector<256x128xf32>
    %c4 = arith.constant 4 : index
    %c0_33 = arith.constant 0 : index
    %c0_34 = arith.constant 0 : index
    %35 = vector.load %arg2[%c4, %c0_33, %c0_34] : memref<9x128x128xf32, #tpu.memory_space<vmem>>, vector<1x128x128xf32>
    %36 = vector.shape_cast %35 : vector<1x128x128xf32> to vector<128x128xf32>
    %cst_35 = arith.constant dense<0.000000e+00> : vector<256x128xf32>
    %37 = tpu.matmul %34, %36, %cst_35 {dimension_numbers = #tpu.dot_dimension_numbers<[1], [0], [0], [1], [0, 0, 1, 1], [], []>} : vector<256x128xf32>, vector<128x128xf32>, vector<256x128xf32> -> vector<256x128xf32>
    %38 = arith.addf %31, %37 : vector<256x128xf32>
    %c0_36 = arith.constant 0 : index
    %c1_37 = arith.constant 1 : index
    %c2_38 = arith.constant 2 : index
    %c0_39 = arith.constant 0 : index
    %39 = vector.load %arg1[%c0_36, %c1_37, %c2_38, %c0_39] : memref<1x18x18x128xf32, #tpu.memory_space<vmem>>, vector<1x16x16x128xf32>
    %40 = vector.shape_cast %39 : vector<1x16x16x128xf32> to vector<16x16x128xf32>
    %41 = vector.shape_cast %40 : vector<16x16x128xf32> to vector<256x128xf32>
    %c5 = arith.constant 5 : index
    %c0_40 = arith.constant 0 : index
    %c0_41 = arith.constant 0 : index
    %42 = vector.load %arg2[%c5, %c0_40, %c0_41] : memref<9x128x128xf32, #tpu.memory_space<vmem>>, vector<1x128x128xf32>
    %43 = vector.shape_cast %42 : vector<1x128x128xf32> to vector<128x128xf32>
    %cst_42 = arith.constant dense<0.000000e+00> : vector<256x128xf32>
    %44 = tpu.matmul %41, %43, %cst_42 {dimension_numbers = #tpu.dot_dimension_numbers<[1], [0], [0], [1], [0, 0, 1, 1], [], []>} : vector<256x128xf32>, vector<128x128xf32>, vector<256x128xf32> -> vector<256x128xf32>
    %45 = arith.addf %38, %44 : vector<256x128xf32>
    %c0_43 = arith.constant 0 : index
    %c2_44 = arith.constant 2 : index
    %c0_45 = arith.constant 0 : index
    %c0_46 = arith.constant 0 : index
    %46 = vector.load %arg1[%c0_43, %c2_44, %c0_45, %c0_46] : memref<1x18x18x128xf32, #tpu.memory_space<vmem>>, vector<1x16x16x128xf32>
    %47 = vector.shape_cast %46 : vector<1x16x16x128xf32> to vector<16x16x128xf32>
    %48 = vector.shape_cast %47 : vector<16x16x128xf32> to vector<256x128xf32>
    %c6 = arith.constant 6 : index
    %c0_47 = arith.constant 0 : index
    %c0_48 = arith.constant 0 : index
    %49 = vector.load %arg2[%c6, %c0_47, %c0_48] : memref<9x128x128xf32, #tpu.memory_space<vmem>>, vector<1x128x128xf32>
    %50 = vector.shape_cast %49 : vector<1x128x128xf32> to vector<128x128xf32>
    %cst_49 = arith.constant dense<0.000000e+00> : vector<256x128xf32>
    %51 = tpu.matmul %48, %50, %cst_49 {dimension_numbers = #tpu.dot_dimension_numbers<[1], [0], [0], [1], [0, 0, 1, 1], [], []>} : vector<256x128xf32>, vector<128x128xf32>, vector<256x128xf32> -> vector<256x128xf32>
    %52 = arith.addf %45, %51 : vector<256x128xf32>
    %c0_50 = arith.constant 0 : index
    %c2_51 = arith.constant 2 : index
    %c1_52 = arith.constant 1 : index
    %c0_53 = arith.constant 0 : index
    %53 = vector.load %arg1[%c0_50, %c2_51, %c1_52, %c0_53] : memref<1x18x18x128xf32, #tpu.memory_space<vmem>>, vector<1x16x16x128xf32>
    %54 = vector.shape_cast %53 : vector<1x16x16x128xf32> to vector<16x16x128xf32>
    %55 = vector.shape_cast %54 : vector<16x16x128xf32> to vector<256x128xf32>
    %c7 = arith.constant 7 : index
    %c0_54 = arith.constant 0 : index
    %c0_55 = arith.constant 0 : index
    %56 = vector.load %arg2[%c7, %c0_54, %c0_55] : memref<9x128x128xf32, #tpu.memory_space<vmem>>, vector<1x128x128xf32>
    %57 = vector.shape_cast %56 : vector<1x128x128xf32> to vector<128x128xf32>
    %cst_56 = arith.constant dense<0.000000e+00> : vector<256x128xf32>
    %58 = tpu.matmul %55, %57, %cst_56 {dimension_numbers = #tpu.dot_dimension_numbers<[1], [0], [0], [1], [0, 0, 1, 1], [], []>} : vector<256x128xf32>, vector<128x128xf32>, vector<256x128xf32> -> vector<256x128xf32>
    %59 = arith.addf %52, %58 : vector<256x128xf32>
    %c0_57 = arith.constant 0 : index
    %c2_58 = arith.constant 2 : index
    %c2_59 = arith.constant 2 : index
    %c0_60 = arith.constant 0 : index
    %60 = vector.load %arg1[%c0_57, %c2_58, %c2_59, %c0_60] : memref<1x18x18x128xf32, #tpu.memory_space<vmem>>, vector<1x16x16x128xf32>
    %61 = vector.shape_cast %60 : vector<1x16x16x128xf32> to vector<16x16x128xf32>
    %62 = vector.shape_cast %61 : vector<16x16x128xf32> to vector<256x128xf32>
    %c8 = arith.constant 8 : index
    %c0_61 = arith.constant 0 : index
    %c0_62 = arith.constant 0 : index
    %63 = vector.load %arg2[%c8, %c0_61, %c0_62] : memref<9x128x128xf32, #tpu.memory_space<vmem>>, vector<1x128x128xf32>
    %64 = vector.shape_cast %63 : vector<1x128x128xf32> to vector<128x128xf32>
    %cst_63 = arith.constant dense<0.000000e+00> : vector<256x128xf32>
    %65 = tpu.matmul %62, %64, %cst_63 {dimension_numbers = #tpu.dot_dimension_numbers<[1], [0], [0], [1], [0, 0, 1, 1], [], []>} : vector<256x128xf32>, vector<128x128xf32>, vector<256x128xf32> -> vector<256x128xf32>
    %66 = arith.addf %59, %65 : vector<256x128xf32>
    %67 = vector.shape_cast %66 : vector<256x128xf32> to vector<1x16x16x128xf32>
    %c0_64 = arith.constant 0 : index
    %c0_65 = arith.constant 0 : index
    %c0_66 = arith.constant 0 : index
    %c0_67 = arith.constant 0 : index
    %68 = vector.load %arg3[%c0_64, %c0_65, %c0_66, %c0_67] : memref<1x16x16x128xf32, #tpu.memory_space<vmem>>, vector<1x16x16x128xf32>
    tpu.vector_store %arg3[%c0_64, %c0_65, %c0_66, %c0_67], %67 {strides = array<i32>} : memref<1x16x16x128xf32, #tpu.memory_space<vmem>>, vector<1x16x16x128xf32>,
    %c0_68 = arith.constant 0 : index
    %c0_69 = arith.constant 0 : index
    %69 = vector.load %arg4[%c0_68, %c0_69] : memref<2x128xf32, #tpu.memory_space<vmem>>, vector<1x128xf32>
    %cst_70 = arith.constant dense<0.000000e+00> : vector<128xf32>
    %70 = vector.multi_reduction <add>, %66, %cst_70 [0] : vector<256x128xf32> to vector<128xf32>
    %71 = vector.shape_cast %70 : vector<128xf32> to vector<1x128xf32>
    %72 = arith.addf %69, %71 : vector<1x128xf32>
    %c0_71 = arith.constant 0 : index
    %c0_72 = arith.constant 0 : index
    %73 = vector.load %arg4[%c0_71, %c0_72] : memref<2x128xf32, #tpu.memory_space<vmem>>, vector<1x128xf32>
    tpu.vector_store %arg4[%c0_71, %c0_72], %72 {strides = array<i32>} : memref<2x128xf32, #tpu.memory_space<vmem>>, vector<1x128xf32>,
    %c1_73 = arith.constant 1 : index
    %c0_74 = arith.constant 0 : index
    %74 = vector.load %arg4[%c1_73, %c0_74] : memref<2x128xf32, #tpu.memory_space<vmem>>, vector<1x128xf32>
    %75 = arith.mulf %66, %66 : vector<256x128xf32>
    %cst_75 = arith.constant dense<0.000000e+00> : vector<128xf32>
    %76 = vector.multi_reduction <add>, %75, %cst_75 [0] : vector<256x128xf32> to vector<128xf32>
    %77 = vector.shape_cast %76 : vector<128xf32> to vector<1x128xf32>
    %78 = arith.addf %74, %77 : vector<1x128xf32>
    %c1_76 = arith.constant 1 : index
    %c0_77 = arith.constant 0 : index
    %79 = vector.load %arg4[%c1_76, %c0_77] : memref<2x128xf32, #tpu.memory_space<vmem>>, vector<1x128xf32>
    tpu.vector_store %arg4[%c1_76, %c0_77], %78 {strides = array<i32>} : memref<2x128xf32, #tpu.memory_space<vmem>>, vector<1x128xf32>,
    return
  }
  func.func @transform_0(%arg0: i32) -> (i32, i32, i32, i32) {
    %c0_i32 = arith.constant 0 : i32
    %c0_i32_0 = arith.constant 0 : i32
    %c0_i32_1 = arith.constant 0 : i32
    %c0_i32_2 = arith.constant 0 : i32
    return %arg0, %c0_i32, %c0_i32_0, %c0_i32_1 : i32, i32, i32, i32
  }
  func.func @transform_1(%arg0: i32) -> (i32, i32, i32) {
    %c0_i32 = arith.constant 0 : i32
    %c0_i32_0 = arith.constant 0 : i32
    %c0_i32_1 = arith.constant 0 : i32
    %c0_i32_2 = arith.constant 0 : i32
    return %c0_i32, %c0_i32_0, %c0_i32_1 : i32, i32, i32
  }
  func.func @transform_2(%arg0: i32) -> (i32, i32, i32, i32) {
    %c0_i32 = arith.constant 0 : i32
    %c0_i32_0 = arith.constant 0 : i32
    %c0_i32_1 = arith.constant 0 : i32
    %c0_i32_2 = arith.constant 0 : i32
    return %arg0, %c0_i32, %c0_i32_0, %c0_i32_1 : i32, i32, i32, i32
  }
  func.func @transform_3(%arg0: i32) -> (i32, i32) {
    %c0_i32 = arith.constant 0 : i32
    %c0_i32_0 = arith.constant 0 : i32
    %c0_i32_1 = arith.constant 0 : i32
    return %c0_i32, %c0_i32_0 : i32, i32
  }
}

module attributes {stable_mosaic.version = 11 : i64} {
  func.func @_bn_res_relu_kernel(%arg0: i32, %arg1: memref<1x16x16x128xf32, #tpu.memory_space<vmem>>, %arg2: memref<2x128xf32, #tpu.memory_space<vmem>>, %arg3: memref<1x128xf32, #tpu.memory_space<vmem>>, %arg4: memref<1x128xf32, #tpu.memory_space<vmem>>, %arg5: memref<1x18x18x128xf32, #tpu.memory_space<vmem>>, %arg6: memref<1x16x16x128xf32, #tpu.memory_space<vmem>>) attributes {dimension_semantics = [#tpu.dimension_semantics<parallel>], iteration_bounds = array<i64: 2>, scalar_prefetch = 0 : i64, scratch_operands = 0 : i64, tpu.core_type = #tpu.core_type<tc>, window_params = [{transform_indices = @transform_0, window_bounds = array<i64: 1, 16, 16, 128>}, {pipeline_mode = #tpu.pipeline_mode<synchronous>, transform_indices = @transform_1, window_bounds = array<i64: 2, 128>}, {pipeline_mode = #tpu.pipeline_mode<synchronous>, transform_indices = @transform_2, window_bounds = array<i64: 1, 128>}, {pipeline_mode = #tpu.pipeline_mode<synchronous>, transform_indices = @transform_3, window_bounds = array<i64: 1, 128>}, {transform_indices = @transform_4, window_bounds = array<i64: 1, 18, 18, 128>}, {transform_indices = @transform_5, window_bounds = array<i64: 1, 16, 16, 128>}]} {
    %c0 = arith.constant 0 : index
    %c0_0 = arith.constant 0 : index
    %0 = vector.load %arg2[%c0, %c0_0] : memref<2x128xf32, #tpu.memory_space<vmem>>, vector<1x128xf32>
    %cst = arith.constant 0.001953125 : f32
    %1 = vector.broadcast %cst : f32 to vector<1x128xf32>
    %2 = arith.mulf %0, %1 : vector<1x128xf32>
    %c1 = arith.constant 1 : index
    %c0_1 = arith.constant 0 : index
    %3 = vector.load %arg2[%c1, %c0_1] : memref<2x128xf32, #tpu.memory_space<vmem>>, vector<1x128xf32>
    %cst_2 = arith.constant 0.001953125 : f32
    %4 = vector.broadcast %cst_2 : f32 to vector<1x128xf32>
    %5 = arith.mulf %3, %4 : vector<1x128xf32>
    %6 = arith.mulf %2, %2 : vector<1x128xf32>
    %7 = arith.subf %5, %6 : vector<1x128xf32>
    %cst_3 = arith.constant 9.99999974E-6 : f32
    %8 = vector.broadcast %cst_3 : f32 to vector<1x128xf32>
    %9 = arith.addf %7, %8 : vector<1x128xf32>
    %10 = math.rsqrt %9 : vector<1x128xf32>
    %c0_4 = arith.constant 0 : index
    %c0_5 = arith.constant 0 : index
    %11 = vector.load %arg3[%c0_4, %c0_5] : memref<1x128xf32, #tpu.memory_space<vmem>>, vector<1x128xf32>
    %12 = arith.mulf %10, %11 : vector<1x128xf32>
    %c0_6 = arith.constant 0 : index
    %c0_7 = arith.constant 0 : index
    %13 = vector.load %arg4[%c0_6, %c0_7] : memref<1x128xf32, #tpu.memory_space<vmem>>, vector<1x128xf32>
    %14 = arith.mulf %2, %12 : vector<1x128xf32>
    %15 = arith.subf %13, %14 : vector<1x128xf32>
    %c0_8 = arith.constant 0 : index
    %c1_9 = arith.constant 1 : index
    %c1_10 = arith.constant 1 : index
    %c0_11 = arith.constant 0 : index
    %16 = vector.load %arg5[%c0_8, %c1_9, %c1_10, %c0_11] : memref<1x18x18x128xf32, #tpu.memory_space<vmem>>, vector<1x16x16x128xf32>
    %17 = vector.shape_cast %16 : vector<1x16x16x128xf32> to vector<16x16x128xf32>
    %c0_12 = arith.constant 0 : index
    %c0_13 = arith.constant 0 : index
    %c0_14 = arith.constant 0 : index
    %c0_15 = arith.constant 0 : index
    %18 = vector.load %arg1[%c0_12, %c0_13, %c0_14, %c0_15] : memref<1x16x16x128xf32, #tpu.memory_space<vmem>>, vector<1x16x16x128xf32>
    %19 = vector.shape_cast %18 : vector<1x16x16x128xf32> to vector<16x16x128xf32>
    %20 = vector.shape_cast %12 : vector<1x128xf32> to vector<1x1x128xf32>
    %21 = vector.broadcast %20 : vector<1x1x128xf32> to vector<16x16x128xf32>
    %22 = arith.mulf %19, %21 : vector<16x16x128xf32>
    %23 = vector.shape_cast %15 : vector<1x128xf32> to vector<1x1x128xf32>
    %24 = vector.broadcast %23 : vector<1x1x128xf32> to vector<16x16x128xf32>
    %25 = arith.addf %22, %24 : vector<16x16x128xf32>
    %26 = arith.addf %25, %17 : vector<16x16x128xf32>
    %cst_16 = arith.constant 0.000000e+00 : f32
    %27 = vector.broadcast %cst_16 : f32 to vector<16x16x128xf32>
    %28 = arith.maximumf %26, %27 : vector<16x16x128xf32>
    %29 = vector.shape_cast %28 : vector<16x16x128xf32> to vector<1x16x16x128xf32>
    %c0_17 = arith.constant 0 : index
    %c0_18 = arith.constant 0 : index
    %c0_19 = arith.constant 0 : index
    %c0_20 = arith.constant 0 : index
    %30 = vector.load %arg6[%c0_17, %c0_18, %c0_19, %c0_20] : memref<1x16x16x128xf32, #tpu.memory_space<vmem>>, vector<1x16x16x128xf32>
    tpu.vector_store %arg6[%c0_17, %c0_18, %c0_19, %c0_20], %29 {strides = array<i32>} : memref<1x16x16x128xf32, #tpu.memory_space<vmem>>, vector<1x16x16x128xf32>,
    return
  }
  func.func @transform_0(%arg0: i32) -> (i32, i32, i32, i32) {
    %c0_i32 = arith.constant 0 : i32
    %c0_i32_0 = arith.constant 0 : i32
    %c0_i32_1 = arith.constant 0 : i32
    %c0_i32_2 = arith.constant 0 : i32
    return %arg0, %c0_i32, %c0_i32_0, %c0_i32_1 : i32, i32, i32, i32
  }
  func.func @transform_1(%arg0: i32) -> (i32, i32) {
    %c0_i32 = arith.constant 0 : i32
    %c0_i32_0 = arith.constant 0 : i32
    %c0_i32_1 = arith.constant 0 : i32
    return %c0_i32, %c0_i32_0 : i32, i32
  }
  func.func @transform_2(%arg0: i32) -> (i32, i32) {
    %c0_i32 = arith.constant 0 : i32
    %c0_i32_0 = arith.constant 0 : i32
    %c0_i32_1 = arith.constant 0 : i32
    return %c0_i32, %c0_i32_0 : i32, i32
  }
  func.func @transform_3(%arg0: i32) -> (i32, i32) {
    %c0_i32 = arith.constant 0 : i32
    %c0_i32_0 = arith.constant 0 : i32
    %c0_i32_1 = arith.constant 0 : i32
    return %c0_i32, %c0_i32_0 : i32, i32
  }
  func.func @transform_4(%arg0: i32) -> (i32, i32, i32, i32) {
    %c0_i32 = arith.constant 0 : i32
    %c0_i32_0 = arith.constant 0 : i32
    %c0_i32_1 = arith.constant 0 : i32
    %c0_i32_2 = arith.constant 0 : i32
    return %arg0, %c0_i32, %c0_i32_0, %c0_i32_1 : i32, i32, i32, i32
  }
  func.func @transform_5(%arg0: i32) -> (i32, i32, i32, i32) {
    %c0_i32 = arith.constant 0 : i32
    %c0_i32_0 = arith.constant 0 : i32
    %c0_i32_1 = arith.constant 0 : i32
    %c0_i32_2 = arith.constant 0 : i32
    return %arg0, %c0_i32, %c0_i32_0, %c0_i32_1 : i32, i32, i32, i32
  }
}

module attributes {stable_mosaic.version = 11 : i64} {
  func.func @_bn_relu_conv_stats_kernel(%arg0: i32, %arg1: memref<1x16x16x128xf32, #tpu.memory_space<vmem>>, %arg2: memref<2x128xf32, #tpu.memory_space<vmem>>, %arg3: memref<1x128xf32, #tpu.memory_space<vmem>>, %arg4: memref<1x128xf32, #tpu.memory_space<vmem>>, %arg5: memref<9x128x128xf32, #tpu.memory_space<vmem>>, %arg6: memref<1x16x16x128xf32, #tpu.memory_space<vmem>>, %arg7: memref<2x128xf32, #tpu.memory_space<vmem>>, %arg8: memref<18x18x128xf32, #tpu.memory_space<vmem>>) attributes {dimension_semantics = [#tpu.dimension_semantics<arbitrary>], iteration_bounds = array<i64: 2>, scalar_prefetch = 0 : i64, scratch_operands = 1 : i64, tpu.core_type = #tpu.core_type<tc>, window_params = [{transform_indices = @transform_0, window_bounds = array<i64: 1, 16, 16, 128>}, {pipeline_mode = #tpu.pipeline_mode<synchronous>, transform_indices = @transform_1, window_bounds = array<i64: 2, 128>}, {pipeline_mode = #tpu.pipeline_mode<synchronous>, transform_indices = @transform_2, window_bounds = array<i64: 1, 128>}, {pipeline_mode = #tpu.pipeline_mode<synchronous>, transform_indices = @transform_3, window_bounds = array<i64: 1, 128>}, {pipeline_mode = #tpu.pipeline_mode<synchronous>, transform_indices = @transform_4, window_bounds = array<i64: 9, 128, 128>}, {transform_indices = @transform_5, window_bounds = array<i64: 1, 16, 16, 128>}, {pipeline_mode = #tpu.pipeline_mode<synchronous>, transform_indices = @transform_6, window_bounds = array<i64: 2, 128>}]} {
    %c0_i32 = arith.constant 0 : i32
    %0 = arith.cmpi eq, %arg0, %c0_i32 : i32
    %1 = arith.extui %0 : i1 to i32
    %c0_i32_0 = arith.constant 0 : i32
    %2 = arith.cmpi ne, %1, %c0_i32_0 : i32
    scf.if %2 {
      %cst_88 = arith.constant 0.000000e+00 : f32
      %98 = vector.broadcast %cst_88 : f32 to vector<2x128xf32>
      %c0_89 = arith.constant 0 : index
      %c0_90 = arith.constant 0 : index
      %99 = vector.load %arg7[%c0_89, %c0_90] : memref<2x128xf32, #tpu.memory_space<vmem>>, vector<2x128xf32>
      tpu.vector_store %arg7[%c0_89, %c0_90], %98 {strides = array<i32>} : memref<2x128xf32, #tpu.memory_space<vmem>>, vector<2x128xf32>,
      %cst_91 = arith.constant 0.000000e+00 : f32
      %100 = vector.broadcast %cst_91 : f32 to vector<18x18x128xf32>
      %c0_92 = arith.constant 0 : index
      %c0_93 = arith.constant 0 : index
      %c0_94 = arith.constant 0 : index
      %101 = vector.load %arg8[%c0_92, %c0_93, %c0_94] : memref<18x18x128xf32, #tpu.memory_space<vmem>>, vector<18x18x128xf32>
      tpu.vector_store %arg8[%c0_92, %c0_93, %c0_94], %100 {strides = array<i32>} : memref<18x18x128xf32, #tpu.memory_space<vmem>>, vector<18x18x128xf32>,
    } else {
    }
    %c0 = arith.constant 0 : index
    %c0_1 = arith.constant 0 : index
    %3 = vector.load %arg2[%c0, %c0_1] : memref<2x128xf32, #tpu.memory_space<vmem>>, vector<1x128xf32>
    %cst = arith.constant 0.001953125 : f32
    %4 = vector.broadcast %cst : f32 to vector<1x128xf32>
    %5 = arith.mulf %3, %4 : vector<1x128xf32>
    %c1 = arith.constant 1 : index
    %c0_2 = arith.constant 0 : index
    %6 = vector.load %arg2[%c1, %c0_2] : memref<2x128xf32, #tpu.memory_space<vmem>>, vector<1x128xf32>
    %cst_3 = arith.constant 0.001953125 : f32
    %7 = vector.broadcast %cst_3 : f32 to vector<1x128xf32>
    %8 = arith.mulf %6, %7 : vector<1x128xf32>
    %9 = arith.mulf %5, %5 : vector<1x128xf32>
    %10 = arith.subf %8, %9 : vector<1x128xf32>
    %cst_4 = arith.constant 9.99999974E-6 : f32
    %11 = vector.broadcast %cst_4 : f32 to vector<1x128xf32>
    %12 = arith.addf %10, %11 : vector<1x128xf32>
    %13 = math.rsqrt %12 : vector<1x128xf32>
    %c0_5 = arith.constant 0 : index
    %c0_6 = arith.constant 0 : index
    %14 = vector.load %arg3[%c0_5, %c0_6] : memref<1x128xf32, #tpu.memory_space<vmem>>, vector<1x128xf32>
    %15 = arith.mulf %13, %14 : vector<1x128xf32>
    %c0_7 = arith.constant 0 : index
    %c0_8 = arith.constant 0 : index
    %16 = vector.load %arg4[%c0_7, %c0_8] : memref<1x128xf32, #tpu.memory_space<vmem>>, vector<1x128xf32>
    %17 = arith.mulf %5, %15 : vector<1x128xf32>
    %18 = arith.subf %16, %17 : vector<1x128xf32>
    %c0_9 = arith.constant 0 : index
    %c0_10 = arith.constant 0 : index
    %c0_11 = arith.constant 0 : index
    %c0_12 = arith.constant 0 : index
    %19 = vector.load %arg1[%c0_9, %c0_10, %c0_11, %c0_12] : memref<1x16x16x128xf32, #tpu.memory_space<vmem>>, vector<1x16x16x128xf32>
    %20 = vector.shape_cast %19 : vector<1x16x16x128xf32> to vector<16x16x128xf32>
    %21 = vector.shape_cast %15 : vector<1x128xf32> to vector<1x1x128xf32>
    %22 = vector.broadcast %21 : vector<1x1x128xf32> to vector<16x16x128xf32>
    %23 = arith.mulf %20, %22 : vector<16x16x128xf32>
    %24 = vector.shape_cast %18 : vector<1x128xf32> to vector<1x1x128xf32>
    %25 = vector.broadcast %24 : vector<1x1x128xf32> to vector<16x16x128xf32>
    %26 = arith.addf %23, %25 : vector<16x16x128xf32>
    %cst_13 = arith.constant 0.000000e+00 : f32
    %27 = vector.broadcast %cst_13 : f32 to vector<16x16x128xf32>
    %28 = arith.maximumf %26, %27 : vector<16x16x128xf32>
    %c1_14 = arith.constant 1 : index
    %c1_15 = arith.constant 1 : index
    %c0_16 = arith.constant 0 : index
    %29 = vector.load %arg8[%c1_14, %c1_15, %c0_16] : memref<18x18x128xf32, #tpu.memory_space<vmem>>, vector<16x16x128xf32>
    tpu.vector_store %arg8[%c1_14, %c1_15, %c0_16], %28 {strides = array<i32>} : memref<18x18x128xf32, #tpu.memory_space<vmem>>, vector<16x16x128xf32>,
    %cst_17 = arith.constant 0.000000e+00 : f32
    %30 = vector.broadcast %cst_17 : f32 to vector<256x128xf32>
    %c0_18 = arith.constant 0 : index
    %c0_19 = arith.constant 0 : index
    %c0_20 = arith.constant 0 : index
    %31 = vector.load %arg8[%c0_18, %c0_19, %c0_20] : memref<18x18x128xf32, #tpu.memory_space<vmem>>, vector<16x16x128xf32>
    %32 = vector.shape_cast %31 : vector<16x16x128xf32> to vector<256x128xf32>
    %c0_21 = arith.constant 0 : index
    %c0_22 = arith.constant 0 : index
    %c0_23 = arith.constant 0 : index
    %33 = vector.load %arg5[%c0_21, %c0_22, %c0_23] : memref<9x128x128xf32, #tpu.memory_space<vmem>>, vector<1x128x128xf32>
    %34 = vector.shape_cast %33 : vector<1x128x128xf32> to vector<128x128xf32>
    %cst_24 = arith.constant dense<0.000000e+00> : vector<256x128xf32>
    %35 = tpu.matmul %32, %34, %cst_24 {dimension_numbers = #tpu.dot_dimension_numbers<[1], [0], [0], [1], [0, 0, 1, 1], [], []>} : vector<256x128xf32>, vector<128x128xf32>, vector<256x128xf32> -> vector<256x128xf32>
    %36 = arith.addf %30, %35 : vector<256x128xf32>
    %c0_25 = arith.constant 0 : index
    %c1_26 = arith.constant 1 : index
    %c0_27 = arith.constant 0 : index
    %37 = vector.load %arg8[%c0_25, %c1_26, %c0_27] : memref<18x18x128xf32, #tpu.memory_space<vmem>>, vector<16x16x128xf32>
    %38 = vector.shape_cast %37 : vector<16x16x128xf32> to vector<256x128xf32>
    %c1_28 = arith.constant 1 : index
    %c0_29 = arith.constant 0 : index
    %c0_30 = arith.constant 0 : index
    %39 = vector.load %arg5[%c1_28, %c0_29, %c0_30] : memref<9x128x128xf32, #tpu.memory_space<vmem>>, vector<1x128x128xf32>
    %40 = vector.shape_cast %39 : vector<1x128x128xf32> to vector<128x128xf32>
    %cst_31 = arith.constant dense<0.000000e+00> : vector<256x128xf32>
    %41 = tpu.matmul %38, %40, %cst_31 {dimension_numbers = #tpu.dot_dimension_numbers<[1], [0], [0], [1], [0, 0, 1, 1], [], []>} : vector<256x128xf32>, vector<128x128xf32>, vector<256x128xf32> -> vector<256x128xf32>
    %42 = arith.addf %36, %41 : vector<256x128xf32>
    %c0_32 = arith.constant 0 : index
    %c2 = arith.constant 2 : index
    %c0_33 = arith.constant 0 : index
    %43 = vector.load %arg8[%c0_32, %c2, %c0_33] : memref<18x18x128xf32, #tpu.memory_space<vmem>>, vector<16x16x128xf32>
    %44 = vector.shape_cast %43 : vector<16x16x128xf32> to vector<256x128xf32>
    %c2_34 = arith.constant 2 : index
    %c0_35 = arith.constant 0 : index
    %c0_36 = arith.constant 0 : index
    %45 = vector.load %arg5[%c2_34, %c0_35, %c0_36] : memref<9x128x128xf32, #tpu.memory_space<vmem>>, vector<1x128x128xf32>
    %46 = vector.shape_cast %45 : vector<1x128x128xf32> to vector<128x128xf32>
    %cst_37 = arith.constant dense<0.000000e+00> : vector<256x128xf32>
    %47 = tpu.matmul %44, %46, %cst_37 {dimension_numbers = #tpu.dot_dimension_numbers<[1], [0], [0], [1], [0, 0, 1, 1], [], []>} : vector<256x128xf32>, vector<128x128xf32>, vector<256x128xf32> -> vector<256x128xf32>
    %48 = arith.addf %42, %47 : vector<256x128xf32>
    %c1_38 = arith.constant 1 : index
    %c0_39 = arith.constant 0 : index
    %c0_40 = arith.constant 0 : index
    %49 = vector.load %arg8[%c1_38, %c0_39, %c0_40] : memref<18x18x128xf32, #tpu.memory_space<vmem>>, vector<16x16x128xf32>
    %50 = vector.shape_cast %49 : vector<16x16x128xf32> to vector<256x128xf32>
    %c3 = arith.constant 3 : index
    %c0_41 = arith.constant 0 : index
    %c0_42 = arith.constant 0 : index
    %51 = vector.load %arg5[%c3, %c0_41, %c0_42] : memref<9x128x128xf32, #tpu.memory_space<vmem>>, vector<1x128x128xf32>
    %52 = vector.shape_cast %51 : vector<1x128x128xf32> to vector<128x128xf32>
    %cst_43 = arith.constant dense<0.000000e+00> : vector<256x128xf32>
    %53 = tpu.matmul %50, %52, %cst_43 {dimension_numbers = #tpu.dot_dimension_numbers<[1], [0], [0], [1], [0, 0, 1, 1], [], []>} : vector<256x128xf32>, vector<128x128xf32>, vector<256x128xf32> -> vector<256x128xf32>
    %54 = arith.addf %48, %53 : vector<256x128xf32>
    %c1_44 = arith.constant 1 : index
    %c1_45 = arith.constant 1 : index
    %c0_46 = arith.constant 0 : index
    %55 = vector.load %arg8[%c1_44, %c1_45, %c0_46] : memref<18x18x128xf32, #tpu.memory_space<vmem>>, vector<16x16x128xf32>
    %56 = vector.shape_cast %55 : vector<16x16x128xf32> to vector<256x128xf32>
    %c4 = arith.constant 4 : index
    %c0_47 = arith.constant 0 : index
    %c0_48 = arith.constant 0 : index
    %57 = vector.load %arg5[%c4, %c0_47, %c0_48] : memref<9x128x128xf32, #tpu.memory_space<vmem>>, vector<1x128x128xf32>
    %58 = vector.shape_cast %57 : vector<1x128x128xf32> to vector<128x128xf32>
    %cst_49 = arith.constant dense<0.000000e+00> : vector<256x128xf32>
    %59 = tpu.matmul %56, %58, %cst_49 {dimension_numbers = #tpu.dot_dimension_numbers<[1], [0], [0], [1], [0, 0, 1, 1], [], []>} : vector<256x128xf32>, vector<128x128xf32>, vector<256x128xf32> -> vector<256x128xf32>
    %60 = arith.addf %54, %59 : vector<256x128xf32>
    %c1_50 = arith.constant 1 : index
    %c2_51 = arith.constant 2 : index
    %c0_52 = arith.constant 0 : index
    %61 = vector.load %arg8[%c1_50, %c2_51, %c0_52] : memref<18x18x128xf32, #tpu.memory_space<vmem>>, vector<16x16x128xf32>
    %62 = vector.shape_cast %61 : vector<16x16x128xf32> to vector<256x128xf32>
    %c5 = arith.constant 5 : index
    %c0_53 = arith.constant 0 : index
    %c0_54 = arith.constant 0 : index
    %63 = vector.load %arg5[%c5, %c0_53, %c0_54] : memref<9x128x128xf32, #tpu.memory_space<vmem>>, vector<1x128x128xf32>
    %64 = vector.shape_cast %63 : vector<1x128x128xf32> to vector<128x128xf32>
    %cst_55 = arith.constant dense<0.000000e+00> : vector<256x128xf32>
    %65 = tpu.matmul %62, %64, %cst_55 {dimension_numbers = #tpu.dot_dimension_numbers<[1], [0], [0], [1], [0, 0, 1, 1], [], []>} : vector<256x128xf32>, vector<128x128xf32>, vector<256x128xf32> -> vector<256x128xf32>
    %66 = arith.addf %60, %65 : vector<256x128xf32>
    %c2_56 = arith.constant 2 : index
    %c0_57 = arith.constant 0 : index
    %c0_58 = arith.constant 0 : index
    %67 = vector.load %arg8[%c2_56, %c0_57, %c0_58] : memref<18x18x128xf32, #tpu.memory_space<vmem>>, vector<16x16x128xf32>
    %68 = vector.shape_cast %67 : vector<16x16x128xf32> to vector<256x128xf32>
    %c6 = arith.constant 6 : index
    %c0_59 = arith.constant 0 : index
    %c0_60 = arith.constant 0 : index
    %69 = vector.load %arg5[%c6, %c0_59, %c0_60] : memref<9x128x128xf32, #tpu.memory_space<vmem>>, vector<1x128x128xf32>
    %70 = vector.shape_cast %69 : vector<1x128x128xf32> to vector<128x128xf32>
    %cst_61 = arith.constant dense<0.000000e+00> : vector<256x128xf32>
    %71 = tpu.matmul %68, %70, %cst_61 {dimension_numbers = #tpu.dot_dimension_numbers<[1], [0], [0], [1], [0, 0, 1, 1], [], []>} : vector<256x128xf32>, vector<128x128xf32>, vector<256x128xf32> -> vector<256x128xf32>
    %72 = arith.addf %66, %71 : vector<256x128xf32>
    %c2_62 = arith.constant 2 : index
    %c1_63 = arith.constant 1 : index
    %c0_64 = arith.constant 0 : index
    %73 = vector.load %arg8[%c2_62, %c1_63, %c0_64] : memref<18x18x128xf32, #tpu.memory_space<vmem>>, vector<16x16x128xf32>
    %74 = vector.shape_cast %73 : vector<16x16x128xf32> to vector<256x128xf32>
    %c7 = arith.constant 7 : index
    %c0_65 = arith.constant 0 : index
    %c0_66 = arith.constant 0 : index
    %75 = vector.load %arg5[%c7, %c0_65, %c0_66] : memref<9x128x128xf32, #tpu.memory_space<vmem>>, vector<1x128x128xf32>
    %76 = vector.shape_cast %75 : vector<1x128x128xf32> to vector<128x128xf32>
    %cst_67 = arith.constant dense<0.000000e+00> : vector<256x128xf32>
    %77 = tpu.matmul %74, %76, %cst_67 {dimension_numbers = #tpu.dot_dimension_numbers<[1], [0], [0], [1], [0, 0, 1, 1], [], []>} : vector<256x128xf32>, vector<128x128xf32>, vector<256x128xf32> -> vector<256x128xf32>
    %78 = arith.addf %72, %77 : vector<256x128xf32>
    %c2_68 = arith.constant 2 : index
    %c2_69 = arith.constant 2 : index
    %c0_70 = arith.constant 0 : index
    %79 = vector.load %arg8[%c2_68, %c2_69, %c0_70] : memref<18x18x128xf32, #tpu.memory_space<vmem>>, vector<16x16x128xf32>
    %80 = vector.shape_cast %79 : vector<16x16x128xf32> to vector<256x128xf32>
    %c8 = arith.constant 8 : index
    %c0_71 = arith.constant 0 : index
    %c0_72 = arith.constant 0 : index
    %81 = vector.load %arg5[%c8, %c0_71, %c0_72] : memref<9x128x128xf32, #tpu.memory_space<vmem>>, vector<1x128x128xf32>
    %82 = vector.shape_cast %81 : vector<1x128x128xf32> to vector<128x128xf32>
    %cst_73 = arith.constant dense<0.000000e+00> : vector<256x128xf32>
    %83 = tpu.matmul %80, %82, %cst_73 {dimension_numbers = #tpu.dot_dimension_numbers<[1], [0], [0], [1], [0, 0, 1, 1], [], []>} : vector<256x128xf32>, vector<128x128xf32>, vector<256x128xf32> -> vector<256x128xf32>
    %84 = arith.addf %78, %83 : vector<256x128xf32>
    %85 = vector.shape_cast %84 : vector<256x128xf32> to vector<1x16x16x128xf32>
    %c0_74 = arith.constant 0 : index
    %c0_75 = arith.constant 0 : index
    %c0_76 = arith.constant 0 : index
    %c0_77 = arith.constant 0 : index
    %86 = vector.load %arg6[%c0_74, %c0_75, %c0_76, %c0_77] : memref<1x16x16x128xf32, #tpu.memory_space<vmem>>, vector<1x16x16x128xf32>
    tpu.vector_store %arg6[%c0_74, %c0_75, %c0_76, %c0_77], %85 {strides = array<i32>} : memref<1x16x16x128xf32, #tpu.memory_space<vmem>>, vector<1x16x16x128xf32>,
    %c0_78 = arith.constant 0 : index
    %c0_79 = arith.constant 0 : index
    %87 = vector.load %arg7[%c0_78, %c0_79] : memref<2x128xf32, #tpu.memory_space<vmem>>, vector<1x128xf32>
    %cst_80 = arith.constant dense<0.000000e+00> : vector<128xf32>
    %88 = vector.multi_reduction <add>, %84, %cst_80 [0] : vector<256x128xf32> to vector<128xf32>
    %89 = vector.shape_cast %88 : vector<128xf32> to vector<1x128xf32>
    %90 = arith.addf %87, %89 : vector<1x128xf32>
    %c0_81 = arith.constant 0 : index
    %c0_82 = arith.constant 0 : index
    %91 = vector.load %arg7[%c0_81, %c0_82] : memref<2x128xf32, #tpu.memory_space<vmem>>, vector<1x128xf32>
    tpu.vector_store %arg7[%c0_81, %c0_82], %90 {strides = array<i32>} : memref<2x128xf32, #tpu.memory_space<vmem>>, vector<1x128xf32>,
    %c1_83 = arith.constant 1 : index
    %c0_84 = arith.constant 0 : index
    %92 = vector.load %arg7[%c1_83, %c0_84] : memref<2x128xf32, #tpu.memory_space<vmem>>, vector<1x128xf32>
    %93 = arith.mulf %84, %84 : vector<256x128xf32>
    %cst_85 = arith.constant dense<0.000000e+00> : vector<128xf32>
    %94 = vector.multi_reduction <add>, %93, %cst_85 [0] : vector<256x128xf32> to vector<128xf32>
    %95 = vector.shape_cast %94 : vector<128xf32> to vector<1x128xf32>
    %96 = arith.addf %92, %95 : vector<1x128xf32>
    %c1_86 = arith.constant 1 : index
    %c0_87 = arith.constant 0 : index
    %97 = vector.load %arg7[%c1_86, %c0_87] : memref<2x128xf32, #tpu.memory_space<vmem>>, vector<1x128xf32>
    tpu.vector_store %arg7[%c1_86, %c0_87], %96 {strides = array<i32>} : memref<2x128xf32, #tpu.memory_space<vmem>>, vector<1x128xf32>,
    return
  }
  func.func @transform_0(%arg0: i32) -> (i32, i32, i32, i32) {
    %c0_i32 = arith.constant 0 : i32
    %c0_i32_0 = arith.constant 0 : i32
    %c0_i32_1 = arith.constant 0 : i32
    %c0_i32_2 = arith.constant 0 : i32
    return %arg0, %c0_i32, %c0_i32_0, %c0_i32_1 : i32, i32, i32, i32
  }
  func.func @transform_1(%arg0: i32) -> (i32, i32) {
    %c0_i32 = arith.constant 0 : i32
    %c0_i32_0 = arith.constant 0 : i32
    %c0_i32_1 = arith.constant 0 : i32
    return %c0_i32, %c0_i32_0 : i32, i32
  }
  func.func @transform_2(%arg0: i32) -> (i32, i32) {
    %c0_i32 = arith.constant 0 : i32
    %c0_i32_0 = arith.constant 0 : i32
    %c0_i32_1 = arith.constant 0 : i32
    return %c0_i32, %c0_i32_0 : i32, i32
  }
  func.func @transform_3(%arg0: i32) -> (i32, i32) {
    %c0_i32 = arith.constant 0 : i32
    %c0_i32_0 = arith.constant 0 : i32
    %c0_i32_1 = arith.constant 0 : i32
    return %c0_i32, %c0_i32_0 : i32, i32
  }
  func.func @transform_4(%arg0: i32) -> (i32, i32, i32) {
    %c0_i32 = arith.constant 0 : i32
    %c0_i32_0 = arith.constant 0 : i32
    %c0_i32_1 = arith.constant 0 : i32
    %c0_i32_2 = arith.constant 0 : i32
    return %c0_i32, %c0_i32_0, %c0_i32_1 : i32, i32, i32
  }
  func.func @transform_5(%arg0: i32) -> (i32, i32, i32, i32) {
    %c0_i32 = arith.constant 0 : i32
    %c0_i32_0 = arith.constant 0 : i32
    %c0_i32_1 = arith.constant 0 : i32
    %c0_i32_2 = arith.constant 0 : i32
    return %arg0, %c0_i32, %c0_i32_0, %c0_i32_1 : i32, i32, i32, i32
  }
  func.func @transform_6(%arg0: i32) -> (i32, i32) {
    %c0_i32 = arith.constant 0 : i32
    %c0_i32_0 = arith.constant 0 : i32
    %c0_i32_1 = arith.constant 0 : i32
    return %c0_i32, %c0_i32_0 : i32, i32
  }
}

</mosaic_0001>

<llo_original>
// kernel: resnet_block.5
$region0: #{resnet_block.5}
  #allocation0 [shape = 'u32[]', space=smem, size = 0x4, offset = 0x4, fixed_abs, tag = 'smem constant byte address 0x4 - core index']
  #allocation1 [shape = 'u32[72,128]{1,0:T(1,128)}', space=vmem, size = 0x9000, scoped, tag = 'internal scratch']
  %s0 = inlined_call_operand.vmem [shape: f32[2,16,16,128], index: 0, kind: input, shape index: {}]
  %s1 = inlined_call_operand.vmem [shape: f32[2,128], index: 1, kind: input, shape index: {}]
  %s2 = inlined_call_operand.vmem [shape: f32[1,128], index: 2, kind: input, shape index: {}]
  %s3 = inlined_call_operand.vmem [shape: f32[1,128], index: 3, kind: input, shape index: {}]
  %s4 = inlined_call_operand.vmem [shape: f32[2,18,18,128], index: 4, kind: input, shape index: {}]
  %s5 = inlined_call_operand.vmem [shape: f32[2,16,16,128], index: 5, kind: output, shape index: {}]
  %s6 = sld [smem:[#allocation0]]
  $region53: #{resnet_block.5} parent=0
    _
  %s8 = ssub.s32 1, %s6
  %s9 = scalar_select 0, %s8, %s6
  loop: start=0, step=1, limit=4
  $region2: #{resnet_block.5} parent=0 // loop_pre_header
    _
  $region3: #{resnet_block.5} parent=0 // loop_header
    %s11 = sphi 0, %s15
    %p12 = scmp.ge.s32.totalorder %s11, 4
    %s21 = sphi 0, %s23
    %s24 = sphi 0, %s21
    %s25 = sphi 0, %s24
    %s41 = sphi 0, %s25
    %s45 = sphi 0, %s45
    %s47 = sphi 0, %s45
    %s48 = sphi 0, %s47
    %s62 = sphi 0, %s48
    %s66 = sphi 0, %s66
    %s68 = sphi 0, %s66
    %s69 = sphi 0, %s68
    %s83 = sphi 0, %s69
    %s87 = sphi 0, %s87
    %s89 = sphi 0, %s87
    %s90 = sphi 0, %s89
    %s104 = sphi 0, %s90
    %s110 = sphi 0, %s112
    %s113 = sphi 0, %s110
    %s114 = sphi 0, %s113
    %s130 = sphi 0, %s114
    %s136 = sphi 0, %s138
    %s139 = sphi 0, %s136
    %s140 = sphi 0, %s139
    %s156 = sphi 0, %s140
  $region4: #{resnet_block.5} parent=0 // loop_header_branch
    %14 = sbr.rel (%p12) target = $region8
  $region5: #{resnet_block.5} parent=0 // loop_body
    %s16 = ssub.s32 %s11, 1
    %s17 = ssub.s32 %s11, 2
    %s18 = sadd.s32 %s11, 1
    %s19 = ssub.s32 %s11, %s18
    %p20 = scmp.eq.s32.totalorder %s19, 0
    %s22 = sadd.s32 %s21, 1
    %s23 = scalar_select %p20, %s21, %s22
    %p26 = pneg %p20
    %p27 = scmp.eq.s32.totalorder %s11, 1
    %p28 = por %p26, %p27
    %p29 = scmp.ne.s32.totalorder %s21, %s24
    %p30 = scmp.eq.s32.totalorder %s11, 0
    %p31 = por %p29, %p30
    %p32 = scmp.ne.s32.totalorder %s21, %s24
    %p33 = scmp.eq.s32.totalorder %s16, 1
    %p34 = por %p32, %p33
    %p35 = scmp.ne.s32.totalorder %s24, %s25
    %p36 = scmp.eq.s32.totalorder %s16, 0
    %p37 = por %p35, %p36
    %p38 = scmp.ne.s32.totalorder %s24, %s25
    %p39 = scmp.eq.s32.totalorder %s17, 1
    %p40 = por %p38, %p39
    %p42 = scmp.ne.s32.totalorder %s25, %s41
    %p43 = scmp.eq.s32.totalorder %s17, 0
    %p44 = por %p42, %p43
    %s46 = sadd.s32 %s45, 1
    %p49 = scmp.eq.s32.totalorder %s11, 1
    %p50 = scmp.ne.s32.totalorder %s45, %s47
    %p51 = scmp.eq.s32.totalorder %s11, 0
    %p52 = por %p50, %p51
    %p53 = scmp.ne.s32.totalorder %s45, %s47
    %p54 = scmp.eq.s32.totalorder %s16, 1
    %p55 = por %p53, %p54
    %p56 = scmp.ne.s32.totalorder %s47, %s48
    %p57 = scmp.eq.s32.totalorder %s16, 0
    %p58 = por %p56, %p57
    %p59 = scmp.ne.s32.totalorder %s47, %s48
    %p60 = scmp.eq.s32.totalorder %s17, 1
    %p61 = por %p59, %p60
    %p63 = scmp.ne.s32.totalorder %s48, %s62
    %p64 = scmp.eq.s32.totalorder %s17, 0
    %p65 = por %p63, %p64
    %s67 = sadd.s32 %s66, 1
    %p70 = scmp.eq.s32.totalorder %s11, 1
    %p71 = scmp.ne.s32.totalorder %s66, %s68
    %p72 = scmp.eq.s32.totalorder %s11, 0
    %p73 = por %p71, %p72
    %p74 = scmp.ne.s32.totalorder %s66, %s68
    %p75 = scmp.eq.s32.totalorder %s16, 1
    %p76 = por %p74, %p75
    %p77 = scmp.ne.s32.totalorder %s68, %s69
    %p78 = scmp.eq.s32.totalorder %s16, 0
    %p79 = por %p77, %p78
    %p80 = scmp.ne.s32.totalorder %s68, %s69
    %p81 = scmp.eq.s32.totalorder %s17, 1
    %p82 = por %p80, %p81
    %p84 = scmp.ne.s32.totalorder %s69, %s83
    %p85 = scmp.eq.s32.totalorder %s17, 0
    %p86 = por %p84, %p85
    %s88 = sadd.s32 %s87, 1
    %p91 = scmp.eq.s32.totalorder %s11, 1
    %p92 = scmp.ne.s32.totalorder %s87, %s89
    %p93 = scmp.eq.s32.totalorder %s11, 0
    %p94 = por %p92, %p93
    %p95 = scmp.ne.s32.totalorder %s87, %s89
    %p96 = scmp.eq.s32.totalorder %s16, 1
    %p97 = por %p95, %p96
    %p98 = scmp.ne.s32.totalorder %s89, %s90
    %p99 = scmp.eq.s32.totalorder %s16, 0
    %p100 = por %p98, %p99
    %p101 = scmp.ne.s32.totalorder %s89, %s90
    %p102 = scmp.eq.s32.totalorder %s17, 1
    %p103 = por %p101, %p102
    %p105 = scmp.ne.s32.totalorder %s90, %s104
    %p106 = scmp.eq.s32.totalorder %s17, 0
    %p107 = por %p105, %p106
    %s108 = ssub.s32 %s11, %s18
    %p109 = scmp.eq.s32.totalorder %s108, 0
    %s111 = sadd.s32 %s110, 1
    %s112 = scalar_select %p109, %s110, %s111
    %p115 = pneg %p109
    %p116 = scmp.eq.s32.totalorder %s11, 1
    %p117 = por %p115, %p116
    %p118 = scmp.ne.s32.totalorder %s110, %s113
    %p119 = scmp.eq.s32.totalorder %s11, 0
    %p120 = por %p118, %p119
    %p121 = scmp.ne.s32.totalorder %s110, %s113
    %p122 = scmp.eq.s32.totalorder %s16, 1
    %p123 = por %p121, %p122
    %p124 = scmp.ne.s32.totalorder %s113, %s114
    %p125 = scmp.eq.s32.totalorder %s16, 0
    %p126 = por %p124, %p125
    %p127 = scmp.ne.s32.totalorder %s113, %s114
    %p128 = scmp.eq.s32.totalorder %s17, 1
    %p129 = por %p127, %p128
    %p131 = scmp.ne.s32.totalorder %s114, %s130
    %p132 = scmp.eq.s32.totalorder %s17, 0
    %p133 = por %p131, %p132
    %s134 = ssub.s32 %s11, %s18
    %p135 = scmp.eq.s32.totalorder %s134, 0
    %s137 = sadd.s32 %s136, 1
    %s138 = scalar_select %p135, %s136, %s137
    %p141 = pneg %p135
    %p142 = scmp.eq.s32.totalorder %s11, 1
    %p143 = por %p141, %p142
    %p144 = scmp.ne.s32.totalorder %s136, %s139
    %p145 = scmp.eq.s32.totalorder %s11, 0
    %p146 = por %p144, %p145
    %p147 = scmp.ne.s32.totalorder %s136, %s139
    %p148 = scmp.eq.s32.totalorder %s16, 1
    %p149 = por %p147, %p148
    %p150 = scmp.ne.s32.totalorder %s139, %s140
    %p151 = scmp.eq.s32.totalorder %s16, 0
    %p152 = por %p150, %p151
    %p153 = scmp.ne.s32.totalorder %s139, %s140
    %p154 = scmp.eq.s32.totalorder %s17, 1
    %p155 = por %p153, %p154
    %p157 = scmp.ne.s32.totalorder %s140, %s156
    %p158 = scmp.eq.s32.totalorder %s17, 0
    %p159 = por %p157, %p158
    %p160 = scmp.le.s32.totalorder 1, %s11
    %p161 = scmp.lt.s32.totalorder %s11, 3
    %p162 = pnand %p160, %p161
    %p163 = pneg %p162
    // Predicated region
    $region9: #{resnet_block.5} parent=5 // pred_check
      _
    $region10: #{resnet_block.5} parent=5 // pred_check_branch
      %165 = sbr.rel (%p162) target = $region12
    $region11: #{resnet_block.5} parent=5 // pred_region
      %s166 = ssub.s32 %s11, 1
      // Predicated region
      $region13: #{resnet_block.5} parent=11 // pred_check
        %p167 = pneg %p58
      $region14: #{resnet_block.5} parent=11 // pred_check_branch
        %169 = sbr.rel (%p167) target = $region16
      $region15: #{resnet_block.5} parent=11 // pred_region
        _
      $region16: #{resnet_block.5} parent=11 // pred_fallthru
        _
      // Predicated region
      $region17: #{resnet_block.5} parent=11 // pred_check
        %p170 = pneg %p79
      $region18: #{resnet_block.5} parent=11 // pred_check_branch
        %172 = sbr.rel (%p170) target = $region20
      $region19: #{resnet_block.5} parent=11 // pred_region
        _
      $region20: #{resnet_block.5} parent=11 // pred_fallthru
        _
      // Predicated region
      $region21: #{resnet_block.5} parent=11 // pred_check
        %p173 = pneg %p100
      $region22: #{resnet_block.5} parent=11 // pred_check_branch
        %175 = sbr.rel (%p173) target = $region24
      $region23: #{resnet_block.5} parent=11 // pred_region
        _
      $region24: #{resnet_block.5} parent=11 // pred_fallthru
        _
    $region12: #{resnet_block.5} parent=5 // pred_fallthru
      _
    %p176 = scmp.lt.s32.totalorder %s11, 2
    // Predicated region
    $region25: #{resnet_block.5} parent=5 // pred_check
      %p177 = pneg %p176
    $region26: #{resnet_block.5} parent=5 // pred_check_branch
      %179 = sbr.rel (%p177) target = $region28
    $region27: #{resnet_block.5} parent=5 // pred_region
      // Predicated region
      $region29: #{resnet_block.5} parent=27 // pred_check
        %p180 = pneg %p31
      $region30: #{resnet_block.5} parent=27 // pred_check_branch
        %182 = sbr.rel (%p180) target = $region32
      $region31: #{resnet_block.5} parent=27 // pred_region
        %p183 = scmp.lt.s32.totalorder %s11, 1
        %s184 = scalar_select %p183, %s11, 1
        %s185 = smul.addr %s184, 32
        %s186 = smul.addr %s185, 8
        %s187 = scalar_lea.vmem %s0, %s186
      $region32: #{resnet_block.5} parent=27 // pred_fallthru
        _
      // Predicated region
      $region33: #{resnet_block.5} parent=27 // pred_check
        %p188 = pneg %p120
      $region34: #{resnet_block.5} parent=27 // pred_check_branch
        %190 = sbr.rel (%p188) target = $region36
      $region35: #{resnet_block.5} parent=27 // pred_region
        %p191 = scmp.lt.s32.totalorder %s11, 1
        %s192 = scalar_select %p191, %s11, 1
        %s193 = smul.addr %s192, 54
        %s194 = smul.addr %s193, 8
        %s195 = scalar_lea.vmem %s4, %s194
      $region36: #{resnet_block.5} parent=27 // pred_fallthru
        _
    $region28: #{resnet_block.5} parent=5 // pred_fallthru
      _
    %p196 = scmp.le.s32.totalorder 1, %s11
    %p197 = scmp.lt.s32.totalorder %s11, 3
    %p198 = pnand %p196, %p197
    %p199 = pneg %p198
    // Predicated region
    $region37: #{resnet_block.5} parent=5 // pred_check
      _
    $region38: #{resnet_block.5} parent=5 // pred_check_branch
      %201 = sbr.rel (%p198) target = $region40
    $region39: #{resnet_block.5} parent=5 // pred_region
      %s202 = ssub.s32 %s11, 1
      %p203 = scmp.lt.s32.totalorder %s16, 1
      %s204 = scalar_select %p203, %s16, 1
      %s205 = smul.addr %s204, 32
      %s206 = smul.addr %s205, 8
      %s207 = scalar_lea.vmem %s0, %s206
      %p208 = pneg %p37
      %p209 = pneg %p34
      %p210 = pneg %p58
      %p211 = pneg %p55
      %p212 = pneg %p79
      %p213 = pneg %p76
      %p214 = pneg %p100
      %p215 = pneg %p97
      %p216 = scmp.lt.s32.totalorder %s16, 1
      %s217 = scalar_select %p216, %s16, 1
      %s218 = smul.addr %s217, 54
      %s219 = smul.addr %s218, 8
      %s220 = scalar_lea.vmem %s4, %s219
      %p221 = pneg %p126
      %p222 = pneg %p123
      %p223 = pneg %p152
      %p224 = pneg %p149
      %p225 = scmp.lt.s32.totalorder %s16, 1
      %s226 = scalar_select %p225, %s16, 1
      %s227 = smul.addr %s226, 32
      %s228 = smul.addr %s227, 8
      %s229 = scalar_lea.vmem %s5, %s228
      %p230 = scmp.lt.s32.totalorder %s16, 1
      %s231 = scalar_select %p230, %s16, 1
      %s232 = smul.addr %s231, 32
      %s233 = smul.addr %s232, 8
      %s234 = scalar_lea.vmem %s0, %s233
      %p235 = scmp.lt.s32.totalorder %s16, 1
      %s236 = scalar_select %p235, %s16, 1
      %s237 = smul.addr %s236, 54
      %s238 = smul.addr %s237, 8
      %s239 = scalar_lea.vmem %s4, %s238
      %p240 = scmp.lt.s32.totalorder %s16, 1
      %s241 = scalar_select %p240, %s16, 1
      %s242 = smul.addr %s241, 32
      %s243 = smul.addr %s242, 8
      %s244 = scalar_lea.vmem %s5, %s243
      %v245 = vld [vmem:[%s1] sm:$0x1]
      %v246 = vmul.f32 %v245, 0.001953125
      %v247 = vld [vmem:[%s1 + $0x1] sm:$0x1]
      %v248 = vmul.f32 %v247, 0.001953125
      %v249 = vmul.f32 %v246, %v246
      %v250 = vsub.f32 %v248, %v249
      %v251 = vadd.f32 %v250, 1e-05
      %v252 = vrsqrt.pop %v251
      %v253 = vmul.f32 %v252, %v251
      %v254 = vmul.f32 %v253, %v252
      %v255 = vmul.f32 0.5, %v254
      %v256 = vsub.f32 1.5, %v255
      %v257 = vmul.f32 %v252, %v256
      %vm258 = vweird.f32 %v251
      %vm259 = vweird.f32 %v252
      %vm260 = vmor %vm258, %vm259
      %v261 = vsel %vm260, %v252, %v257
      %v262 = vld [vmem:[%s2] sm:$0x1]
      %v263 = vmul.f32 %v261, %v262
      %v264 = vld [vmem:[%s3] sm:$0x1]
      %v265 = vmul.f32 %v246, %v263
      %v266 = vsub.f32 %v264, %v265
      %s267 = scalar_lea.vmem %s239, 24
      %v268 = vld [vmem:[%s267 + $0x1] sm:$0xff]
      %v269 = vld [vmem:[%s267 + $0x9] sm:$0xff]
      %v270 = vld [vmem:[%s267 + $0x19] sm:$0xff]
      %v271 = vld [vmem:[%s267 + $0x21] sm:$0xff]
      %v272 = vld [vmem:[%s267 + $0x31] sm:$0xff]
      %v273 = vld [vmem:[%s267 + $0x39] sm:$0xff]
      %v274 = vld [vmem:[%s267 + $0x49] sm:$0xff]
      %v275 = vld [vmem:[%s267 + $0x51] sm:$0xff]
      %v276 = vld [vmem:[%s267 + $0x61] sm:$0xff]
      %v277 = vld [vmem:[%s267 + $0x69] sm:$0xff]
      %v278 = vld [vmem:[%s267 + $0x79] sm:$0xff]
      %v279 = vld [vmem:[%s267 + $0x81] sm:$0xff]
      %v280 = vld [vmem:[%s267 + $0x91] sm:$0xff]
      %v281 = vld [vmem:[%s267 + $0x99] sm:$0xff]
      %v282 = vld [vmem:[%s267 + $0xa9] sm:$0xff]
      %v283 = vld [vmem:[%s267 + $0xb1] sm:$0xff]
      %v284 = vld [vmem:[%s267 + $0xc1] sm:$0xff]
      %v285 = vld [vmem:[%s267 + $0xc9] sm:$0xff]
      %v286 = vld [vmem:[%s267 + $0xd9] sm:$0xff]
      %v287 = vld [vmem:[%s267 + $0xe1] sm:$0xff]
      %v288 = vld [vmem:[%s267 + $0xf1] sm:$0xff]
      %v289 = vld [vmem:[%s267 + $0xf9] sm:$0xff]
      %v290 = vld [vmem:[%s267 + $0x109] sm:$0xff]
      %v291 = vld [vmem:[%s267 + $0x111] sm:$0xff]
      %v292 = vld [vmem:[%s267 + $0x121] sm:$0xff]
      %v293 = vld [vmem:[%s267 + $0x129] sm:$0xff]
      %v294 = vld [vmem:[%s267 + $0x139] sm:$0xff]
      %v295 = vld [vmem:[%s267 + $0x141] sm:$0xff]
      %v296 = vld [vmem:[%s267 + $0x151] sm:$0xff]
      %v297 = vld [vmem:[%s267 + $0x159] sm:$0xff]
      %v298 = vld [vmem:[%s267 + $0x169] sm:$0xff]
      %v299 = vld [vmem:[%s267 + $0x171] sm:$0xff]
      %v300 = vld [vmem:[%s234] sm:$0xff]
      %v301 = vld [vmem:[%s234 + $0x8] sm:$0xff]
      %v302 = vld [vmem:[%s234 + $0x10] sm:$0xff]
      %v303 = vld [vmem:[%s234 + $0x18] sm:$0xff]
      %v304 = vld [vmem:[%s234 + $0x20] sm:$0xff]
      %v305 = vld [vmem:[%s234 + $0x28] sm:$0xff]
      %v306 = vld [vmem:[%s234 + $0x30] sm:$0xff]
      %v307 = vld [vmem:[%s234 + $0x38] sm:$0xff]
      %v308 = vld [vmem:[%s234 + $0x40] sm:$0xff]
      %v309 = vld [vmem:[%s234 + $0x48] sm:$0xff]
      %v310 = vld [vmem:[%s234 + $0x50] sm:$0xff]
      %v311 = vld [vmem:[%s234 + $0x58] sm:$0xff]
      %v312 = vld [vmem:[%s234 + $0x60] sm:$0xff]
      %v313 = vld [vmem:[%s234 + $0x68] sm:$0xff]
      %v314 = vld [vmem:[%s234 + $0x70] sm:$0xff]
      %v315 = vld [vmem:[%s234 + $0x78] sm:$0xff]
      %v316 = vld [vmem:[%s234 + $0x80] sm:$0xff]
      %v317 = vld [vmem:[%s234 + $0x88] sm:$0xff]
      %v318 = vld [vmem:[%s234 + $0x90] sm:$0xff]
      %v319 = vld [vmem:[%s234 + $0x98] sm:$0xff]
      %v320 = vld [vmem:[%s234 + $0xa0] sm:$0xff]
      %v321 = vld [vmem:[%s234 + $0xa8] sm:$0xff]
      %v322 = vld [vmem:[%s234 + $0xb0] sm:$0xff]
      %v323 = vld [vmem:[%s234 + $0xb8] sm:$0xff]
      %v324 = vld [vmem:[%s234 + $0xc0] sm:$0xff]
      %v325 = vld [vmem:[%s234 + $0xc8] sm:$0xff]
      %v326 = vld [vmem:[%s234 + $0xd0] sm:$0xff]
      %v327 = vld [vmem:[%s234 + $0xd8] sm:$0xff]
      %v328 = vld [vmem:[%s234 + $0xe0] sm:$0xff]
      %v329 = vld [vmem:[%s234 + $0xe8] sm:$0xff]
      %v330 = vld [vmem:[%s234 + $0xf0] sm:$0xff]
      %v331 = vld [vmem:[%s234 + $0xf8] sm:$0xff]
      %v332 = vperm.slane %v263, 0
      %v333 = vmul.f32 %v300, %v332
      %v334 = vmul.f32 %v301, %v332
      %v335 = vmul.f32 %v302, %v332
      %v336 = vmul.f32 %v303, %v332
      %v337 = vmul.f32 %v304, %v332
      %v338 = vmul.f32 %v305, %v332
      %v339 = vmul.f32 %v306, %v332
      %v340 = vmul.f32 %v307, %v332
      %v341 = vmul.f32 %v308, %v332
      %v342 = vmul.f32 %v309, %v332
      %v343 = vmul.f32 %v310, %v332
      %v344 = vmul.f32 %v311, %v332
      %v345 = vmul.f32 %v312, %v332
      %v346 = vmul.f32 %v313, %v332
      %v347 = vmul.f32 %v314, %v332
      %v348 = vmul.f32 %v315, %v332
      %v349 = vmul.f32 %v316, %v332
      %v350 = vmul.f32 %v317, %v332
      %v351 = vmul.f32 %v318, %v332
      %v352 = vmul.f32 %v319, %v332
      %v353 = vmul.f32 %v320, %v332
      %v354 = vmul.f32 %v321, %v332
      %v355 = vmul.f32 %v322, %v332
      %v356 = vmul.f32 %v323, %v332
      %v357 = vmul.f32 %v324, %v332
      %v358 = vmul.f32 %v325, %v332
      %v359 = vmul.f32 %v326, %v332
      %v360 = vmul.f32 %v327, %v332
      %v361 = vmul.f32 %v328, %v332
      %v362 = vmul.f32 %v329, %v332
      %v363 = vmul.f32 %v330, %v332
      %v364 = vmul.f32 %v331, %v332
      %v366 = vperm.slane %v266, 0
      %v368 = vadd.f32 %v333, %v366
      %v369 = vadd.f32 %v334, %v366
      %v370 = vadd.f32 %v335, %v366
      %v371 = vadd.f32 %v336, %v366
      %v372 = vadd.f32 %v337, %v366
      %v373 = vadd.f32 %v338, %v366
      %v374 = vadd.f32 %v339, %v366
      %v375 = vadd.f32 %v340, %v366
      %v376 = vadd.f32 %v341, %v366
      %v377 = vadd.f32 %v342, %v366
      %v378 = vadd.f32 %v343, %v366
      %v379 = vadd.f32 %v344, %v366
      %v380 = vadd.f32 %v345, %v366
      %v381 = vadd.f32 %v346, %v366
      %v382 = vadd.f32 %v347, %v366
      %v383 = vadd.f32 %v348, %v366
      %v384 = vadd.f32 %v349, %v366
      %v385 = vadd.f32 %v350, %v366
      %v386 = vadd.f32 %v351, %v366
      %v387 = vadd.f32 %v352, %v366
      %v388 = vadd.f32 %v353, %v366
      %v389 = vadd.f32 %v354, %v366
      %v390 = vadd.f32 %v355, %v366
      %v391 = vadd.f32 %v356, %v366
      %v392 = vadd.f32 %v357, %v366
      %v393 = vadd.f32 %v358, %v366
      %v394 = vadd.f32 %v359, %v366
      %v395 = vadd.f32 %v360, %v366
      %v396 = vadd.f32 %v361, %v366
      %v397 = vadd.f32 %v362, %v366
      %v398 = vadd.f32 %v363, %v366
      %v399 = vadd.f32 %v364, %v366
      %v400 = vadd.f32 %v368, %v268
      %v401 = vadd.f32 %v369, %v269
      %v402 = vadd.f32 %v370, %v270
      %v403 = vadd.f32 %v371, %v271
      %v404 = vadd.f32 %v372, %v272
      %v405 = vadd.f32 %v373, %v273
      %v406 = vadd.f32 %v374, %v274
      %v407 = vadd.f32 %v375, %v275
      %v408 = vadd.f32 %v376, %v276
      %v409 = vadd.f32 %v377, %v277
      %v410 = vadd.f32 %v378, %v278
      %v411 = vadd.f32 %v379, %v279
      %v412 = vadd.f32 %v380, %v280
      %v413 = vadd.f32 %v381, %v281
      %v414 = vadd.f32 %v382, %v282
      %v415 = vadd.f32 %v383, %v283
      %v416 = vadd.f32 %v384, %v284
      %v417 = vadd.f32 %v385, %v285
      %v418 = vadd.f32 %v386, %v286
      %v419 = vadd.f32 %v387, %v287
      %v420 = vadd.f32 %v388, %v288
      %v421 = vadd.f32 %v389, %v289
      %v422 = vadd.f32 %v390, %v290
      %v423 = vadd.f32 %v391, %v291
      %v424 = vadd.f32 %v392, %v292
      %v425 = vadd.f32 %v393, %v293
      %v426 = vadd.f32 %v394, %v294
      %v427 = vadd.f32 %v395, %v295
      %v428 = vadd.f32 %v396, %v296
      %v429 = vadd.f32 %v397, %v297
      %v430 = vadd.f32 %v398, %v298
      %v431 = vadd.f32 %v399, %v299
      %v432 = vmax.f32 %v400, 0.0
      %v433 = vmax.f32 %v401, 0.0
      %v434 = vmax.f32 %v402, 0.0
      %v435 = vmax.f32 %v403, 0.0
      %v436 = vmax.f32 %v404, 0.0
      %v437 = vmax.f32 %v405, 0.0
      %v438 = vmax.f32 %v406, 0.0
      %v439 = vmax.f32 %v407, 0.0
      %v440 = vmax.f32 %v408, 0.0
      %v441 = vmax.f32 %v409, 0.0
      %v442 = vmax.f32 %v410, 0.0
      %v443 = vmax.f32 %v411, 0.0
      %v444 = vmax.f32 %v412, 0.0
      %v445 = vmax.f32 %v413, 0.0
      %v446 = vmax.f32 %v414, 0.0
      %v447 = vmax.f32 %v415, 0.0
      %v448 = vmax.f32 %v416, 0.0
      %v449 = vmax.f32 %v417, 0.0
      %v450 = vmax.f32 %v418, 0.0
      %v451 = vmax.f32 %v419, 0.0
      %v452 = vmax.f32 %v420, 0.0
      %v453 = vmax.f32 %v421, 0.0
      %v454 = vmax.f32 %v422, 0.0
      %v455 = vmax.f32 %v423, 0.0
      %v456 = vmax.f32 %v424, 0.0
      %v457 = vmax.f32 %v425, 0.0
      %v458 = vmax.f32 %v426, 0.0
      %v459 = vmax.f32 %v427, 0.0
      %v460 = vmax.f32 %v428, 0.0
      %v461 = vmax.f32 %v429, 0.0
      %v462 = vmax.f32 %v430, 0.0
      %v463 = vmax.f32 %v431, 0.0
      %464 = vst [vmem:[%s244] sm:$0xff] %v432
      %465 = vst [vmem:[%s244 + $0x8] sm:$0xff] %v433
      %466 = vst [vmem:[%s244 + $0x10] sm:$0xff] %v434
      %467 = vst [vmem:[%s244 + $0x18] sm:$0xff] %v435
      %468 = vst [vmem:[%s244 + $0x20] sm:$0xff] %v436
      %469 = vst [vmem:[%s244 + $0x28] sm:$0xff] %v437
      %470 = vst [vmem:[%s244 + $0x30] sm:$0xff] %v438
      %471 = vst [vmem:[%s244 + $0x38] sm:$0xff] %v439
      %472 = vst [vmem:[%s244 + $0x40] sm:$0xff] %v440
      %473 = vst [vmem:[%s244 + $0x48] sm:$0xff] %v441
      %474 = vst [vmem:[%s244 + $0x50] sm:$0xff] %v442
      %475 = vst [vmem:[%s244 + $0x58] sm:$0xff] %v443
      %476 = vst [vmem:[%s244 + $0x60] sm:$0xff] %v444
      %477 = vst [vmem:[%s244 + $0x68] sm:$0xff] %v445
      %478 = vst [vmem:[%s244 + $0x70] sm:$0xff] %v446
      %479 = vst [vmem:[%s244 + $0x78] sm:$0xff] %v447
      %480 = vst [vmem:[%s244 + $0x80] sm:$0xff] %v448
      %481 = vst [vmem:[%s244 + $0x88] sm:$0xff] %v449
      %482 = vst [vmem:[%s244 + $0x90] sm:$0xff] %v450
      %483 = vst [vmem:[%s244 + $0x98] sm:$0xff] %v451
      %484 = vst [vmem:[%s244 + $0xa0] sm:$0xff] %v452
      %485 = vst [vmem:[%s244 + $0xa8] sm:$0xff] %v453
      %486 = vst [vmem:[%s244 + $0xb0] sm:$0xff] %v454
      %487 = vst [vmem:[%s244 + $0xb8] sm:$0xff] %v455
      %488 = vst [vmem:[%s244 + $0xc0] sm:$0xff] %v456
      %489 = vst [vmem:[%s244 + $0xc8] sm:$0xff] %v457
      %490 = vst [vmem:[%s244 + $0xd0] sm:$0xff] %v458
      %491 = vst [vmem:[%s244 + $0xd8] sm:$0xff] %v459
      %492 = vst [vmem:[%s244 + $0xe0] sm:$0xff] %v460
      %493 = vst [vmem:[%s244 + $0xe8] sm:$0xff] %v461
      %494 = vst [vmem:[%s244 + $0xf0] sm:$0xff] %v462
      %495 = vst [vmem:[%s244 + $0xf8] sm:$0xff] %v463
      %p496 = scmp.lt.s32.totalorder %s16, 1
      %s497 = scalar_select %p496, %s16, 1
      %s498 = smul.addr %s497, 32
      %s499 = smul.addr %s498, 8
      %s500 = scalar_lea.vmem %s5, %s499
      // Predicated region
      $region41: #{resnet_block.5} parent=39 // pred_check
        %p501 = pneg %p149
      $region42: #{resnet_block.5} parent=39 // pred_check_branch
        %503 = sbr.rel (%p501) target = $region44
      $region43: #{resnet_block.5} parent=39 // pred_region
        _
      $region44: #{resnet_block.5} parent=39 // pred_fallthru
        _
    $region40: #{resnet_block.5} parent=5 // pred_fallthru
      _
    %p504 = scmp.le.s32.totalorder 2, %s11
    // Predicated region
    $region45: #{resnet_block.5} parent=5 // pred_check
      %p505 = pneg %p504
    $region46: #{resnet_block.5} parent=5 // pred_check_branch
      %507 = sbr.rel (%p505) target = $region48
    $region47: #{resnet_block.5} parent=5 // pred_region
      %s508 = ssub.s32 %s11, 2
      // Predicated region
      $region49: #{resnet_block.5} parent=47 // pred_check
        %p509 = pneg %p155
      $region50: #{resnet_block.5} parent=47 // pred_check_branch
        %511 = sbr.rel (%p509) target = $region52
      $region51: #{resnet_block.5} parent=47 // pred_region
        %p512 = scmp.lt.s32.totalorder %s17, 1
        %s513 = scalar_select %p512, %s17, 1
        %s514 = smul.addr %s513, 32
        %s515 = smul.addr %s514, 8
        %s516 = scalar_lea.vmem %s5, %s515
      $region52: #{resnet_block.5} parent=47 // pred_fallthru
        _
    $region48: #{resnet_block.5} parent=5 // pred_fallthru
      _
  $region6: #{resnet_block.5} parent=0 // loop_footer
    %s15 = sadd.s32 1, %s11
  $region7: #{resnet_block.5} parent=0 // loop_footer_branch
    %10 = sbr.rel target = $region3
  $region8: #{resnet_block.5} parent=0 // loop_exit
    _

// kernel: resnet_block.3
$region0: #{resnet_block.3}
  #allocation0 [shape = 'u32[]', space=smem, size = 0x4, offset = 0x4, fixed_abs, tag = 'smem constant byte address 0x4 - core index']
  #allocation1 [shape = 'u32[72,128]{1,0:T(1,128)}', space=vmem, size = 0x9000, scoped, tag = 'internal scratch']
  %s0 = inlined_call_operand.vmem [shape: f32[2,18,18,128], index: 0, kind: input, shape index: {}]
  %s1 = inlined_call_operand.vmem [shape: f32[9,128,128], index: 1, kind: input, shape index: {}]
  %s2 = inlined_call_operand.vmem [shape: f32[2,16,16,128], index: 2, kind: output, shape index: {0}]
  %s3 = inlined_call_operand.vmem [shape: f32[2,128], index: 3, kind: output, shape index: {1}]
  %4 = xla_tuple %s2, %s3
  %s5 = sld [smem:[#allocation0]]
  $region53: #{resnet_block.3} parent=0
    _
  %s7 = ssub.s32 1, %s5
  %s8 = scalar_select 0, %s7, %s5
  loop: start=0, step=1, limit=4
  $region2: #{resnet_block.3} parent=0 // loop_pre_header
    _
  $region3: #{resnet_block.3} parent=0 // loop_header
    %s10 = sphi 0, %s14
    %p11 = scmp.ge.s32.totalorder %s10, 4
    %s20 = sphi 0, %s22
    %s23 = sphi 0, %s20
    %s24 = sphi 0, %s23
    %s40 = sphi 0, %s24
    %s44 = sphi 0, %s44
    %s46 = sphi 0, %s44
    %s47 = sphi 0, %s46
    %s61 = sphi 0, %s47
    %s67 = sphi 0, %s69
    %s70 = sphi 0, %s67
    %s71 = sphi 0, %s70
    %s87 = sphi 0, %s71
    %s91 = sphi 0, %s91
    %s93 = sphi 0, %s91
    %s94 = sphi 0, %s93
    %s108 = sphi 0, %s94
  $region4: #{resnet_block.3} parent=0 // loop_header_branch
    %13 = sbr.rel (%p11) target = $region8
  $region5: #{resnet_block.3} parent=0 // loop_body
    %s15 = ssub.s32 %s10, 1
    %s16 = ssub.s32 %s10, 2
    %s17 = sadd.s32 %s10, 1
    %s18 = ssub.s32 %s10, %s17
    %p19 = scmp.eq.s32.totalorder %s18, 0
    %s21 = sadd.s32 %s20, 1
    %s22 = scalar_select %p19, %s20, %s21
    %p25 = pneg %p19
    %p26 = scmp.eq.s32.totalorder %s10, 1
    %p27 = por %p25, %p26
    %p28 = scmp.ne.s32.totalorder %s20, %s23
    %p29 = scmp.eq.s32.totalorder %s10, 0
    %p30 = por %p28, %p29
    %p31 = scmp.ne.s32.totalorder %s20, %s23
    %p32 = scmp.eq.s32.totalorder %s15, 1
    %p33 = por %p31, %p32
    %p34 = scmp.ne.s32.totalorder %s23, %s24
    %p35 = scmp.eq.s32.totalorder %s15, 0
    %p36 = por %p34, %p35
    %p37 = scmp.ne.s32.totalorder %s23, %s24
    %p38 = scmp.eq.s32.totalorder %s16, 1
    %p39 = por %p37, %p38
    %p41 = scmp.ne.s32.totalorder %s24, %s40
    %p42 = scmp.eq.s32.totalorder %s16, 0
    %p43 = por %p41, %p42
    %s45 = sadd.s32 %s44, 1
    %p48 = scmp.eq.s32.totalorder %s10, 1
    %p49 = scmp.ne.s32.totalorder %s44, %s46
    %p50 = scmp.eq.s32.totalorder %s10, 0
    %p51 = por %p49, %p50
    %p52 = scmp.ne.s32.totalorder %s44, %s46
    %p53 = scmp.eq.s32.totalorder %s15, 1
    %p54 = por %p52, %p53
    %p55 = scmp.ne.s32.totalorder %s46, %s47
    %p56 = scmp.eq.s32.totalorder %s15, 0
    %p57 = por %p55, %p56
    %p58 = scmp.ne.s32.totalorder %s46, %s47
    %p59 = scmp.eq.s32.totalorder %s16, 1
    %p60 = por %p58, %p59
    %p62 = scmp.ne.s32.totalorder %s47, %s61
    %p63 = scmp.eq.s32.totalorder %s16, 0
    %p64 = por %p62, %p63
    %s65 = ssub.s32 %s10, %s17
    %p66 = scmp.eq.s32.totalorder %s65, 0
    %s68 = sadd.s32 %s67, 1
    %s69 = scalar_select %p66, %s67, %s68
    %p72 = pneg %p66
    %p73 = scmp.eq.s32.totalorder %s10, 1
    %p74 = por %p72, %p73
    %p75 = scmp.ne.s32.totalorder %s67, %s70
    %p76 = scmp.eq.s32.totalorder %s10, 0
    %p77 = por %p75, %p76
    %p78 = scmp.ne.s32.totalorder %s67, %s70
    %p79 = scmp.eq.s32.totalorder %s15, 1
    %p80 = por %p78, %p79
    %p81 = scmp.ne.s32.totalorder %s70, %s71
    %p82 = scmp.eq.s32.totalorder %s15, 0
    %p83 = por %p81, %p82
    %p84 = scmp.ne.s32.totalorder %s70, %s71
    %p85 = scmp.eq.s32.totalorder %s16, 1
    %p86 = por %p84, %p85
    %p88 = scmp.ne.s32.totalorder %s71, %s87
    %p89 = scmp.eq.s32.totalorder %s16, 0
    %p90 = por %p88, %p89
    %s92 = sadd.s32 %s91, 1
    %p95 = scmp.eq.s32.totalorder %s10, 1
    %p96 = scmp.ne.s32.totalorder %s91, %s93
    %p97 = scmp.eq.s32.totalorder %s10, 0
    %p98 = por %p96, %p97
    %p99 = scmp.ne.s32.totalorder %s91, %s93
    %p100 = scmp.eq.s32.totalorder %s15, 1
    %p101 = por %p99, %p100
    %p102 = scmp.ne.s32.totalorder %s93, %s94
    %p103 = scmp.eq.s32.totalorder %s15, 0
    %p104 = por %p102, %p103
    %p105 = scmp.ne.s32.totalorder %s93, %s94
    %p106 = scmp.eq.s32.totalorder %s16, 1
    %p107 = por %p105, %p106
    %p109 = scmp.ne.s32.totalorder %s94, %s108
    %p110 = scmp.eq.s32.totalorder %s16, 0
    %p111 = por %p109, %p110
    %p112 = scmp.le.s32.totalorder 1, %s10
    %p113 = scmp.lt.s32.totalorder %s10, 3
    %p114 = pnand %p112, %p113
    %p115 = pneg %p114
    // Predicated region
    $region9: #{resnet_block.3} parent=5 // pred_check
      _
    $region10: #{resnet_block.3} parent=5 // pred_check_branch
      %117 = sbr.rel (%p114) target = $region12
    $region11: #{resnet_block.3} parent=5 // pred_region
      %s118 = ssub.s32 %s10, 1
      // Predicated region
      $region13: #{resnet_block.3} parent=11 // pred_check
        %p119 = pneg %p57
      $region14: #{resnet_block.3} parent=11 // pred_check_branch
        %121 = sbr.rel (%p119) target = $region16
      $region15: #{resnet_block.3} parent=11 // pred_region
        _
      $region16: #{resnet_block.3} parent=11 // pred_fallthru
        _
    $region12: #{resnet_block.3} parent=5 // pred_fallthru
      _
    %p122 = scmp.lt.s32.totalorder %s10, 2
    // Predicated region
    $region17: #{resnet_block.3} parent=5 // pred_check
      %p123 = pneg %p122
    $region18: #{resnet_block.3} parent=5 // pred_check_branch
      %125 = sbr.rel (%p123) target = $region20
    $region19: #{resnet_block.3} parent=5 // pred_region
      // Predicated region
      $region21: #{resnet_block.3} parent=19 // pred_check
        %p126 = pneg %p30
      $region22: #{resnet_block.3} parent=19 // pred_check_branch
        %128 = sbr.rel (%p126) target = $region24
      $region23: #{resnet_block.3} parent=19 // pred_region
        %p129 = scmp.lt.s32.totalorder %s10, 1
        %s130 = scalar_select %p129, %s10, 1
        %s131 = smul.addr %s130, 54
        %s132 = smul.addr %s131, 8
        %s133 = scalar_lea.vmem %s0, %s132
      $region24: #{resnet_block.3} parent=19 // pred_fallthru
        _
    $region20: #{resnet_block.3} parent=5 // pred_fallthru
      _
    %p134 = scmp.le.s32.totalorder 1, %s10
    %p135 = scmp.lt.s32.totalorder %s10, 3
    %p136 = pnand %p134, %p135
    %p137 = pneg %p136
    // Predicated region
    $region25: #{resnet_block.3} parent=5 // pred_check
      _
    $region26: #{resnet_block.3} parent=5 // pred_check_branch
      %139 = sbr.rel (%p136) target = $region28
    $region27: #{resnet_block.3} parent=5 // pred_region
      %s140 = ssub.s32 %s10, 1
      %p141 = scmp.lt.s32.totalorder %s15, 1
      %s142 = scalar_select %p141, %s15, 1
      %s143 = smul.addr %s142, 54
      %s144 = smul.addr %s143, 8
      %s145 = scalar_lea.vmem %s0, %s144
      %p146 = pneg %p36
      %p147 = pneg %p33
      %p148 = pneg %p57
      %p149 = pneg %p54
      %p150 = pneg %p83
      %p151 = pneg %p80
      %p152 = scmp.lt.s32.totalorder %s15, 1
      %s153 = scalar_select %p152, %s15, 1
      %s154 = smul.addr %s153, 32
      %s155 = smul.addr %s154, 8
      %s156 = scalar_lea.vmem %s2, %s155
      %p157 = pneg %p104
      %p158 = pneg %p101
      %p159 = scmp.lt.s32.totalorder %s15, 1
      %s160 = scalar_select %p159, %s15, 1
      %s161 = smul.addr %s160, 54
      %s162 = smul.addr %s161, 8
      %s163 = scalar_lea.vmem %s0, %s162
      %p164 = scmp.lt.s32.totalorder %s15, 1
      %s165 = scalar_select %p164, %s15, 1
      %s166 = smul.addr %s165, 32
      %s167 = smul.addr %s166, 8
      %s168 = scalar_lea.vmem %s2, %s167
      %p169 = scmp.eq.s32.totalorder %s15, 0
      // Predicated region
      $region29: #{resnet_block.3} parent=27 // pred_check
        %p170 = pneg %p169
      $region30: #{resnet_block.3} parent=27 // pred_check_branch
        %172 = sbr.rel (%p170) target = $region32
      $region31: #{resnet_block.3} parent=27 // pred_region
        %173 = vst [vmem:[%s3] sm:$0x3] 0.0
      $region32: #{resnet_block.3} parent=27 // pred_fallthru
        _
      %v174 = vld [vmem:[%s163] sm:$0xff]
      %v175 = vld [vmem:[%s163 + $0x8] sm:$0xff]
      %v176 = vld [vmem:[%s163 + $0x18] sm:$0xff]
      %v177 = vld [vmem:[%s163 + $0x20] sm:$0xff]
      %v178 = vld [vmem:[%s163 + $0x30] sm:$0xff]
      %v179 = vld [vmem:[%s163 + $0x38] sm:$0xff]
      %v180 = vld [vmem:[%s163 + $0x48] sm:$0xff]
      %v181 = vld [vmem:[%s163 + $0x50] sm:$0xff]
      %v182 = vld [vmem:[%s163 + $0x60] sm:$0xff]
      %v183 = vld [vmem:[%s163 + $0x68] sm:$0xff]
      %v184 = vld [vmem:[%s163 + $0x78] sm:$0xff]
      %v185 = vld [vmem:[%s163 + $0x80] sm:$0xff]
      %v186 = vld [vmem:[%s163 + $0x90] sm:$0xff]
      %v187 = vld [vmem:[%s163 + $0x98] sm:$0xff]
      %v188 = vld [vmem:[%s163 + $0xa8] sm:$0xff]
      %v189 = vld [vmem:[%s163 + $0xb0] sm:$0xff]
      %v190 = vld [vmem:[%s163 + $0xc0] sm:$0xff]
      %v191 = vld [vmem:[%s163 + $0xc8] sm:$0xff]
      %v192 = vld [vmem:[%s163 + $0xd8] sm:$0xff]
      %v193 = vld [vmem:[%s163 + $0xe0] sm:$0xff]
      %v194 = vld [vmem:[%s163 + $0xf0] sm:$0xff]
      %v195 = vld [vmem:[%s163 + $0xf8] sm:$0xff]
      %v196 = vld [vmem:[%s163 + $0x108] sm:$0xff]
      %v197 = vld [vmem:[%s163 + $0x110] sm:$0xff]
      %v198 = vld [vmem:[%s163 + $0x120] sm:$0xff]
      %v199 = vld [vmem:[%s163 + $0x128] sm:$0xff]
      %v200 = vld [vmem:[%s163 + $0x138] sm:$0xff]
      %v201 = vld [vmem:[%s163 + $0x140] sm:$0xff]
      %v202 = vld [vmem:[%s163 + $0x150] sm:$0xff]
      %v203 = vld [vmem:[%s163 + $0x158] sm:$0xff]
      %v204 = vld [vmem:[%s163 + $0x168] sm:$0xff]
      %v205 = vld [vmem:[%s163 + $0x170] sm:$0xff]
      %v206 = vld [vmem:[%s1] sm:$0xff]
      %v207 = vld [vmem:[%s1 + $0x8] sm:$0xff]
      %v208 = vld [vmem:[%s1 + $0x10] sm:$0xff]
      %v209 = vld [vmem:[%s1 + $0x18] sm:$0xff]
      %v210 = vld [vmem:[%s1 + $0x20] sm:$0xff]
      %v211 = vld [vmem:[%s1 + $0x28] sm:$0xff]
      %v212 = vld [vmem:[%s1 + $0x30] sm:$0xff]
      %v213 = vld [vmem:[%s1 + $0x38] sm:$0xff]
      %v214 = vld [vmem:[%s1 + $0x40] sm:$0xff]
      %v215 = vld [vmem:[%s1 + $0x48] sm:$0xff]
      %v216 = vld [vmem:[%s1 + $0x50] sm:$0xff]
      %v217 = vld [vmem:[%s1 + $0x58] sm:$0xff]
      %v218 = vld [vmem:[%s1 + $0x60] sm:$0xff]
      %v219 = vld [vmem:[%s1 + $0x68] sm:$0xff]
      %v220 = vld [vmem:[%s1 + $0x70] sm:$0xff]
      %v221 = vld [vmem:[%s1 + $0x78] sm:$0xff]
      %v222 = vld [vmem:[%s163 + $0x1] sm:$0xff]
      %v223 = vld [vmem:[%s163 + $0x9] sm:$0xff]
      %v224 = vld [vmem:[%s163 + $0x19] sm:$0xff]
      %v225 = vld [vmem:[%s163 + $0x21] sm:$0xff]
      %v226 = vld [vmem:[%s163 + $0x31] sm:$0xff]
      %v227 = vld [vmem:[%s163 + $0x39] sm:$0xff]
      %v228 = vld [vmem:[%s163 + $0x49] sm:$0xff]
      %v229 = vld [vmem:[%s163 + $0x51] sm:$0xff]
      %v230 = vld [vmem:[%s163 + $0x61] sm:$0xff]
      %v231 = vld [vmem:[%s163 + $0x69] sm:$0xff]
      %v232 = vld [vmem:[%s163 + $0x79] sm:$0xff]
      %v233 = vld [vmem:[%s163 + $0x81] sm:$0xff]
      %v234 = vld [vmem:[%s163 + $0x91] sm:$0xff]
      %v235 = vld [vmem:[%s163 + $0x99] sm:$0xff]
      %v236 = vld [vmem:[%s163 + $0xa9] sm:$0xff]
      %v237 = vld [vmem:[%s163 + $0xb1] sm:$0xff]
      %v238 = vld [vmem:[%s163 + $0xc1] sm:$0xff]
      %v239 = vld [vmem:[%s163 + $0xc9] sm:$0xff]
      %v240 = vld [vmem:[%s163 + $0xd9] sm:$0xff]
      %v241 = vld [vmem:[%s163 + $0xe1] sm:$0xff]
      %v242 = vld [vmem:[%s163 + $0xf1] sm:$0xff]
      %v243 = vld [vmem:[%s163 + $0xf9] sm:$0xff]
      %v244 = vld [vmem:[%s163 + $0x109] sm:$0xff]
      %v245 = vld [vmem:[%s163 + $0x111] sm:$0xff]
      %v246 = vld [vmem:[%s163 + $0x121] sm:$0xff]
      %v247 = vld [vmem:[%s163 + $0x129] sm:$0xff]
      %v248 = vld [vmem:[%s163 + $0x139] sm:$0xff]
      %v249 = vld [vmem:[%s163 + $0x141] sm:$0xff]
      %v250 = vld [vmem:[%s163 + $0x151] sm:$0xff]
      %v251 = vld [vmem:[%s163 + $0x159] sm:$0xff]
      %v252 = vld [vmem:[%s163 + $0x169] sm:$0xff]
      %v253 = vld [vmem:[%s163 + $0x171] sm:$0xff]
      %s254 = scalar_lea.vmem %s1, 128
      %v255 = vld [vmem:[%s254] sm:$0xff]
      %v256 = vld [vmem:[%s254 + $0x8] sm:$0xff]
      %v257 = vld [vmem:[%s254 + $0x10] sm:$0xff]
      %v258 = vld [vmem:[%s254 + $0x18] sm:$0xff]
      %v259 = vld [vmem:[%s254 + $0x20] sm:$0xff]
      %v260 = vld [vmem:[%s254 + $0x28] sm:$0xff]
      %v261 = vld [vmem:[%s254 + $0x30] sm:$0xff]
      %v262 = vld [vmem:[%s254 + $0x38] sm:$0xff]
      %v263 = vld [vmem:[%s254 + $0x40] sm:$0xff]
      %v264 = vld [vmem:[%s254 + $0x48] sm:$0xff]
      %v265 = vld [vmem:[%s254 + $0x50] sm:$0xff]
      %v266 = vld [vmem:[%s254 + $0x58] sm:$0xff]
      %v267 = vld [vmem:[%s254 + $0x60] sm:$0xff]
      %v268 = vld [vmem:[%s254 + $0x68] sm:$0xff]
      %v269 = vld [vmem:[%s254 + $0x70] sm:$0xff]
      %v270 = vld [vmem:[%s254 + $0x78] sm:$0xff]
      %271 = vmatpush.msra.mxu0 %v270
      %272 = vmatpush.msra.mxu0 %v269
      %273 = vmatpush.msra.mxu0 %v268
      %274 = vmatpush.msra.mxu0 %v267
      %275 = vmatpush.msra.mxu0 %v266
      %276 = vmatpush.msra.mxu0 %v265
      %277 = vmatpush.msra.mxu0 %v264
      %278 = vmatpush.msra.mxu0 %v263
      %279 = vmatpush.msra.mxu0 %v262
      %280 = vmatpush.msra.mxu0 %v261
      %281 = vmatpush.msra.mxu0 %v260
      %282 = vmatpush.msra.mxu0 %v259
      %283 = vmatpush.msra.mxu0 %v258
      %284 = vmatpush.msra.mxu0 %v257
      %285 = vmatpush.msra.mxu0 %v256
      %286 = vmatpush.msra.mxu0 %v255
      %287 = vmatmul.f32.gmra.mxu0 %v222
      %v288 = vpop.f32.mrf.mxu0
      %v289 = vadd.f32 0.0, %v288
      %290 = vmatmul.f32.gmra.mxu0 %v223
      %v291 = vpop.f32.mrf.mxu0
      %v292 = vadd.f32 0.0, %v291
      %293 = vmatmul.f32.gmra.mxu0 %v224
      %v294 = vpop.f32.mrf.mxu0
      %v295 = vadd.f32 0.0, %v294
      %296 = vmatmul.f32.gmra.mxu0 %v225
      %v297 = vpop.f32.mrf.mxu0
      %v298 = vadd.f32 0.0, %v297
      %299 = vmatmul.f32.gmra.mxu0 %v226
      %v300 = vpop.f32.mrf.mxu0
      %v301 = vadd.f32 0.0, %v300
      %302 = vmatmul.f32.gmra.mxu0 %v227
      %v303 = vpop.f32.mrf.mxu0
      %v304 = vadd.f32 0.0, %v303
      %305 = vmatmul.f32.gmra.mxu0 %v228
      %v306 = vpop.f32.mrf.mxu0
      %v307 = vadd.f32 0.0, %v306
      %308 = vmatmul.f32.gmra.mxu0 %v229
      %v309 = vpop.f32.mrf.mxu0
      %v310 = vadd.f32 0.0, %v309
      %311 = vmatmul.f32.gmra.mxu0 %v230
      %v312 = vpop.f32.mrf.mxu0
      %v313 = vadd.f32 0.0, %v312
      %314 = vmatmul.f32.gmra.mxu0 %v231
      %v315 = vpop.f32.mrf.mxu0
      %v316 = vadd.f32 0.0, %v315
      %317 = vmatmul.f32.gmra.mxu0 %v232
      %v318 = vpop.f32.mrf.mxu0
      %v319 = vadd.f32 0.0, %v318
      %320 = vmatmul.f32.gmra.mxu0 %v233
      %v321 = vpop.f32.mrf.mxu0
      %v322 = vadd.f32 0.0, %v321
      %323 = vmatmul.f32.gmra.mxu0 %v234
      %v324 = vpop.f32.mrf.mxu0
      %v325 = vadd.f32 0.0, %v324
      %326 = vmatmul.f32.gmra.mxu0 %v235
      %v327 = vpop.f32.mrf.mxu0
      %v328 = vadd.f32 0.0, %v327
      %329 = vmatmul.f32.gmra.mxu0 %v236
      %v330 = vpop.f32.mrf.mxu0
      %v331 = vadd.f32 0.0, %v330
      %332 = vmatmul.f32.gmra.mxu0 %v237
      %v333 = vpop.f32.mrf.mxu0
      %v334 = vadd.f32 0.0, %v333
      %335 = vmatmul.f32.gmra.mxu0 %v238
      %v336 = vpop.f32.mrf.mxu0
      %v337 = vadd.f32 0.0, %v336
      %338 = vmatmul.f32.gmra.mxu0 %v239
      %v339 = vpop.f32.mrf.mxu0
      %v340 = vadd.f32 0.0, %v339
      %341 = vmatmul.f32.gmra.mxu0 %v240
      %v342 = vpop.f32.mrf.mxu0
      %v343 = vadd.f32 0.0, %v342
      %344 = vmatmul.f32.gmra.mxu0 %v241
      %v345 = vpop.f32.mrf.mxu0
      %v346 = vadd.f32 0.0, %v345
      %347 = vmatmul.f32.gmra.mxu0 %v242
      %v348 = vpop.f32.mrf.mxu0
      %v349 = vadd.f32 0.0, %v348
      %350 = vmatmul.f32.gmra.mxu0 %v243
      %v351 = vpop.f32.mrf.mxu0
      %v352 = vadd.f32 0.0, %v351
      %353 = vmatmul.f32.gmra.mxu0 %v244
      %v354 = vpop.f32.mrf.mxu0
      %v355 = vadd.f32 0.0, %v354
      %356 = vmatmul.f32.gmra.mxu0 %v245
      %v357 = vpop.f32.mrf.mxu0
      %v358 = vadd.f32 0.0, %v357
      %359 = vmatmul.f32.gmra.mxu0 %v246
      %v360 = vpop.f32.mrf.mxu0
      %v361 = vadd.f32 0.0, %v360
      %362 = vmatmul.f32.gmra.mxu0 %v247
      %v363 = vpop.f32.mrf.mxu0
      %v364 = vadd.f32 0.0, %v363
      %365 = vmatmul.f32.gmra.mxu0 %v248
      %v366 = vpop.f32.mrf.mxu0
      %v367 = vadd.f32 0.0, %v366
      %368 = vmatmul.f32.gmra.mxu0 %v249
      %v369 = vpop.f32.mrf.mxu0
      %v370 = vadd.f32 0.0, %v369
      %371 = vmatmul.f32.gmra.mxu0 %v250
      %v372 = vpop.f32.mrf.mxu0
      %v373 = vadd.f32 0.0, %v372
      %374 = vmatmul.f32.gmra.mxu0 %v251
      %v375 = vpop.f32.mrf.mxu0
      %v376 = vadd.f32 0.0, %v375
      %377 = vmatmul.f32.gmra.mxu0 %v252
      %v378 = vpop.f32.mrf.mxu0
      %v379 = vadd.f32 0.0, %v378
      %380 = vmatmul.f32.gmra.mxu0 %v253
      %v381 = vpop.f32.mrf.mxu0
      %v382 = vadd.f32 0.0, %v381
      %383 = vdwg.mxu0
      %384 = vmatpush.msra.mxu0 %v221
      %385 = vmatpush.msra.mxu0 %v220
      %386 = vmatpush.msra.mxu0 %v219
      %387 = vmatpush.msra.mxu0 %v218
      %388 = vmatpush.msra.mxu0 %v217
      %389 = vmatpush.msra.mxu0 %v216
      %390 = vmatpush.msra.mxu0 %v215
      %391 = vmatpush.msra.mxu0 %v214
      %392 = vmatpush.msra.mxu0 %v213
      %393 = vmatpush.msra.mxu0 %v212
      %394 = vmatpush.msra.mxu0 %v211
      %395 = vmatpush.msra.mxu0 %v210
      %396 = vmatpush.msra.mxu0 %v209
      %397 = vmatpush.msra.mxu0 %v208
      %398 = vmatpush.msra.mxu0 %v207
      %399 = vmatpush.msra.mxu0 %v206
      %400 = vmatmul.f32.gmra.mxu0 %v174
      %v401 = vpop.f32.mrf.mxu0
      %v402 = vadd.f32 %v289, %v401
      %403 = vmatmul.f32.gmra.mxu0 %v175
      %v404 = vpop.f32.mrf.mxu0
      %v405 = vadd.f32 %v292, %v404
      %406 = vmatmul.f32.gmra.mxu0 %v176
      %v407 = vpop.f32.mrf.mxu0
      %v408 = vadd.f32 %v295, %v407
      %409 = vmatmul.f32.gmra.mxu0 %v177
      %v410 = vpop.f32.mrf.mxu0
      %v411 = vadd.f32 %v298, %v410
      %412 = vmatmul.f32.gmra.mxu0 %v178
      %v413 = vpop.f32.mrf.mxu0
      %v414 = vadd.f32 %v301, %v413
      %415 = vmatmul.f32.gmra.mxu0 %v179
      %v416 = vpop.f32.mrf.mxu0
      %v417 = vadd.f32 %v304, %v416
      %418 = vmatmul.f32.gmra.mxu0 %v180
      %v419 = vpop.f32.mrf.mxu0
      %v420 = vadd.f32 %v307, %v419
      %421 = vmatmul.f32.gmra.mxu0 %v181
      %v422 = vpop.f32.mrf.mxu0
      %v423 = vadd.f32 %v310, %v422
      %424 = vmatmul.f32.gmra.mxu0 %v182
      %v425 = vpop.f32.mrf.mxu0
      %v426 = vadd.f32 %v313, %v425
      %427 = vmatmul.f32.gmra.mxu0 %v183
      %v428 = vpop.f32.mrf.mxu0
      %v429 = vadd.f32 %v316, %v428
      %430 = vmatmul.f32.gmra.mxu0 %v184
      %v431 = vpop.f32.mrf.mxu0
      %v432 = vadd.f32 %v319, %v431
      %433 = vmatmul.f32.gmra.mxu0 %v185
      %v434 = vpop.f32.mrf.mxu0
      %v435 = vadd.f32 %v322, %v434
      %436 = vmatmul.f32.gmra.mxu0 %v186
      %v437 = vpop.f32.mrf.mxu0
      %v438 = vadd.f32 %v325, %v437
      %439 = vmatmul.f32.gmra.mxu0 %v187
      %v440 = vpop.f32.mrf.mxu0
      %v441 = vadd.f32 %v328, %v440
      %442 = vmatmul.f32.gmra.mxu0 %v188
      %v443 = vpop.f32.mrf.mxu0
      %v444 = vadd.f32 %v331, %v443
      %445 = vmatmul.f32.gmra.mxu0 %v189
      %v446 = vpop.f32.mrf.mxu0
      %v447 = vadd.f32 %v334, %v446
      %448 = vmatmul.f32.gmra.mxu0 %v190
      %v449 = vpop.f32.mrf.mxu0
      %v450 = vadd.f32 %v337, %v449
      %451 = vmatmul.f32.gmra.mxu0 %v191
      %v452 = vpop.f32.mrf.mxu0
      %v453 = vadd.f32 %v340, %v452
      %454 = vmatmul.f32.gmra.mxu0 %v192
      %v455 = vpop.f32.mrf.mxu0
      %v456 = vadd.f32 %v343, %v455
      %457 = vmatmul.f32.gmra.mxu0 %v193
      %v458 = vpop.f32.mrf.mxu0
      %v459 = vadd.f32 %v346, %v458
      %460 = vmatmul.f32.gmra.mxu0 %v194
      %v461 = vpop.f32.mrf.mxu0
      %v462 = vadd.f32 %v349, %v461
      %463 = vmatmul.f32.gmra.mxu0 %v195
      %v464 = vpop.f32.mrf.mxu0
      %v465 = vadd.f32 %v352, %v464
      %466 = vmatmul.f32.gmra.mxu0 %v196
      %v467 = vpop.f32.mrf.mxu0
      %v468 = vadd.f32 %v355, %v467
      %469 = vmatmul.f32.gmra.mxu0 %v197
      %v470 = vpop.f32.mrf.mxu0
      %v471 = vadd.f32 %v358, %v470
      %472 = vmatmul.f32.gmra.mxu0 %v198
      %v473 = vpop.f32.mrf.mxu0
      %v474 = vadd.f32 %v361, %v473
      %475 = vmatmul.f32.gmra.mxu0 %v199
      %v476 = vpop.f32.mrf.mxu0
      %v477 = vadd.f32 %v364, %v476
      %478 = vmatmul.f32.gmra.mxu0 %v200
      %v479 = vpop.f32.mrf.mxu0
      %v480 = vadd.f32 %v367, %v479
      %481 = vmatmul.f32.gmra.mxu0 %v201
      %v482 = vpop.f32.mrf.mxu0
      %v483 = vadd.f32 %v370, %v482
      %484 = vmatmul.f32.gmra.mxu0 %v202
      %v485 = vpop.f32.mrf.mxu0
      %v486 = vadd.f32 %v373, %v485
      %487 = vmatmul.f32.gmra.mxu0 %v203
      %v488 = vpop.f32.mrf.mxu0
      %v489 = vadd.f32 %v376, %v488
      %490 = vmatmul.f32.gmra.mxu0 %v204
      %v491 = vpop.f32.mrf.mxu0
      %v492 = vadd.f32 %v379, %v491
      %493 = vmatmul.f32.gmra.mxu0 %v205
      %v494 = vpop.f32.mrf.mxu0
      %v495 = vadd.f32 %v382, %v494
      %496 = vdwg.mxu0
      %v497 = vld [vmem:[%s163 + $0x2] sm:$0xff]
      %v498 = vld [vmem:[%s163 + $0xa] sm:$0xff]
      %v499 = vld [vmem:[%s163 + $0x1a] sm:$0xff]
      %v500 = vld [vmem:[%s163 + $0x22] sm:$0xff]
      %v501 = vld [vmem:[%s163 + $0x32] sm:$0xff]
      %v502 = vld [vmem:[%s163 + $0x3a] sm:$0xff]
      %v503 = vld [vmem:[%s163 + $0x4a] sm:$0xff]
      %v504 = vld [vmem:[%s163 + $0x52] sm:$0xff]
      %v505 = vld [vmem:[%s163 + $0x62] sm:$0xff]
      %v506 = vld [vmem:[%s163 + $0x6a] sm:$0xff]
      %v507 = vld [vmem:[%s163 + $0x7a] sm:$0xff]
      %v508 = vld [vmem:[%s163 + $0x82] sm:$0xff]
      %v509 = vld [vmem:[%s163 + $0x92] sm:$0xff]
      %v510 = vld [vmem:[%s163 + $0x9a] sm:$0xff]
      %v511 = vld [vmem:[%s163 + $0xaa] sm:$0xff]
      %v512 = vld [vmem:[%s163 + $0xb2] sm:$0xff]
      %v513 = vld [vmem:[%s163 + $0xc2] sm:$0xff]
      %v514 = vld [vmem:[%s163 + $0xca] sm:$0xff]
      %v515 = vld [vmem:[%s163 + $0xda] sm:$0xff]
      %v516 = vld [vmem:[%s163 + $0xe2] sm:$0xff]
      %v517 = vld [vmem:[%s163 + $0xf2] sm:$0xff]
      %v518 = vld [vmem:[%s163 + $0xfa] sm:$0xff]
      %v519 = vld [vmem:[%s163 + $0x10a] sm:$0xff]
      %v520 = vld [vmem:[%s163 + $0x112] sm:$0xff]
      %v521 = vld [vmem:[%s163 + $0x122] sm:$0xff]
      %v522 = vld [vmem:[%s163 + $0x12a] sm:$0xff]
      %v523 = vld [vmem:[%s163 + $0x13a] sm:$0xff]
      %v524 = vld [vmem:[%s163 + $0x142] sm:$0xff]
      %v525 = vld [vmem:[%s163 + $0x152] sm:$0xff]
      %v526 = vld [vmem:[%s163 + $0x15a] sm:$0xff]
      %v527 = vld [vmem:[%s163 + $0x16a] sm:$0xff]
      %v528 = vld [vmem:[%s163 + $0x172] sm:$0xff]
      %s529 = scalar_lea.vmem %s1, 256
      %v530 = vld [vmem:[%s529] sm:$0xff]
      %v531 = vld [vmem:[%s529 + $0x8] sm:$0xff]
      %v532 = vld [vmem:[%s529 + $0x10] sm:$0xff]
      %v533 = vld [vmem:[%s529 + $0x18] sm:$0xff]
      %v534 = vld [vmem:[%s529 + $0x20] sm:$0xff]
      %v535 = vld [vmem:[%s529 + $0x28] sm:$0xff]
      %v536 = vld [vmem:[%s529 + $0x30] sm:$0xff]
      %v537 = vld [vmem:[%s529 + $0x38] sm:$0xff]
      %v538 = vld [vmem:[%s529 + $0x40] sm:$0xff]
      %v539 = vld [vmem:[%s529 + $0x48] sm:$0xff]
      %v540 = vld [vmem:[%s529 + $0x50] sm:$0xff]
      %v541 = vld [vmem:[%s529 + $0x58] sm:$0xff]
      %v542 = vld [vmem:[%s529 + $0x60] sm:$0xff]
      %v543 = vld [vmem:[%s529 + $0x68] sm:$0xff]
      %v544 = vld [vmem:[%s529 + $0x70] sm:$0xff]
      %v545 = vld [vmem:[%s529 + $0x78] sm:$0xff]
      %546 = vmatpush.msra.mxu0 %v545
      %547 = vmatpush.msra.mxu0 %v544
      %548 = vmatpush.msra.mxu0 %v543
      %549 = vmatpush.msra.mxu0 %v542
      %550 = vmatpush.msra.mxu0 %v541
      %551 = vmatpush.msra.mxu0 %v540
      %552 = vmatpush.msra.mxu0 %v539
      %553 = vmatpush.msra.mxu0 %v538
      %554 = vmatpush.msra.mxu0 %v537
      %555 = vmatpush.msra.mxu0 %v536
      %556 = vmatpush.msra.mxu0 %v535
      %557 = vmatpush.msra.mxu0 %v534
      %558 = vmatpush.msra.mxu0 %v533
      %559 = vmatpush.msra.mxu0 %v532
      %560 = vmatpush.msra.mxu0 %v531
      %561 = vmatpush.msra.mxu0 %v530
      %562 = vmatmul.f32.gmra.mxu0 %v497
      %v563 = vpop.f32.mrf.mxu0
      %v564 = vadd.f32 0.0, %v563
      %565 = vmatmul.f32.gmra.mxu0 %v498
      %v566 = vpop.f32.mrf.mxu0
      %v567 = vadd.f32 0.0, %v566
      %568 = vmatmul.f32.gmra.mxu0 %v499
      %v569 = vpop.f32.mrf.mxu0
      %v570 = vadd.f32 0.0, %v569
      %571 = vmatmul.f32.gmra.mxu0 %v500
      %v572 = vpop.f32.mrf.mxu0
      %v573 = vadd.f32 0.0, %v572
      %574 = vmatmul.f32.gmra.mxu0 %v501
      %v575 = vpop.f32.mrf.mxu0
      %v576 = vadd.f32 0.0, %v575
      %577 = vmatmul.f32.gmra.mxu0 %v502
      %v578 = vpop.f32.mrf.mxu0
      %v579 = vadd.f32 0.0, %v578
      %580 = vmatmul.f32.gmra.mxu0 %v503
      %v581 = vpop.f32.mrf.mxu0
      %v582 = vadd.f32 0.0, %v581
      %583 = vmatmul.f32.gmra.mxu0 %v504
      %v584 = vpop.f32.mrf.mxu0
      %v585 = vadd.f32 0.0, %v584
      %586 = vmatmul.f32.gmra.mxu0 %v505
      %v587 = vpop.f32.mrf.mxu0
      %v588 = vadd.f32 0.0, %v587
      %589 = vmatmul.f32.gmra.mxu0 %v506
      %v590 = vpop.f32.mrf.mxu0
      %v591 = vadd.f32 0.0, %v590
      %592 = vmatmul.f32.gmra.mxu0 %v507
      %v593 = vpop.f32.mrf.mxu0
      %v594 = vadd.f32 0.0, %v593
      %595 = vmatmul.f32.gmra.mxu0 %v508
      %v596 = vpop.f32.mrf.mxu0
      %v597 = vadd.f32 0.0, %v596
      %598 = vmatmul.f32.gmra.mxu0 %v509
      %v599 = vpop.f32.mrf.mxu0
      %v600 = vadd.f32 0.0, %v599
      %601 = vmatmul.f32.gmra.mxu0 %v510
      %v602 = vpop.f32.mrf.mxu0
      %v603 = vadd.f32 0.0, %v602
      %604 = vmatmul.f32.gmra.mxu0 %v511
      %v605 = vpop.f32.mrf.mxu0
      %v606 = vadd.f32 0.0, %v605
      %607 = vmatmul.f32.gmra.mxu0 %v512
      %v608 = vpop.f32.mrf.mxu0
      %v609 = vadd.f32 0.0, %v608
      %610 = vmatmul.f32.gmra.mxu0 %v513
      %v611 = vpop.f32.mrf.mxu0
      %v612 = vadd.f32 0.0, %v611
      %613 = vmatmul.f32.gmra.mxu0 %v514
      %v614 = vpop.f32.mrf.mxu0
      %v615 = vadd.f32 0.0, %v614
      %616 = vmatmul.f32.gmra.mxu0 %v515
      %v617 = vpop.f32.mrf.mxu0
      %v618 = vadd.f32 0.0, %v617
      %619 = vmatmul.f32.gmra.mxu0 %v516
      %v620 = vpop.f32.mrf.mxu0
      %v621 = vadd.f32 0.0, %v620
      %622 = vmatmul.f32.gmra.mxu0 %v517
      %v623 = vpop.f32.mrf.mxu0
      %v624 = vadd.f32 0.0, %v623
      %625 = vmatmul.f32.gmra.mxu0 %v518
      %v626 = vpop.f32.mrf.mxu0
      %v627 = vadd.f32 0.0, %v626
      %628 = vmatmul.f32.gmra.mxu0 %v519
      %v629 = vpop.f32.mrf.mxu0
      %v630 = vadd.f32 0.0, %v629
      %631 = vmatmul.f32.gmra.mxu0 %v520
      %v632 = vpop.f32.mrf.mxu0
      %v633 = vadd.f32 0.0, %v632
      %634 = vmatmul.f32.gmra.mxu0 %v521
      %v635 = vpop.f32.mrf.mxu0
      %v636 = vadd.f32 0.0, %v635
      %637 = vmatmul.f32.gmra.mxu0 %v522
      %v638 = vpop.f32.mrf.mxu0
      %v639 = vadd.f32 0.0, %v638
      %640 = vmatmul.f32.gmra.mxu0 %v523
      %v641 = vpop.f32.mrf.mxu0
      %v642 = vadd.f32 0.0, %v641
      %643 = vmatmul.f32.gmra.mxu0 %v524
      %v644 = vpop.f32.mrf.mxu0
      %v645 = vadd.f32 0.0, %v644
      %646 = vmatmul.f32.gmra.mxu0 %v525
      %v647 = vpop.f32.mrf.mxu0
      %v648 = vadd.f32 0.0, %v647
      %649 = vmatmul.f32.gmra.mxu0 %v526
      %v650 = vpop.f32.mrf.mxu0
      %v651 = vadd.f32 0.0, %v650
      %652 = vmatmul.f32.gmra.mxu0 %v527
      %v653 = vpop.f32.mrf.mxu0
      %v654 = vadd.f32 0.0, %v653
      %655 = vmatmul.f32.gmra.mxu0 %v528
      %v656 = vpop.f32.mrf.mxu0
      %v657 = vadd.f32 0.0, %v656
      %658 = vdwg.mxu0
      %v659 = vadd.f32 %v402, %v564
      %v660 = vadd.f32 %v405, %v567
      %v661 = vadd.f32 %v408, %v570
      %v662 = vadd.f32 %v411, %v573
      %v663 = vadd.f32 %v414, %v576
      %v664 = vadd.f32 %v417, %v579
      %v665 = vadd.f32 %v420, %v582
      %v666 = vadd.f32 %v423, %v585
      %v667 = vadd.f32 %v426, %v588
      %v668 = vadd.f32 %v429, %v591
      %v669 = vadd.f32 %v432, %v594
      %v670 = vadd.f32 %v435, %v597
      %v671 = vadd.f32 %v438, %v600
      %v672 = vadd.f32 %v441, %v603
      %v673 = vadd.f32 %v444, %v606
      %v674 = vadd.f32 %v447, %v609
      %v675 = vadd.f32 %v450, %v612
      %v676 = vadd.f32 %v453, %v615
      %v677 = vadd.f32 %v456, %v618
      %v678 = vadd.f32 %v459, %v621
      %v679 = vadd.f32 %v462, %v624
      %v680 = vadd.f32 %v465, %v627
      %v681 = vadd.f32 %v468, %v630
      %v682 = vadd.f32 %v471, %v633
      %v683 = vadd.f32 %v474, %v636
      %v684 = vadd.f32 %v477, %v639
      %v685 = vadd.f32 %v480, %v642
      %v686 = vadd.f32 %v483, %v645
      %v687 = vadd.f32 %v486, %v648
      %v688 = vadd.f32 %v489, %v651
      %v689 = vadd.f32 %v492, %v654
      %v690 = vadd.f32 %v495, %v657
      %s691 = scalar_lea.vmem %s163, 24
      %v692 = vld [vmem:[%s691] sm:$0xff]
      %v693 = vld [vmem:[%s691 + $0x8] sm:$0xff]
      %v694 = vld [vmem:[%s691 + $0x18] sm:$0xff]
      %v695 = vld [vmem:[%s691 + $0x20] sm:$0xff]
      %v696 = vld [vmem:[%s691 + $0x30] sm:$0xff]
      %v697 = vld [vmem:[%s691 + $0x38] sm:$0xff]
      %v698 = vld [vmem:[%s691 + $0x48] sm:$0xff]
      %v699 = vld [vmem:[%s691 + $0x50] sm:$0xff]
      %v700 = vld [vmem:[%s691 + $0x60] sm:$0xff]
      %v701 = vld [vmem:[%s691 + $0x68] sm:$0xff]
      %v702 = vld [vmem:[%s691 + $0x78] sm:$0xff]
      %v703 = vld [vmem:[%s691 + $0x80] sm:$0xff]
      %v704 = vld [vmem:[%s691 + $0x90] sm:$0xff]
      %v705 = vld [vmem:[%s691 + $0x98] sm:$0xff]
      %v706 = vld [vmem:[%s691 + $0xa8] sm:$0xff]
      %v707 = vld [vmem:[%s691 + $0xb0] sm:$0xff]
      %v708 = vld [vmem:[%s691 + $0xc0] sm:$0xff]
      %v709 = vld [vmem:[%s691 + $0xc8] sm:$0xff]
      %v710 = vld [vmem:[%s691 + $0xd8] sm:$0xff]
      %v711 = vld [vmem:[%s691 + $0xe0] sm:$0xff]
      %v712 = vld [vmem:[%s691 + $0xf0] sm:$0xff]
      %v713 = vld [vmem:[%s691 + $0xf8] sm:$0xff]
      %v714 = vld [vmem:[%s691 + $0x108] sm:$0xff]
      %v715 = vld [vmem:[%s691 + $0x110] sm:$0xff]
      %v716 = vld [vmem:[%s691 + $0x120] sm:$0xff]
      %v717 = vld [vmem:[%s691 + $0x128] sm:$0xff]
      %v718 = vld [vmem:[%s691 + $0x138] sm:$0xff]
      %v719 = vld [vmem:[%s691 + $0x140] sm:$0xff]
      %v720 = vld [vmem:[%s691 + $0x150] sm:$0xff]
      %v721 = vld [vmem:[%s691 + $0x158] sm:$0xff]
      %v722 = vld [vmem:[%s691 + $0x168] sm:$0xff]
      %v723 = vld [vmem:[%s691 + $0x170] sm:$0xff]
      %s724 = scalar_lea.vmem %s1, 384
      %v725 = vld [vmem:[%s724] sm:$0xff]
      %v726 = vld [vmem:[%s724 + $0x8] sm:$0xff]
      %v727 = vld [vmem:[%s724 + $0x10] sm:$0xff]
      %v728 = vld [vmem:[%s724 + $0x18] sm:$0xff]
      %v729 = vld [vmem:[%s724 + $0x20] sm:$0xff]
      %v730 = vld [vmem:[%s724 + $0x28] sm:$0xff]
      %v731 = vld [vmem:[%s724 + $0x30] sm:$0xff]
      %v732 = vld [vmem:[%s724 + $0x38] sm:$0xff]
      %v733 = vld [vmem:[%s724 + $0x40] sm:$0xff]
      %v734 = vld [vmem:[%s724 + $0x48] sm:$0xff]
      %v735 = vld [vmem:[%s724 + $0x50] sm:$0xff]
      %v736 = vld [vmem:[%s724 + $0x58] sm:$0xff]
      %v737 = vld [vmem:[%s724 + $0x60] sm:$0xff]
      %v738 = vld [vmem:[%s724 + $0x68] sm:$0xff]
      %v739 = vld [vmem:[%s724 + $0x70] sm:$0xff]
      %v740 = vld [vmem:[%s724 + $0x78] sm:$0xff]
      %741 = vmatpush.msra.mxu0 %v740
      %742 = vmatpush.msra.mxu0 %v739
      %743 = vmatpush.msra.mxu0 %v738
      %744 = vmatpush.msra.mxu0 %v737
      %745 = vmatpush.msra.mxu0 %v736
      %746 = vmatpush.msra.mxu0 %v735
      %747 = vmatpush.msra.mxu0 %v734
      %748 = vmatpush.msra.mxu0 %v733
      %749 = vmatpush.msra.mxu0 %v732
      %750 = vmatpush.msra.mxu0 %v731
      %751 = vmatpush.msra.mxu0 %v730
      %752 = vmatpush.msra.mxu0 %v729
      %753 = vmatpush.msra.mxu0 %v728
      %754 = vmatpush.msra.mxu0 %v727
      %755 = vmatpush.msra.mxu0 %v726
      %756 = vmatpush.msra.mxu0 %v725
      %757 = vmatmul.f32.gmra.mxu0 %v692
      %v758 = vpop.f32.mrf.mxu0
      %v759 = vadd.f32 0.0, %v758
      %760 = vmatmul.f32.gmra.mxu0 %v693
      %v761 = vpop.f32.mrf.mxu0
      %v762 = vadd.f32 0.0, %v761
      %763 = vmatmul.f32.gmra.mxu0 %v694
      %v764 = vpop.f32.mrf.mxu0
      %v765 = vadd.f32 0.0, %v764
      %766 = vmatmul.f32.gmra.mxu0 %v695
      %v767 = vpop.f32.mrf.mxu0
      %v768 = vadd.f32 0.0, %v767
      %769 = vmatmul.f32.gmra.mxu0 %v696
      %v770 = vpop.f32.mrf.mxu0
      %v771 = vadd.f32 0.0, %v770
      %772 = vmatmul.f32.gmra.mxu0 %v697
      %v773 = vpop.f32.mrf.mxu0
      %v774 = vadd.f32 0.0, %v773
      %775 = vmatmul.f32.gmra.mxu0 %v698
      %v776 = vpop.f32.mrf.mxu0
      %v777 = vadd.f32 0.0, %v776
      %778 = vmatmul.f32.gmra.mxu0 %v699
      %v779 = vpop.f32.mrf.mxu0
      %v780 = vadd.f32 0.0, %v779
      %781 = vmatmul.f32.gmra.mxu0 %v700
      %v782 = vpop.f32.mrf.mxu0
      %v783 = vadd.f32 0.0, %v782
      %784 = vmatmul.f32.gmra.mxu0 %v701
      %v785 = vpop.f32.mrf.mxu0
      %v786 = vadd.f32 0.0, %v785
      %787 = vmatmul.f32.gmra.mxu0 %v702
      %v788 = vpop.f32.mrf.mxu0
      %v789 = vadd.f32 0.0, %v788
      %790 = vmatmul.f32.gmra.mxu0 %v703
      %v791 = vpop.f32.mrf.mxu0
      %v792 = vadd.f32 0.0, %v791
      %793 = vmatmul.f32.gmra.mxu0 %v704
      %v794 = vpop.f32.mrf.mxu0
      %v795 = vadd.f32 0.0, %v794
      %796 = vmatmul.f32.gmra.mxu0 %v705
      %v797 = vpop.f32.mrf.mxu0
      %v798 = vadd.f32 0.0, %v797
      %799 = vmatmul.f32.gmra.mxu0 %v706
      %v800 = vpop.f32.mrf.mxu0
      %v801 = vadd.f32 0.0, %v800
      %802 = vmatmul.f32.gmra.mxu0 %v707
      %v803 = vpop.f32.mrf.mxu0
      %v804 = vadd.f32 0.0, %v803
      %805 = vmatmul.f32.gmra.mxu0 %v708
      %v806 = vpop.f32.mrf.mxu0
      %v807 = vadd.f32 0.0, %v806
      %808 = vmatmul.f32.gmra.mxu0 %v709
      %v809 = vpop.f32.mrf.mxu0
      %v810 = vadd.f32 0.0, %v809
      %811 = vmatmul.f32.gmra.mxu0 %v710
      %v812 = vpop.f32.mrf.mxu0
      %v813 = vadd.f32 0.0, %v812
      %814 = vmatmul.f32.gmra.mxu0 %v711
      %v815 = vpop.f32.mrf.mxu0
      %v816 = vadd.f32 0.0, %v815
      %817 = vmatmul.f32.gmra.mxu0 %v712
      %v818 = vpop.f32.mrf.mxu0
      %v819 = vadd.f32 0.0, %v818
      %820 = vmatmul.f32.gmra.mxu0 %v713
      %v821 = vpop.f32.mrf.mxu0
      %v822 = vadd.f32 0.0, %v821
      %823 = vmatmul.f32.gmra.mxu0 %v714
      %v824 = vpop.f32.mrf.mxu0
      %v825 = vadd.f32 0.0, %v824
      %826 = vmatmul.f32.gmra.mxu0 %v715
      %v827 = vpop.f32.mrf.mxu0
      %v828 = vadd.f32 0.0, %v827
      %829 = vmatmul.f32.gmra.mxu0 %v716
      %v830 = vpop.f32.mrf.mxu0
      %v831 = vadd.f32 0.0, %v830
      %832 = vmatmul.f32.gmra.mxu0 %v717
      %v833 = vpop.f32.mrf.mxu0
      %v834 = vadd.f32 0.0, %v833
      %835 = vmatmul.f32.gmra.mxu0 %v718
      %v836 = vpop.f32.mrf.mxu0
      %v837 = vadd.f32 0.0, %v836
      %838 = vmatmul.f32.gmra.mxu0 %v719
      %v839 = vpop.f32.mrf.mxu0
      %v840 = vadd.f32 0.0, %v839
      %841 = vmatmul.f32.gmra.mxu0 %v720
      %v842 = vpop.f32.mrf.mxu0
      %v843 = vadd.f32 0.0, %v842
      %844 = vmatmul.f32.gmra.mxu0 %v721
      %v845 = vpop.f32.mrf.mxu0
      %v846 = vadd.f32 0.0, %v845
      %847 = vmatmul.f32.gmra.mxu0 %v722
      %v848 = vpop.f32.mrf.mxu0
      %v849 = vadd.f32 0.0, %v848
      %850 = vmatmul.f32.gmra.mxu0 %v723
      %v851 = vpop.f32.mrf.mxu0
      %v852 = vadd.f32 0.0, %v851
      %853 = vdwg.mxu0
      %v854 = vadd.f32 %v659, %v759
      %v855 = vadd.f32 %v660, %v762
      %v856 = vadd.f32 %v661, %v765
      %v857 = vadd.f32 %v662, %v768
      %v858 = vadd.f32 %v663, %v771
      %v859 = vadd.f32 %v664, %v774
      %v860 = vadd.f32 %v665, %v777
      %v861 = vadd.f32 %v666, %v780
      %v862 = vadd.f32 %v667, %v783
      %v863 = vadd.f32 %v668, %v786
      %v864 = vadd.f32 %v669, %v789
      %v865 = vadd.f32 %v670, %v792
      %v866 = vadd.f32 %v671, %v795
      %v867 = vadd.f32 %v672, %v798
      %v868 = vadd.f32 %v673, %v801
      %v869 = vadd.f32 %v674, %v804
      %v870 = vadd.f32 %v675, %v807
      %v871 = vadd.f32 %v676, %v810
      %v872 = vadd.f32 %v677, %v813
      %v873 = vadd.f32 %v678, %v816
      %v874 = vadd.f32 %v679, %v819
      %v875 = vadd.f32 %v680, %v822
      %v876 = vadd.f32 %v681, %v825
      %v877 = vadd.f32 %v682, %v828
      %v878 = vadd.f32 %v683, %v831
      %v879 = vadd.f32 %v684, %v834
      %v880 = vadd.f32 %v685, %v837
      %v881 = vadd.f32 %v686, %v840
      %v882 = vadd.f32 %v687, %v843
      %v883 = vadd.f32 %v688, %v846
      %v884 = vadd.f32 %v689, %v849
      %v885 = vadd.f32 %v690, %v852
      %v886 = vld [vmem:[%s691 + $0x1] sm:$0xff]
      %v887 = vld [vmem:[%s691 + $0x9] sm:$0xff]
      %v888 = vld [vmem:[%s691 + $0x19] sm:$0xff]
      %v889 = vld [vmem:[%s691 + $0x21] sm:$0xff]
      %v890 = vld [vmem:[%s691 + $0x31] sm:$0xff]
      %v891 = vld [vmem:[%s691 + $0x39] sm:$0xff]
      %v892 = vld [vmem:[%s691 + $0x49] sm:$0xff]
      %v893 = vld [vmem:[%s691 + $0x51] sm:$0xff]
      %v894 = vld [vmem:[%s691 + $0x61] sm:$0xff]
      %v895 = vld [vmem:[%s691 + $0x69] sm:$0xff]
      %v896 = vld [vmem:[%s691 + $0x79] sm:$0xff]
      %v897 = vld [vmem:[%s691 + $0x81] sm:$0xff]
      %v898 = vld [vmem:[%s691 + $0x91] sm:$0xff]
      %v899 = vld [vmem:[%s691 + $0x99] sm:$0xff]
      %v900 = vld [vmem:[%s691 + $0xa9] sm:$0xff]
      %v901 = vld [vmem:[%s691 + $0xb1] sm:$0xff]
      %v902 = vld [vmem:[%s691 + $0xc1] sm:$0xff]
      %v903 = vld [vmem:[%s691 + $0xc9] sm:$0xff]
      %v904 = vld [vmem:[%s691 + $0xd9] sm:$0xff]
      %v905 = vld [vmem:[%s691 + $0xe1] sm:$0xff]
      %v906 = vld [vmem:[%s691 + $0xf1] sm:$0xff]
      %v907 = vld [vmem:[%s691 + $0xf9] sm:$0xff]
      %v908 = vld [vmem:[%s691 + $0x109] sm:$0xff]
      %v909 = vld [vmem:[%s691 + $0x111] sm:$0xff]
      %v910 = vld [vmem:[%s691 + $0x121] sm:$0xff]
      %v911 = vld [vmem:[%s691 + $0x129] sm:$0xff]
      %v912 = vld [vmem:[%s691 + $0x139] sm:$0xff]
      %v913 = vld [vmem:[%s691 + $0x141] sm:$0xff]
      %v914 = vld [vmem:[%s691 + $0x151] sm:$0xff]
      %v915 = vld [vmem:[%s691 + $0x159] sm:$0xff]
      %v916 = vld [vmem:[%s691 + $0x169] sm:$0xff]
      %v917 = vld [vmem:[%s691 + $0x171] sm:$0xff]
      %s918 = scalar_lea.vmem %s1, 512
      %v919 = vld [vmem:[%s918] sm:$0xff]
      %v920 = vld [vmem:[%s918 + $0x8] sm:$0xff]
      %v921 = vld [vmem:[%s918 + $0x10] sm:$0xff]
      %v922 = vld [vmem:[%s918 + $0x18] sm:$0xff]
      %v923 = vld [vmem:[%s918 + $0x20] sm:$0xff]
      %v924 = vld [vmem:[%s918 + $0x28] sm:$0xff]
      %v925 = vld [vmem:[%s918 + $0x30] sm:$0xff]
      %v926 = vld [vmem:[%s918 + $0x38] sm:$0xff]
      %v927 = vld [vmem:[%s918 + $0x40] sm:$0xff]
      %v928 = vld [vmem:[%s918 + $0x48] sm:$0xff]
      %v929 = vld [vmem:[%s918 + $0x50] sm:$0xff]
      %v930 = vld [vmem:[%s918 + $0x58] sm:$0xff]
      %v931 = vld [vmem:[%s918 + $0x60] sm:$0xff]
      %v932 = vld [vmem:[%s918 + $0x68] sm:$0xff]
      %v933 = vld [vmem:[%s918 + $0x70] sm:$0xff]
      %v934 = vld [vmem:[%s918 + $0x78] sm:$0xff]
      %935 = vmatpush.msra.mxu0 %v934
      %936 = vmatpush.msra.mxu0 %v933
      %937 = vmatpush.msra.mxu0 %v932
      %938 = vmatpush.msra.mxu0 %v931
      %939 = vmatpush.msra.mxu0 %v930
      %940 = vmatpush.msra.mxu0 %v929
      %941 = vmatpush.msra.mxu0 %v928
      %942 = vmatpush.msra.mxu0 %v927
      %943 = vmatpush.msra.mxu0 %v926
      %944 = vmatpush.msra.mxu0 %v925
      %945 = vmatpush.msra.mxu0 %v924
      %946 = vmatpush.msra.mxu0 %v923
      %947 = vmatpush.msra.mxu0 %v922
      %948 = vmatpush.msra.mxu0 %v921
      %949 = vmatpush.msra.mxu0 %v920
      %950 = vmatpush.msra.mxu0 %v919
      %951 = vmatmul.f32.gmra.mxu0 %v886
      %v952 = vpop.f32.mrf.mxu0
      %v953 = vadd.f32 0.0, %v952
      %954 = vmatmul.f32.gmra.mxu0 %v887
      %v955 = vpop.f32.mrf.mxu0
      %v956 = vadd.f32 0.0, %v955
      %957 = vmatmul.f32.gmra.mxu0 %v888
      %v958 = vpop.f32.mrf.mxu0
      %v959 = vadd.f32 0.0, %v958
      %960 = vmatmul.f32.gmra.mxu0 %v889
      %v961 = vpop.f32.mrf.mxu0
      %v962 = vadd.f32 0.0, %v961
      %963 = vmatmul.f32.gmra.mxu0 %v890
      %v964 = vpop.f32.mrf.mxu0
      %v965 = vadd.f32 0.0, %v964
      %966 = vmatmul.f32.gmra.mxu0 %v891
      %v967 = vpop.f32.mrf.mxu0
      %v968 = vadd.f32 0.0, %v967
      %969 = vmatmul.f32.gmra.mxu0 %v892
      %v970 = vpop.f32.mrf.mxu0
      %v971 = vadd.f32 0.0, %v970
      %972 = vmatmul.f32.gmra.mxu0 %v893
      %v973 = vpop.f32.mrf.mxu0
      %v974 = vadd.f32 0.0, %v973
      %975 = vmatmul.f32.gmra.mxu0 %v894
      %v976 = vpop.f32.mrf.mxu0
      %v977 = vadd.f32 0.0, %v976
      %978 = vmatmul.f32.gmra.mxu0 %v895
      %v979 = vpop.f32.mrf.mxu0
      %v980 = vadd.f32 0.0, %v979
      %981 = vmatmul.f32.gmra.mxu0 %v896
      %v982 = vpop.f32.mrf.mxu0
      %v983 = vadd.f32 0.0, %v982
      %984 = vmatmul.f32.gmra.mxu0 %v897
      %v985 = vpop.f32.mrf.mxu0
      %v986 = vadd.f32 0.0, %v985
      %987 = vmatmul.f32.gmra.mxu0 %v898
      %v988 = vpop.f32.mrf.mxu0
      %v989 = vadd.f32 0.0, %v988
      %990 = vmatmul.f32.gmra.mxu0 %v899
      %v991 = vpop.f32.mrf.mxu0
      %v992 = vadd.f32 0.0, %v991
      %993 = vmatmul.f32.gmra.mxu0 %v900
      %v994 = vpop.f32.mrf.mxu0
      %v995 = vadd.f32 0.0, %v994
      %996 = vmatmul.f32.gmra.mxu0 %v901
      %v997 = vpop.f32.mrf.mxu0
      %v998 = vadd.f32 0.0, %v997
      %999 = vmatmul.f32.gmra.mxu0 %v902
      %v1000 = vpop.f32.mrf.mxu0
      %v1001 = vadd.f32 0.0, %v1000
      %1002 = vmatmul.f32.gmra.mxu0 %v903
      %v1003 = vpop.f32.mrf.mxu0
      %v1004 = vadd.f32 0.0, %v1003
      %1005 = vmatmul.f32.gmra.mxu0 %v904
      %v1006 = vpop.f32.mrf.mxu0
      %v1007 = vadd.f32 0.0, %v1006
      %1008 = vmatmul.f32.gmra.mxu0 %v905
      %v1009 = vpop.f32.mrf.mxu0
      %v1010 = vadd.f32 0.0, %v1009
      %1011 = vmatmul.f32.gmra.mxu0 %v906
      %v1012 = vpop.f32.mrf.mxu0
      %v1013 = vadd.f32 0.0, %v1012
      %1014 = vmatmul.f32.gmra.mxu0 %v907
      %v1015 = vpop.f32.mrf.mxu0
      %v1016 = vadd.f32 0.0, %v1015
      %1017 = vmatmul.f32.gmra.mxu0 %v908
      %v1018 = vpop.f32.mrf.mxu0
      %v1019 = vadd.f32 0.0, %v1018
      %1020 = vmatmul.f32.gmra.mxu0 %v909
      %v1021 = vpop.f32.mrf.mxu0
      %v1022 = vadd.f32 0.0, %v1021
      %1023 = vmatmul.f32.gmra.mxu0 %v910
      %v1024 = vpop.f32.mrf.mxu0
      %v1025 = vadd.f32 0.0, %v1024
      %1026 = vmatmul.f32.gmra.mxu0 %v911
      %v1027 = vpop.f32.mrf.mxu0
      %v1028 = vadd.f32 0.0, %v1027
      %1029 = vmatmul.f32.gmra.mxu0 %v912
      %v1030 = vpop.f32.mrf.mxu0
      %v1031 = vadd.f32 0.0, %v1030
      %1032 = vmatmul.f32.gmra.mxu0 %v913
      %v1033 = vpop.f32.mrf.mxu0
      %v1034 = vadd.f32 0.0, %v1033
      %1035 = vmatmul.f32.gmra.mxu0 %v914
      %v1036 = vpop.f32.mrf.mxu0
      %v1037 = vadd.f32 0.0, %v1036
      %1038 = vmatmul.f32.gmra.mxu0 %v915
      %v1039 = vpop.f32.mrf.mxu0
      %v1040 = vadd.f32 0.0, %v1039
      %1041 = vmatmul.f32.gmra.mxu0 %v916
      %v1042 = vpop.f32.mrf.mxu0
      %v1043 = vadd.f32 0.0, %v1042
      %1044 = vmatmul.f32.gmra.mxu0 %v917
      %v1045 = vpop.f32.mrf.mxu0
      %v1046 = vadd.f32 0.0, %v1045
      %1047 = vdwg.mxu0
      %v1048 = vadd.f32 %v854, %v953
      %v1049 = vadd.f32 %v855, %v956
      %v1050 = vadd.f32 %v856, %v959
      %v1051 = vadd.f32 %v857, %v962
      %v1052 = vadd.f32 %v858, %v965
      %v1053 = vadd.f32 %v859, %v968
      %v1054 = vadd.f32 %v860, %v971
      %v1055 = vadd.f32 %v861, %v974
      %v1056 = vadd.f32 %v862, %v977
      %v1057 = vadd.f32 %v863, %v980
      %v1058 = vadd.f32 %v864, %v983
      %v1059 = vadd.f32 %v865, %v986
      %v1060 = vadd.f32 %v866, %v989
      %v1061 = vadd.f32 %v867, %v992
      %v1062 = vadd.f32 %v868, %v995
      %v1063 = vadd.f32 %v869, %v998
      %v1064 = vadd.f32 %v870, %v1001
      %v1065 = vadd.f32 %v871, %v1004
      %v1066 = vadd.f32 %v872, %v1007
      %v1067 = vadd.f32 %v873, %v1010
      %v1068 = vadd.f32 %v874, %v1013
      %v1069 = vadd.f32 %v875, %v1016
      %v1070 = vadd.f32 %v876, %v1019
      %v1071 = vadd.f32 %v877, %v1022
      %v1072 = vadd.f32 %v878, %v1025
      %v1073 = vadd.f32 %v879, %v1028
      %v1074 = vadd.f32 %v880, %v1031
      %v1075 = vadd.f32 %v881, %v1034
      %v1076 = vadd.f32 %v882, %v1037
      %v1077 = vadd.f32 %v883, %v1040
      %v1078 = vadd.f32 %v884, %v1043
      %v1079 = vadd.f32 %v885, %v1046
      %v1080 = vld [vmem:[%s691 + $0x2] sm:$0xff]
      %v1081 = vld [vmem:[%s691 + $0xa] sm:$0xff]
      %v1082 = vld [vmem:[%s691 + $0x1a] sm:$0xff]
      %v1083 = vld [vmem:[%s691 + $0x22] sm:$0xff]
      %v1084 = vld [vmem:[%s691 + $0x32] sm:$0xff]
      %v1085 = vld [vmem:[%s691 + $0x3a] sm:$0xff]
      %v1086 = vld [vmem:[%s691 + $0x4a] sm:$0xff]
      %v1087 = vld [vmem:[%s691 + $0x52] sm:$0xff]
      %v1088 = vld [vmem:[%s691 + $0x62] sm:$0xff]
      %v1089 = vld [vmem:[%s691 + $0x6a] sm:$0xff]
      %v1090 = vld [vmem:[%s691 + $0x7a] sm:$0xff]
      %v1091 = vld [vmem:[%s691 + $0x82] sm:$0xff]
      %v1092 = vld [vmem:[%s691 + $0x92] sm:$0xff]
      %v1093 = vld [vmem:[%s691 + $0x9a] sm:$0xff]
      %v1094 = vld [vmem:[%s691 + $0xaa] sm:$0xff]
      %v1095 = vld [vmem:[%s691 + $0xb2] sm:$0xff]
      %v1096 = vld [vmem:[%s691 + $0xc2] sm:$0xff]
      %v1097 = vld [vmem:[%s691 + $0xca] sm:$0xff]
      %v1098 = vld [vmem:[%s691 + $0xda] sm:$0xff]
      %v1099 = vld [vmem:[%s691 + $0xe2] sm:$0xff]
      %v1100 = vld [vmem:[%s691 + $0xf2] sm:$0xff]
      %v1101 = vld [vmem:[%s691 + $0xfa] sm:$0xff]
      %v1102 = vld [vmem:[%s691 + $0x10a] sm:$0xff]
      %v1103 = vld [vmem:[%s691 + $0x112] sm:$0xff]
      %v1104 = vld [vmem:[%s691 + $0x122] sm:$0xff]
      %v1105 = vld [vmem:[%s691 + $0x12a] sm:$0xff]
      %v1106 = vld [vmem:[%s691 + $0x13a] sm:$0xff]
      %v1107 = vld [vmem:[%s691 + $0x142] sm:$0xff]
      %v1108 = vld [vmem:[%s691 + $0x152] sm:$0xff]
      %v1109 = vld [vmem:[%s691 + $0x15a] sm:$0xff]
      %v1110 = vld [vmem:[%s691 + $0x16a] sm:$0xff]
      %v1111 = vld [vmem:[%s691 + $0x172] sm:$0xff]
      %s1112 = scalar_lea.vmem %s1, 640
      %v1113 = vld [vmem:[%s1112] sm:$0xff]
      %v1114 = vld [vmem:[%s1112 + $0x8] sm:$0xff]
      %v1115 = vld [vmem:[%s1112 + $0x10] sm:$0xff]
      %v1116 = vld [vmem:[%s1112 + $0x18] sm:$0xff]
      %v1117 = vld [vmem:[%s1112 + $0x20] sm:$0xff]
      %v1118 = vld [vmem:[%s1112 + $0x28] sm:$0xff]
      %v1119 = vld [vmem:[%s1112 + $0x30] sm:$0xff]
      %v1120 = vld [vmem:[%s1112 + $0x38] sm:$0xff]
      %v1121 = vld [vmem:[%s1112 + $0x40] sm:$0xff]
      %v1122 = vld [vmem:[%s1112 + $0x48] sm:$0xff]
      %v1123 = vld [vmem:[%s1112 + $0x50] sm:$0xff]
      %v1124 = vld [vmem:[%s1112 + $0x58] sm:$0xff]
      %v1125 = vld [vmem:[%s1112 + $0x60] sm:$0xff]
      %v1126 = vld [vmem:[%s1112 + $0x68] sm:$0xff]
      %v1127 = vld [vmem:[%s1112 + $0x70] sm:$0xff]
      %v1128 = vld [vmem:[%s1112 + $0x78] sm:$0xff]
      %1129 = vmatpush.msra.mxu0 %v1128
      %1130 = vmatpush.msra.mxu0 %v1127
      %1131 = vmatpush.msra.mxu0 %v1126
      %1132 = vmatpush.msra.mxu0 %v1125
      %1133 = vmatpush.msra.mxu0 %v1124
      %1134 = vmatpush.msra.mxu0 %v1123
      %1135 = vmatpush.msra.mxu0 %v1122
      %1136 = vmatpush.msra.mxu0 %v1121
      %1137 = vmatpush.msra.mxu0 %v1120
      %1138 = vmatpush.msra.mxu0 %v1119
      %1139 = vmatpush.msra.mxu0 %v1118
      %1140 = vmatpush.msra.mxu0 %v1117
      %1141 = vmatpush.msra.mxu0 %v1116
      %1142 = vmatpush.msra.mxu0 %v1115
      %1143 = vmatpush.msra.mxu0 %v1114
      %1144 = vmatpush.msra.mxu0 %v1113
      %1145 = vmatmul.f32.gmra.mxu0 %v1080
      %v1146 = vpop.f32.mrf.mxu0
      %v1147 = vadd.f32 0.0, %v1146
      %1148 = vmatmul.f32.gmra.mxu0 %v1081
      %v1149 = vpop.f32.mrf.mxu0
      %v1150 = vadd.f32 0.0, %v1149
      %1151 = vmatmul.f32.gmra.mxu0 %v1082
      %v1152 = vpop.f32.mrf.mxu0
      %v1153 = vadd.f32 0.0, %v1152
      %1154 = vmatmul.f32.gmra.mxu0 %v1083
      %v1155 = vpop.f32.mrf.mxu0
      %v1156 = vadd.f32 0.0, %v1155
      %1157 = vmatmul.f32.gmra.mxu0 %v1084
      %v1158 = vpop.f32.mrf.mxu0
      %v1159 = vadd.f32 0.0, %v1158
      %1160 = vmatmul.f32.gmra.mxu0 %v1085
      %v1161 = vpop.f32.mrf.mxu0
      %v1162 = vadd.f32 0.0, %v1161
      %1163 = vmatmul.f32.gmra.mxu0 %v1086
      %v1164 = vpop.f32.mrf.mxu0
      %v1165 = vadd.f32 0.0, %v1164
      %1166 = vmatmul.f32.gmra.mxu0 %v1087
      %v1167 = vpop.f32.mrf.mxu0
      %v1168 = vadd.f32 0.0, %v1167
      %1169 = vmatmul.f32.gmra.mxu0 %v1088
      %v1170 = vpop.f32.mrf.mxu0
      %v1171 = vadd.f32 0.0, %v1170
      %1172 = vmatmul.f32.gmra.mxu0 %v1089
      %v1173 = vpop.f32.mrf.mxu0
      %v1174 = vadd.f32 0.0, %v1173
      %1175 = vmatmul.f32.gmra.mxu0 %v1090
      %v1176 = vpop.f32.mrf.mxu0
      %v1177 = vadd.f32 0.0, %v1176
      %1178 = vmatmul.f32.gmra.mxu0 %v1091
      %v1179 = vpop.f32.mrf.mxu0
      %v1180 = vadd.f32 0.0, %v1179
      %1181 = vmatmul.f32.gmra.mxu0 %v1092
      %v1182 = vpop.f32.mrf.mxu0
      %v1183 = vadd.f32 0.0, %v1182
      %1184 = vmatmul.f32.gmra.mxu0 %v1093
      %v1185 = vpop.f32.mrf.mxu0
      %v1186 = vadd.f32 0.0, %v1185
      %1187 = vmatmul.f32.gmra.mxu0 %v1094
      %v1188 = vpop.f32.mrf.mxu0
      %v1189 = vadd.f32 0.0, %v1188
      %1190 = vmatmul.f32.gmra.mxu0 %v1095
      %v1191 = vpop.f32.mrf.mxu0
      %v1192 = vadd.f32 0.0, %v1191
      %1193 = vmatmul.f32.gmra.mxu0 %v1096
      %v1194 = vpop.f32.mrf.mxu0
      %v1195 = vadd.f32 0.0, %v1194
      %1196 = vmatmul.f32.gmra.mxu0 %v1097
      %v1197 = vpop.f32.mrf.mxu0
      %v1198 = vadd.f32 0.0, %v1197
      %1199 = vmatmul.f32.gmra.mxu0 %v1098
      %v1200 = vpop.f32.mrf.mxu0
      %v1201 = vadd.f32 0.0, %v1200
      %1202 = vmatmul.f32.gmra.mxu0 %v1099
      %v1203 = vpop.f32.mrf.mxu0
      %v1204 = vadd.f32 0.0, %v1203
      %1205 = vmatmul.f32.gmra.mxu0 %v1100
      %v1206 = vpop.f32.mrf.mxu0
      %v1207 = vadd.f32 0.0, %v1206
      %1208 = vmatmul.f32.gmra.mxu0 %v1101
      %v1209 = vpop.f32.mrf.mxu0
      %v1210 = vadd.f32 0.0, %v1209
      %1211 = vmatmul.f32.gmra.mxu0 %v1102
      %v1212 = vpop.f32.mrf.mxu0
      %v1213 = vadd.f32 0.0, %v1212
      %1214 = vmatmul.f32.gmra.mxu0 %v1103
      %v1215 = vpop.f32.mrf.mxu0
      %v1216 = vadd.f32 0.0, %v1215
      %1217 = vmatmul.f32.gmra.mxu0 %v1104
      %v1218 = vpop.f32.mrf.mxu0
      %v1219 = vadd.f32 0.0, %v1218
      %1220 = vmatmul.f32.gmra.mxu0 %v1105
      %v1221 = vpop.f32.mrf.mxu0
      %v1222 = vadd.f32 0.0, %v1221
      %1223 = vmatmul.f32.gmra.mxu0 %v1106
      %v1224 = vpop.f32.mrf.mxu0
      %v1225 = vadd.f32 0.0, %v1224
      %1226 = vmatmul.f32.gmra.mxu0 %v1107
      %v1227 = vpop.f32.mrf.mxu0
      %v1228 = vadd.f32 0.0, %v1227
      %1229 = vmatmul.f32.gmra.mxu0 %v1108
      %v1230 = vpop.f32.mrf.mxu0
      %v1231 = vadd.f32 0.0, %v1230
      %1232 = vmatmul.f32.gmra.mxu0 %v1109
      %v1233 = vpop.f32.mrf.mxu0
      %v1234 = vadd.f32 0.0, %v1233
      %1235 = vmatmul.f32.gmra.mxu0 %v1110
      %v1236 = vpop.f32.mrf.mxu0
      %v1237 = vadd.f32 0.0, %v1236
      %1238 = vmatmul.f32.gmra.mxu0 %v1111
      %v1239 = vpop.f32.mrf.mxu0
      %v1240 = vadd.f32 0.0, %v1239
      %1241 = vdwg.mxu0
      %v1242 = vadd.f32 %v1048, %v1147
      %v1243 = vadd.f32 %v1049, %v1150
      %v1244 = vadd.f32 %v1050, %v1153
      %v1245 = vadd.f32 %v1051, %v1156
      %v1246 = vadd.f32 %v1052, %v1159
      %v1247 = vadd.f32 %v1053, %v1162
      %v1248 = vadd.f32 %v1054, %v1165
      %v1249 = vadd.f32 %v1055, %v1168
      %v1250 = vadd.f32 %v1056, %v1171
      %v1251 = vadd.f32 %v1057, %v1174
      %v1252 = vadd.f32 %v1058, %v1177
      %v1253 = vadd.f32 %v1059, %v1180
      %v1254 = vadd.f32 %v1060, %v1183
      %v1255 = vadd.f32 %v1061, %v1186
      %v1256 = vadd.f32 %v1062, %v1189
      %v1257 = vadd.f32 %v1063, %v1192
      %v1258 = vadd.f32 %v1064, %v1195
      %v1259 = vadd.f32 %v1065, %v1198
      %v1260 = vadd.f32 %v1066, %v1201
      %v1261 = vadd.f32 %v1067, %v1204
      %v1262 = vadd.f32 %v1068, %v1207
      %v1263 = vadd.f32 %v1069, %v1210
      %v1264 = vadd.f32 %v1070, %v1213
      %v1265 = vadd.f32 %v1071, %v1216
      %v1266 = vadd.f32 %v1072, %v1219
      %v1267 = vadd.f32 %v1073, %v1222
      %v1268 = vadd.f32 %v1074, %v1225
      %v1269 = vadd.f32 %v1075, %v1228
      %v1270 = vadd.f32 %v1076, %v1231
      %v1271 = vadd.f32 %v1077, %v1234
      %v1272 = vadd.f32 %v1078, %v1237
      %v1273 = vadd.f32 %v1079, %v1240
      %s1274 = scalar_lea.vmem %s163, 48
      %v1275 = vld [vmem:[%s1274] sm:$0xff]
      %v1276 = vld [vmem:[%s1274 + $0x8] sm:$0xff]
      %v1277 = vld [vmem:[%s1274 + $0x18] sm:$0xff]
      %v1278 = vld [vmem:[%s1274 + $0x20] sm:$0xff]
      %v1279 = vld [vmem:[%s1274 + $0x30] sm:$0xff]
      %v1280 = vld [vmem:[%s1274 + $0x38] sm:$0xff]
      %v1281 = vld [vmem:[%s1274 + $0x48] sm:$0xff]
      %v1282 = vld [vmem:[%s1274 + $0x50] sm:$0xff]
      %v1283 = vld [vmem:[%s1274 + $0x60] sm:$0xff]
      %v1284 = vld [vmem:[%s1274 + $0x68] sm:$0xff]
      %v1285 = vld [vmem:[%s1274 + $0x78] sm:$0xff]
      %v1286 = vld [vmem:[%s1274 + $0x80] sm:$0xff]
      %v1287 = vld [vmem:[%s1274 + $0x90] sm:$0xff]
      %v1288 = vld [vmem:[%s1274 + $0x98] sm:$0xff]
      %v1289 = vld [vmem:[%s1274 + $0xa8] sm:$0xff]
      %v1290 = vld [vmem:[%s1274 + $0xb0] sm:$0xff]
      %v1291 = vld [vmem:[%s1274 + $0xc0] sm:$0xff]
      %v1292 = vld [vmem:[%s1274 + $0xc8] sm:$0xff]
      %v1293 = vld [vmem:[%s1274 + $0xd8] sm:$0xff]
      %v1294 = vld [vmem:[%s1274 + $0xe0] sm:$0xff]
      %v1295 = vld [vmem:[%s1274 + $0xf0] sm:$0xff]
      %v1296 = vld [vmem:[%s1274 + $0xf8] sm:$0xff]
      %v1297 = vld [vmem:[%s1274 + $0x108] sm:$0xff]
      %v1298 = vld [vmem:[%s1274 + $0x110] sm:$0xff]
      %v1299 = vld [vmem:[%s1274 + $0x120] sm:$0xff]
      %v1300 = vld [vmem:[%s1274 + $0x128] sm:$0xff]
      %v1301 = vld [vmem:[%s1274 + $0x138] sm:$0xff]
      %v1302 = vld [vmem:[%s1274 + $0x140] sm:$0xff]
      %v1303 = vld [vmem:[%s1274 + $0x150] sm:$0xff]
      %v1304 = vld [vmem:[%s1274 + $0x158] sm:$0xff]
      %v1305 = vld [vmem:[%s1274 + $0x168] sm:$0xff]
      %v1306 = vld [vmem:[%s1274 + $0x170] sm:$0xff]
      %s1307 = scalar_lea.vmem %s1, 768
      %v1308 = vld [vmem:[%s1307] sm:$0xff]
      %v1309 = vld [vmem:[%s1307 + $0x8] sm:$0xff]
      %v1310 = vld [vmem:[%s1307 + $0x10] sm:$0xff]
      %v1311 = vld [vmem:[%s1307 + $0x18] sm:$0xff]
      %v1312 = vld [vmem:[%s1307 + $0x20] sm:$0xff]
      %v1313 = vld [vmem:[%s1307 + $0x28] sm:$0xff]
      %v1314 = vld [vmem:[%s1307 + $0x30] sm:$0xff]
      %v1315 = vld [vmem:[%s1307 + $0x38] sm:$0xff]
      %v1316 = vld [vmem:[%s1307 + $0x40] sm:$0xff]
      %v1317 = vld [vmem:[%s1307 + $0x48] sm:$0xff]
      %v1318 = vld [vmem:[%s1307 + $0x50] sm:$0xff]
      %v1319 = vld [vmem:[%s1307 + $0x58] sm:$0xff]
      %v1320 = vld [vmem:[%s1307 + $0x60] sm:$0xff]
      %v1321 = vld [vmem:[%s1307 + $0x68] sm:$0xff]
      %v1322 = vld [vmem:[%s1307 + $0x70] sm:$0xff]
      %v1323 = vld [vmem:[%s1307 + $0x78] sm:$0xff]
      %1324 = vmatpush.msra.mxu0 %v1323
      %1325 = vmatpush.msra.mxu0 %v1322
      %1326 = vmatpush.msra.mxu0 %v1321
      %1327 = vmatpush.msra.mxu0 %v1320
      %1328 = vmatpush.msra.mxu0 %v1319
      %1329 = vmatpush.msra.mxu0 %v1318
      %1330 = vmatpush.msra.mxu0 %v1317
      %1331 = vmatpush.msra.mxu0 %v1316
      %1332 = vmatpush.msra.mxu0 %v1315
      %1333 = vmatpush.msra.mxu0 %v1314
      %1334 = vmatpush.msra.mxu0 %v1313
      %1335 = vmatpush.msra.mxu0 %v1312
      %1336 = vmatpush.msra.mxu0 %v1311
      %1337 = vmatpush.msra.mxu0 %v1310
      %1338 = vmatpush.msra.mxu0 %v1309
      %1339 = vmatpush.msra.mxu0 %v1308
      %1340 = vmatmul.f32.gmra.mxu0 %v1275
      %v1341 = vpop.f32.mrf.mxu0
      %v1342 = vadd.f32 0.0, %v1341
      %1343 = vmatmul.f32.gmra.mxu0 %v1276
      %v1344 = vpop.f32.mrf.mxu0
      %v1345 = vadd.f32 0.0, %v1344
      %1346 = vmatmul.f32.gmra.mxu0 %v1277
      %v1347 = vpop.f32.mrf.mxu0
      %v1348 = vadd.f32 0.0, %v1347
      %1349 = vmatmul.f32.gmra.mxu0 %v1278
      %v1350 = vpop.f32.mrf.mxu0
      %v1351 = vadd.f32 0.0, %v1350
      %1352 = vmatmul.f32.gmra.mxu0 %v1279
      %v1353 = vpop.f32.mrf.mxu0
      %v1354 = vadd.f32 0.0, %v1353
      %1355 = vmatmul.f32.gmra.mxu0 %v1280
      %v1356 = vpop.f32.mrf.mxu0
      %v1357 = vadd.f32 0.0, %v1356
      %1358 = vmatmul.f32.gmra.mxu0 %v1281
      %v1359 = vpop.f32.mrf.mxu0
      %v1360 = vadd.f32 0.0, %v1359
      %1361 = vmatmul.f32.gmra.mxu0 %v1282
      %v1362 = vpop.f32.mrf.mxu0
      %v1363 = vadd.f32 0.0, %v1362
      %1364 = vmatmul.f32.gmra.mxu0 %v1283
      %v1365 = vpop.f32.mrf.mxu0
      %v1366 = vadd.f32 0.0, %v1365
      %1367 = vmatmul.f32.gmra.mxu0 %v1284
      %v1368 = vpop.f32.mrf.mxu0
      %v1369 = vadd.f32 0.0, %v1368
      %1370 = vmatmul.f32.gmra.mxu0 %v1285
      %v1371 = vpop.f32.mrf.mxu0
      %v1372 = vadd.f32 0.0, %v1371
      %1373 = vmatmul.f32.gmra.mxu0 %v1286
      %v1374 = vpop.f32.mrf.mxu0
      %v1375 = vadd.f32 0.0, %v1374
      %1376 = vmatmul.f32.gmra.mxu0 %v1287
      %v1377 = vpop.f32.mrf.mxu0
      %v1378 = vadd.f32 0.0, %v1377
      %1379 = vmatmul.f32.gmra.mxu0 %v1288
      %v1380 = vpop.f32.mrf.mxu0
      %v1381 = vadd.f32 0.0, %v1380
      %1382 = vmatmul.f32.gmra.mxu0 %v1289
      %v1383 = vpop.f32.mrf.mxu0
      %v1384 = vadd.f32 0.0, %v1383
      %1385 = vmatmul.f32.gmra.mxu0 %v1290
      %v1386 = vpop.f32.mrf.mxu0
      %v1387 = vadd.f32 0.0, %v1386
      %1388 = vmatmul.f32.gmra.mxu0 %v1291
      %v1389 = vpop.f32.mrf.mxu0
      %v1390 = vadd.f32 0.0, %v1389
      %1391 = vmatmul.f32.gmra.mxu0 %v1292
      %v1392 = vpop.f32.mrf.mxu0
      %v1393 = vadd.f32 0.0, %v1392
      %1394 = vmatmul.f32.gmra.mxu0 %v1293
      %v1395 = vpop.f32.mrf.mxu0
      %v1396 = vadd.f32 0.0, %v1395
      %1397 = vmatmul.f32.gmra.mxu0 %v1294
      %v1398 = vpop.f32.mrf.mxu0
      %v1399 = vadd.f32 0.0, %v1398
      %1400 = vmatmul.f32.gmra.mxu0 %v1295
      %v1401 = vpop.f32.mrf.mxu0
      %v1402 = vadd.f32 0.0, %v1401
      %1403 = vmatmul.f32.gmra.mxu0 %v1296
      %v1404 = vpop.f32.mrf.mxu0
      %v1405 = vadd.f32 0.0, %v1404
      %1406 = vmatmul.f32.gmra.mxu0 %v1297
      %v1407 = vpop.f32.mrf.mxu0
      %v1408 = vadd.f32 0.0, %v1407
      %1409 = vmatmul.f32.gmra.mxu0 %v1298
      %v1410 = vpop.f32.mrf.mxu0
      %v1411 = vadd.f32 0.0, %v1410
      %1412 = vmatmul.f32.gmra.mxu0 %v1299
      %v1413 = vpop.f32.mrf.mxu0
      %v1414 = vadd.f32 0.0, %v1413
      %1415 = vmatmul.f32.gmra.mxu0 %v1300
      %v1416 = vpop.f32.mrf.mxu0
      %v1417 = vadd.f32 0.0, %v1416
      %1418 = vmatmul.f32.gmra.mxu0 %v1301
      %v1419 = vpop.f32.mrf.mxu0
      %v1420 = vadd.f32 0.0, %v1419
      %1421 = vmatmul.f32.gmra.mxu0 %v1302
      %v1422 = vpop.f32.mrf.mxu0
      %v1423 = vadd.f32 0.0, %v1422
      %1424 = vmatmul.f32.gmra.mxu0 %v1303
      %v1425 = vpop.f32.mrf.mxu0
      %v1426 = vadd.f32 0.0, %v1425
      %1427 = vmatmul.f32.gmra.mxu0 %v1304
      %v1428 = vpop.f32.mrf.mxu0
      %v1429 = vadd.f32 0.0, %v1428
      %1430 = vmatmul.f32.gmra.mxu0 %v1305
      %v1431 = vpop.f32.mrf.mxu0
      %v1432 = vadd.f32 0.0, %v1431
      %1433 = vmatmul.f32.gmra.mxu0 %v1306
      %v1434 = vpop.f32.mrf.mxu0
      %v1435 = vadd.f32 0.0, %v1434
      %1436 = vdwg.mxu0
      %v1437 = vadd.f32 %v1242, %v1342
      %v1438 = vadd.f32 %v1243, %v1345
      %v1439 = vadd.f32 %v1244, %v1348
      %v1440 = vadd.f32 %v1245, %v1351
      %v1441 = vadd.f32 %v1246, %v1354
      %v1442 = vadd.f32 %v1247, %v1357
      %v1443 = vadd.f32 %v1248, %v1360
      %v1444 = vadd.f32 %v1249, %v1363
      %v1445 = vadd.f32 %v1250, %v1366
      %v1446 = vadd.f32 %v1251, %v1369
      %v1447 = vadd.f32 %v1252, %v1372
      %v1448 = vadd.f32 %v1253, %v1375
      %v1449 = vadd.f32 %v1254, %v1378
      %v1450 = vadd.f32 %v1255, %v1381
      %v1451 = vadd.f32 %v1256, %v1384
      %v1452 = vadd.f32 %v1257, %v1387
      %v1453 = vadd.f32 %v1258, %v1390
      %v1454 = vadd.f32 %v1259, %v1393
      %v1455 = vadd.f32 %v1260, %v1396
      %v1456 = vadd.f32 %v1261, %v1399
      %v1457 = vadd.f32 %v1262, %v1402
      %v1458 = vadd.f32 %v1263, %v1405
      %v1459 = vadd.f32 %v1264, %v1408
      %v1460 = vadd.f32 %v1265, %v1411
      %v1461 = vadd.f32 %v1266, %v1414
      %v1462 = vadd.f32 %v1267, %v1417
      %v1463 = vadd.f32 %v1268, %v1420
      %v1464 = vadd.f32 %v1269, %v1423
      %v1465 = vadd.f32 %v1270, %v1426
      %v1466 = vadd.f32 %v1271, %v1429
      %v1467 = vadd.f32 %v1272, %v1432
      %v1468 = vadd.f32 %v1273, %v1435
      %v1469 = vld [vmem:[%s1274 + $0x1] sm:$0xff]
      %v1470 = vld [vmem:[%s1274 + $0x9] sm:$0xff]
      %v1471 = vld [vmem:[%s1274 + $0x19] sm:$0xff]
      %v1472 = vld [vmem:[%s1274 + $0x21] sm:$0xff]
      %v1473 = vld [vmem:[%s1274 + $0x31] sm:$0xff]
      %v1474 = vld [vmem:[%s1274 + $0x39] sm:$0xff]
      %v1475 = vld [vmem:[%s1274 + $0x49] sm:$0xff]
      %v1476 = vld [vmem:[%s1274 + $0x51] sm:$0xff]
      %v1477 = vld [vmem:[%s1274 + $0x61] sm:$0xff]
      %v1478 = vld [vmem:[%s1274 + $0x69] sm:$0xff]
      %v1479 = vld [vmem:[%s1274 + $0x79] sm:$0xff]
      %v1480 = vld [vmem:[%s1274 + $0x81] sm:$0xff]
      %v1481 = vld [vmem:[%s1274 + $0x91] sm:$0xff]
      %v1482 = vld [vmem:[%s1274 + $0x99] sm:$0xff]
      %v1483 = vld [vmem:[%s1274 + $0xa9] sm:$0xff]
      %v1484 = vld [vmem:[%s1274 + $0xb1] sm:$0xff]
      %v1485 = vld [vmem:[%s1274 + $0xc1] sm:$0xff]
      %v1486 = vld [vmem:[%s1274 + $0xc9] sm:$0xff]
      %v1487 = vld [vmem:[%s1274 + $0xd9] sm:$0xff]
      %v1488 = vld [vmem:[%s1274 + $0xe1] sm:$0xff]
      %v1489 = vld [vmem:[%s1274 + $0xf1] sm:$0xff]
      %v1490 = vld [vmem:[%s1274 + $0xf9] sm:$0xff]
      %v1491 = vld [vmem:[%s1274 + $0x109] sm:$0xff]
      %v1492 = vld [vmem:[%s1274 + $0x111] sm:$0xff]
      %v1493 = vld [vmem:[%s1274 + $0x121] sm:$0xff]
      %v1494 = vld [vmem:[%s1274 + $0x129] sm:$0xff]
      %v1495 = vld [vmem:[%s1274 + $0x139] sm:$0xff]
      %v1496 = vld [vmem:[%s1274 + $0x141] sm:$0xff]
      %v1497 = vld [vmem:[%s1274 + $0x151] sm:$0xff]
      %v1498 = vld [vmem:[%s1274 + $0x159] sm:$0xff]
      %v1499 = vld [vmem:[%s1274 + $0x169] sm:$0xff]
      %v1500 = vld [vmem:[%s1274 + $0x171] sm:$0xff]
      %s1501 = scalar_lea.vmem %s1, 896
      %v1502 = vld [vmem:[%s1501] sm:$0xff]
      %v1503 = vld [vmem:[%s1501 + $0x8] sm:$0xff]
      %v1504 = vld [vmem:[%s1501 + $0x10] sm:$0xff]
      %v1505 = vld [vmem:[%s1501 + $0x18] sm:$0xff]
      %v1506 = vld [vmem:[%s1501 + $0x20] sm:$0xff]
      %v1507 = vld [vmem:[%s1501 + $0x28] sm:$0xff]
      %v1508 = vld [vmem:[%s1501 + $0x30] sm:$0xff]
      %v1509 = vld [vmem:[%s1501 + $0x38] sm:$0xff]
      %v1510 = vld [vmem:[%s1501 + $0x40] sm:$0xff]
      %v1511 = vld [vmem:[%s1501 + $0x48] sm:$0xff]
      %v1512 = vld [vmem:[%s1501 + $0x50] sm:$0xff]
      %v1513 = vld [vmem:[%s1501 + $0x58] sm:$0xff]
      %v1514 = vld [vmem:[%s1501 + $0x60] sm:$0xff]
      %v1515 = vld [vmem:[%s1501 + $0x68] sm:$0xff]
      %v1516 = vld [vmem:[%s1501 + $0x70] sm:$0xff]
      %v1517 = vld [vmem:[%s1501 + $0x78] sm:$0xff]
      %1518 = vmatpush.msra.mxu0 %v1517
      %1519 = vmatpush.msra.mxu0 %v1516
      %1520 = vmatpush.msra.mxu0 %v1515
      %1521 = vmatpush.msra.mxu0 %v1514
      %1522 = vmatpush.msra.mxu0 %v1513
      %1523 = vmatpush.msra.mxu0 %v1512
      %1524 = vmatpush.msra.mxu0 %v1511
      %1525 = vmatpush.msra.mxu0 %v1510
      %1526 = vmatpush.msra.mxu0 %v1509
      %1527 = vmatpush.msra.mxu0 %v1508
      %1528 = vmatpush.msra.mxu0 %v1507
      %1529 = vmatpush.msra.mxu0 %v1506
      %1530 = vmatpush.msra.mxu0 %v1505
      %1531 = vmatpush.msra.mxu0 %v1504
      %1532 = vmatpush.msra.mxu0 %v1503
      %1533 = vmatpush.msra.mxu0 %v1502
      %1534 = vmatmul.f32.gmra.mxu0 %v1469
      %v1535 = vpop.f32.mrf.mxu0
      %v1536 = vadd.f32 0.0, %v1535
      %1537 = vmatmul.f32.gmra.mxu0 %v1470
      %v1538 = vpop.f32.mrf.mxu0
      %v1539 = vadd.f32 0.0, %v1538
      %1540 = vmatmul.f32.gmra.mxu0 %v1471
      %v1541 = vpop.f32.mrf.mxu0
      %v1542 = vadd.f32 0.0, %v1541
      %1543 = vmatmul.f32.gmra.mxu0 %v1472
      %v1544 = vpop.f32.mrf.mxu0
      %v1545 = vadd.f32 0.0, %v1544
      %1546 = vmatmul.f32.gmra.mxu0 %v1473
      %v1547 = vpop.f32.mrf.mxu0
      %v1548 = vadd.f32 0.0, %v1547
      %1549 = vmatmul.f32.gmra.mxu0 %v1474
      %v1550 = vpop.f32.mrf.mxu0
      %v1551 = vadd.f32 0.0, %v1550
      %1552 = vmatmul.f32.gmra.mxu0 %v1475
      %v1553 = vpop.f32.mrf.mxu0
      %v1554 = vadd.f32 0.0, %v1553
      %1555 = vmatmul.f32.gmra.mxu0 %v1476
      %v1556 = vpop.f32.mrf.mxu0
      %v1557 = vadd.f32 0.0, %v1556
      %1558 = vmatmul.f32.gmra.mxu0 %v1477
      %v1559 = vpop.f32.mrf.mxu0
      %v1560 = vadd.f32 0.0, %v1559
      %1561 = vmatmul.f32.gmra.mxu0 %v1478
      %v1562 = vpop.f32.mrf.mxu0
      %v1563 = vadd.f32 0.0, %v1562
      %1564 = vmatmul.f32.gmra.mxu0 %v1479
      %v1565 = vpop.f32.mrf.mxu0
      %v1566 = vadd.f32 0.0, %v1565
      %1567 = vmatmul.f32.gmra.mxu0 %v1480
      %v1568 = vpop.f32.mrf.mxu0
      %v1569 = vadd.f32 0.0, %v1568
      %1570 = vmatmul.f32.gmra.mxu0 %v1481
      %v1571 = vpop.f32.mrf.mxu0
      %v1572 = vadd.f32 0.0, %v1571
      %1573 = vmatmul.f32.gmra.mxu0 %v1482
      %v1574 = vpop.f32.mrf.mxu0
      %v1575 = vadd.f32 0.0, %v1574
      %1576 = vmatmul.f32.gmra.mxu0 %v1483
      %v1577 = vpop.f32.mrf.mxu0
      %v1578 = vadd.f32 0.0, %v1577
      %1579 = vmatmul.f32.gmra.mxu0 %v1484
      %v1580 = vpop.f32.mrf.mxu0
      %v1581 = vadd.f32 0.0, %v1580
      %1582 = vmatmul.f32.gmra.mxu0 %v1485
      %v1583 = vpop.f32.mrf.mxu0
      %v1584 = vadd.f32 0.0, %v1583
      %1585 = vmatmul.f32.gmra.mxu0 %v1486
      %v1586 = vpop.f32.mrf.mxu0
      %v1587 = vadd.f32 0.0, %v1586
      %1588 = vmatmul.f32.gmra.mxu0 %v1487
      %v1589 = vpop.f32.mrf.mxu0
      %v1590 = vadd.f32 0.0, %v1589
      %1591 = vmatmul.f32.gmra.mxu0 %v1488
      %v1592 = vpop.f32.mrf.mxu0
      %v1593 = vadd.f32 0.0, %v1592
      %1594 = vmatmul.f32.gmra.mxu0 %v1489
      %v1595 = vpop.f32.mrf.mxu0
      %v1596 = vadd.f32 0.0, %v1595
      %1597 = vmatmul.f32.gmra.mxu0 %v1490
      %v1598 = vpop.f32.mrf.mxu0
      %v1599 = vadd.f32 0.0, %v1598
      %1600 = vmatmul.f32.gmra.mxu0 %v1491
      %v1601 = vpop.f32.mrf.mxu0
      %v1602 = vadd.f32 0.0, %v1601
      %1603 = vmatmul.f32.gmra.mxu0 %v1492
      %v1604 = vpop.f32.mrf.mxu0
      %v1605 = vadd.f32 0.0, %v1604
      %1606 = vmatmul.f32.gmra.mxu0 %v1493
      %v1607 = vpop.f32.mrf.mxu0
      %v1608 = vadd.f32 0.0, %v1607
      %1609 = vmatmul.f32.gmra.mxu0 %v1494
      %v1610 = vpop.f32.mrf.mxu0
      %v1611 = vadd.f32 0.0, %v1610
      %1612 = vmatmul.f32.gmra.mxu0 %v1495
      %v1613 = vpop.f32.mrf.mxu0
      %v1614 = vadd.f32 0.0, %v1613
      %1615 = vmatmul.f32.gmra.mxu0 %v1496
      %v1616 = vpop.f32.mrf.mxu0
      %v1617 = vadd.f32 0.0, %v1616
      %1618 = vmatmul.f32.gmra.mxu0 %v1497
      %v1619 = vpop.f32.mrf.mxu0
      %v1620 = vadd.f32 0.0, %v1619
      %1621 = vmatmul.f32.gmra.mxu0 %v1498
      %v1622 = vpop.f32.mrf.mxu0
      %v1623 = vadd.f32 0.0, %v1622
      %1624 = vmatmul.f32.gmra.mxu0 %v1499
      %v1625 = vpop.f32.mrf.mxu0
      %v1626 = vadd.f32 0.0, %v1625
      %1627 = vmatmul.f32.gmra.mxu0 %v1500
      %v1628 = vpop.f32.mrf.mxu0
      %v1629 = vadd.f32 0.0, %v1628
      %1630 = vdwg.mxu0
      %v1631 = vadd.f32 %v1437, %v1536
      %v1632 = vadd.f32 %v1438, %v1539
      %v1633 = vadd.f32 %v1439, %v1542
      %v1634 = vadd.f32 %v1440, %v1545
      %v1635 = vadd.f32 %v1441, %v1548
      %v1636 = vadd.f32 %v1442, %v1551
      %v1637 = vadd.f32 %v1443, %v1554
      %v1638 = vadd.f32 %v1444, %v1557
      %v1639 = vadd.f32 %v1445, %v1560
      %v1640 = vadd.f32 %v1446, %v1563
      %v1641 = vadd.f32 %v1447, %v1566
      %v1642 = vadd.f32 %v1448, %v1569
      %v1643 = vadd.f32 %v1449, %v1572
      %v1644 = vadd.f32 %v1450, %v1575
      %v1645 = vadd.f32 %v1451, %v1578
      %v1646 = vadd.f32 %v1452, %v1581
      %v1647 = vadd.f32 %v1453, %v1584
      %v1648 = vadd.f32 %v1454, %v1587
      %v1649 = vadd.f32 %v1455, %v1590
      %v1650 = vadd.f32 %v1456, %v1593
      %v1651 = vadd.f32 %v1457, %v1596
      %v1652 = vadd.f32 %v1458, %v1599
      %v1653 = vadd.f32 %v1459, %v1602
      %v1654 = vadd.f32 %v1460, %v1605
      %v1655 = vadd.f32 %v1461, %v1608
      %v1656 = vadd.f32 %v1462, %v1611
      %v1657 = vadd.f32 %v1463, %v1614
      %v1658 = vadd.f32 %v1464, %v1617
      %v1659 = vadd.f32 %v1465, %v1620
      %v1660 = vadd.f32 %v1466, %v1623
      %v1661 = vadd.f32 %v1467, %v1626
      %v1662 = vadd.f32 %v1468, %v1629
      %v1663 = vld [vmem:[%s1274 + $0x2] sm:$0xff]
      %v1664 = vld [vmem:[%s1274 + $0xa] sm:$0xff]
      %v1665 = vld [vmem:[%s1274 + $0x1a] sm:$0xff]
      %v1666 = vld [vmem:[%s1274 + $0x22] sm:$0xff]
      %v1667 = vld [vmem:[%s1274 + $0x32] sm:$0xff]
      %v1668 = vld [vmem:[%s1274 + $0x3a] sm:$0xff]
      %v1669 = vld [vmem:[%s1274 + $0x4a] sm:$0xff]
      %v1670 = vld [vmem:[%s1274 + $0x52] sm:$0xff]
      %v1671 = vld [vmem:[%s1274 + $0x62] sm:$0xff]
      %v1672 = vld [vmem:[%s1274 + $0x6a] sm:$0xff]
      %v1673 = vld [vmem:[%s1274 + $0x7a] sm:$0xff]
      %v1674 = vld [vmem:[%s1274 + $0x82] sm:$0xff]
      %v1675 = vld [vmem:[%s1274 + $0x92] sm:$0xff]
      %v1676 = vld [vmem:[%s1274 + $0x9a] sm:$0xff]
      %v1677 = vld [vmem:[%s1274 + $0xaa] sm:$0xff]
      %v1678 = vld [vmem:[%s1274 + $0xb2] sm:$0xff]
      %v1679 = vld [vmem:[%s1274 + $0xc2] sm:$0xff]
      %v1680 = vld [vmem:[%s1274 + $0xca] sm:$0xff]
      %v1681 = vld [vmem:[%s1274 + $0xda] sm:$0xff]
      %v1682 = vld [vmem:[%s1274 + $0xe2] sm:$0xff]
      %v1683 = vld [vmem:[%s1274 + $0xf2] sm:$0xff]
      %v1684 = vld [vmem:[%s1274 + $0xfa] sm:$0xff]
      %v1685 = vld [vmem:[%s1274 + $0x10a] sm:$0xff]
      %v1686 = vld [vmem:[%s1274 + $0x112] sm:$0xff]
      %v1687 = vld [vmem:[%s1274 + $0x122] sm:$0xff]
      %v1688 = vld [vmem:[%s1274 + $0x12a] sm:$0xff]
      %v1689 = vld [vmem:[%s1274 + $0x13a] sm:$0xff]
      %v1690 = vld [vmem:[%s1274 + $0x142] sm:$0xff]
      %v1691 = vld [vmem:[%s1274 + $0x152] sm:$0xff]
      %v1692 = vld [vmem:[%s1274 + $0x15a] sm:$0xff]
      %v1693 = vld [vmem:[%s1274 + $0x16a] sm:$0xff]
      %v1694 = vld [vmem:[%s1274 + $0x172] sm:$0xff]
      %s1695 = scalar_lea.vmem %s1, 1024
      %v1696 = vld [vmem:[%s1695] sm:$0xff]
      %v1697 = vld [vmem:[%s1695 + $0x8] sm:$0xff]
      %v1698 = vld [vmem:[%s1695 + $0x10] sm:$0xff]
      %v1699 = vld [vmem:[%s1695 + $0x18] sm:$0xff]
      %v1700 = vld [vmem:[%s1695 + $0x20] sm:$0xff]
      %v1701 = vld [vmem:[%s1695 + $0x28] sm:$0xff]
      %v1702 = vld [vmem:[%s1695 + $0x30] sm:$0xff]
      %v1703 = vld [vmem:[%s1695 + $0x38] sm:$0xff]
      %v1704 = vld [vmem:[%s1695 + $0x40] sm:$0xff]
      %v1705 = vld [vmem:[%s1695 + $0x48] sm:$0xff]
      %v1706 = vld [vmem:[%s1695 + $0x50] sm:$0xff]
      %v1707 = vld [vmem:[%s1695 + $0x58] sm:$0xff]
      %v1708 = vld [vmem:[%s1695 + $0x60] sm:$0xff]
      %v1709 = vld [vmem:[%s1695 + $0x68] sm:$0xff]
      %v1710 = vld [vmem:[%s1695 + $0x70] sm:$0xff]
      %v1711 = vld [vmem:[%s1695 + $0x78] sm:$0xff]
      %1712 = vmatpush.msra.mxu0 %v1711
      %1713 = vmatpush.msra.mxu0 %v1710
      %1714 = vmatpush.msra.mxu0 %v1709
      %1715 = vmatpush.msra.mxu0 %v1708
      %1716 = vmatpush.msra.mxu0 %v1707
      %1717 = vmatpush.msra.mxu0 %v1706
      %1718 = vmatpush.msra.mxu0 %v1705
      %1719 = vmatpush.msra.mxu0 %v1704
      %1720 = vmatpush.msra.mxu0 %v1703
      %1721 = vmatpush.msra.mxu0 %v1702
      %1722 = vmatpush.msra.mxu0 %v1701
      %1723 = vmatpush.msra.mxu0 %v1700
      %1724 = vmatpush.msra.mxu0 %v1699
      %1725 = vmatpush.msra.mxu0 %v1698
      %1726 = vmatpush.msra.mxu0 %v1697
      %1727 = vmatpush.msra.mxu0 %v1696
      %1728 = vmatmul.f32.gmra.mxu0 %v1663
      %v1729 = vpop.f32.mrf.mxu0
      %v1730 = vadd.f32 0.0, %v1729
      %1731 = vmatmul.f32.gmra.mxu0 %v1664
      %v1732 = vpop.f32.mrf.mxu0
      %v1733 = vadd.f32 0.0, %v1732
      %1734 = vmatmul.f32.gmra.mxu0 %v1665
      %v1735 = vpop.f32.mrf.mxu0
      %v1736 = vadd.f32 0.0, %v1735
      %1737 = vmatmul.f32.gmra.mxu0 %v1666
      %v1738 = vpop.f32.mrf.mxu0
      %v1739 = vadd.f32 0.0, %v1738
      %1740 = vmatmul.f32.gmra.mxu0 %v1667
      %v1741 = vpop.f32.mrf.mxu0
      %v1742 = vadd.f32 0.0, %v1741
      %1743 = vmatmul.f32.gmra.mxu0 %v1668
      %v1744 = vpop.f32.mrf.mxu0
      %v1745 = vadd.f32 0.0, %v1744
      %1746 = vmatmul.f32.gmra.mxu0 %v1669
      %v1747 = vpop.f32.mrf.mxu0
      %v1748 = vadd.f32 0.0, %v1747
      %1749 = vmatmul.f32.gmra.mxu0 %v1670
      %v1750 = vpop.f32.mrf.mxu0
      %v1751 = vadd.f32 0.0, %v1750
      %1752 = vmatmul.f32.gmra.mxu0 %v1671
      %v1753 = vpop.f32.mrf.mxu0
      %v1754 = vadd.f32 0.0, %v1753
      %1755 = vmatmul.f32.gmra.mxu0 %v1672
      %v1756 = vpop.f32.mrf.mxu0
      %v1757 = vadd.f32 0.0, %v1756
      %1758 = vmatmul.f32.gmra.mxu0 %v1673
      %v1759 = vpop.f32.mrf.mxu0
      %v1760 = vadd.f32 0.0, %v1759
      %1761 = vmatmul.f32.gmra.mxu0 %v1674
      %v1762 = vpop.f32.mrf.mxu0
      %v1763 = vadd.f32 0.0, %v1762
      %1764 = vmatmul.f32.gmra.mxu0 %v1675
      %v1765 = vpop.f32.mrf.mxu0
      %v1766 = vadd.f32 0.0, %v1765
      %1767 = vmatmul.f32.gmra.mxu0 %v1676
      %v1768 = vpop.f32.mrf.mxu0
      %v1769 = vadd.f32 0.0, %v1768
      %1770 = vmatmul.f32.gmra.mxu0 %v1677
      %v1771 = vpop.f32.mrf.mxu0
      %v1772 = vadd.f32 0.0, %v1771
      %1773 = vmatmul.f32.gmra.mxu0 %v1678
      %v1774 = vpop.f32.mrf.mxu0
      %v1775 = vadd.f32 0.0, %v1774
      %1776 = vmatmul.f32.gmra.mxu0 %v1679
      %v1777 = vpop.f32.mrf.mxu0
      %v1778 = vadd.f32 0.0, %v1777
      %1779 = vmatmul.f32.gmra.mxu0 %v1680
      %v1780 = vpop.f32.mrf.mxu0
      %v1781 = vadd.f32 0.0, %v1780
      %1782 = vmatmul.f32.gmra.mxu0 %v1681
      %v1783 = vpop.f32.mrf.mxu0
      %v1784 = vadd.f32 0.0, %v1783
      %1785 = vmatmul.f32.gmra.mxu0 %v1682
      %v1786 = vpop.f32.mrf.mxu0
      %v1787 = vadd.f32 0.0, %v1786
      %1788 = vmatmul.f32.gmra.mxu0 %v1683
      %v1789 = vpop.f32.mrf.mxu0
      %v1790 = vadd.f32 0.0, %v1789
      %1791 = vmatmul.f32.gmra.mxu0 %v1684
      %v1792 = vpop.f32.mrf.mxu0
      %v1793 = vadd.f32 0.0, %v1792
      %1794 = vmatmul.f32.gmra.mxu0 %v1685
      %v1795 = vpop.f32.mrf.mxu0
      %v1796 = vadd.f32 0.0, %v1795
      %1797 = vmatmul.f32.gmra.mxu0 %v1686
      %v1798 = vpop.f32.mrf.mxu0
      %v1799 = vadd.f32 0.0, %v1798
      %1800 = vmatmul.f32.gmra.mxu0 %v1687
      %v1801 = vpop.f32.mrf.mxu0
      %v1802 = vadd.f32 0.0, %v1801
      %1803 = vmatmul.f32.gmra.mxu0 %v1688
      %v1804 = vpop.f32.mrf.mxu0
      %v1805 = vadd.f32 0.0, %v1804
      %1806 = vmatmul.f32.gmra.mxu0 %v1689
      %v1807 = vpop.f32.mrf.mxu0
      %v1808 = vadd.f32 0.0, %v1807
      %1809 = vmatmul.f32.gmra.mxu0 %v1690
      %v1810 = vpop.f32.mrf.mxu0
      %v1811 = vadd.f32 0.0, %v1810
      %1812 = vmatmul.f32.gmra.mxu0 %v1691
      %v1813 = vpop.f32.mrf.mxu0
      %v1814 = vadd.f32 0.0, %v1813
      %1815 = vmatmul.f32.gmra.mxu0 %v1692
      %v1816 = vpop.f32.mrf.mxu0
      %v1817 = vadd.f32 0.0, %v1816
      %1818 = vmatmul.f32.gmra.mxu0 %v1693
      %v1819 = vpop.f32.mrf.mxu0
      %v1820 = vadd.f32 0.0, %v1819
      %1821 = vmatmul.f32.gmra.mxu0 %v1694
      %v1822 = vpop.f32.mrf.mxu0
      %v1823 = vadd.f32 0.0, %v1822
      %1824 = vdwg.mxu0
      %v1825 = vadd.f32 %v1631, %v1730
      %v1826 = vadd.f32 %v1632, %v1733
      %v1827 = vadd.f32 %v1633, %v1736
      %v1828 = vadd.f32 %v1634, %v1739
      %v1829 = vadd.f32 %v1635, %v1742
      %v1830 = vadd.f32 %v1636, %v1745
      %v1831 = vadd.f32 %v1637, %v1748
      %v1832 = vadd.f32 %v1638, %v1751
      %v1833 = vadd.f32 %v1639, %v1754
      %v1834 = vadd.f32 %v1640, %v1757
      %v1835 = vadd.f32 %v1641, %v1760
      %v1836 = vadd.f32 %v1642, %v1763
      %v1837 = vadd.f32 %v1643, %v1766
      %v1838 = vadd.f32 %v1644, %v1769
      %v1839 = vadd.f32 %v1645, %v1772
      %v1840 = vadd.f32 %v1646, %v1775
      %v1841 = vadd.f32 %v1647, %v1778
      %v1842 = vadd.f32 %v1648, %v1781
      %v1843 = vadd.f32 %v1649, %v1784
      %v1844 = vadd.f32 %v1650, %v1787
      %v1845 = vadd.f32 %v1651, %v1790
      %v1846 = vadd.f32 %v1652, %v1793
      %v1847 = vadd.f32 %v1653, %v1796
      %v1848 = vadd.f32 %v1654, %v1799
      %v1849 = vadd.f32 %v1655, %v1802
      %v1850 = vadd.f32 %v1656, %v1805
      %v1851 = vadd.f32 %v1657, %v1808
      %v1852 = vadd.f32 %v1658, %v1811
      %v1853 = vadd.f32 %v1659, %v1814
      %v1854 = vadd.f32 %v1660, %v1817
      %v1855 = vadd.f32 %v1661, %v1820
      %v1856 = vadd.f32 %v1662, %v1823
      %1857 = vst [vmem:[%s168] sm:$0xff] %v1825
      %1858 = vst [vmem:[%s168 + $0x8] sm:$0xff] %v1826
      %1859 = vst [vmem:[%s168 + $0x10] sm:$0xff] %v1827
      %1860 = vst [vmem:[%s168 + $0x18] sm:$0xff] %v1828
      %1861 = vst [vmem:[%s168 + $0x20] sm:$0xff] %v1829
      %1862 = vst [vmem:[%s168 + $0x28] sm:$0xff] %v1830
      %1863 = vst [vmem:[%s168 + $0x30] sm:$0xff] %v1831
      %1864 = vst [vmem:[%s168 + $0x38] sm:$0xff] %v1832
      %1865 = vst [vmem:[%s168 + $0x40] sm:$0xff] %v1833
      %1866 = vst [vmem:[%s168 + $0x48] sm:$0xff] %v1834
      %1867 = vst [vmem:[%s168 + $0x50] sm:$0xff] %v1835
      %1868 = vst [vmem:[%s168 + $0x58] sm:$0xff] %v1836
      %1869 = vst [vmem:[%s168 + $0x60] sm:$0xff] %v1837
      %1870 = vst [vmem:[%s168 + $0x68] sm:$0xff] %v1838
      %1871 = vst [vmem:[%s168 + $0x70] sm:$0xff] %v1839
      %1872 = vst [vmem:[%s168 + $0x78] sm:$0xff] %v1840
      %1873 = vst [vmem:[%s168 + $0x80] sm:$0xff] %v1841
      %1874 = vst [vmem:[%s168 + $0x88] sm:$0xff] %v1842
      %1875 = vst [vmem:[%s168 + $0x90] sm:$0xff] %v1843
      %1876 = vst [vmem:[%s168 + $0x98] sm:$0xff] %v1844
      %1877 = vst [vmem:[%s168 + $0xa0] sm:$0xff] %v1845
      %1878 = vst [vmem:[%s168 + $0xa8] sm:$0xff] %v1846
      %1879 = vst [vmem:[%s168 + $0xb0] sm:$0xff] %v1847
      %1880 = vst [vmem:[%s168 + $0xb8] sm:$0xff] %v1848
      %1881 = vst [vmem:[%s168 + $0xc0] sm:$0xff] %v1849
      %1882 = vst [vmem:[%s168 + $0xc8] sm:$0xff] %v1850
      %1883 = vst [vmem:[%s168 + $0xd0] sm:$0xff] %v1851
      %1884 = vst [vmem:[%s168 + $0xd8] sm:$0xff] %v1852
      %1885 = vst [vmem:[%s168 + $0xe0] sm:$0xff] %v1853
      %1886 = vst [vmem:[%s168 + $0xe8] sm:$0xff] %v1854
      %1887 = vst [vmem:[%s168 + $0xf0] sm:$0xff] %v1855
      %1888 = vst [vmem:[%s168 + $0xf8] sm:$0xff] %v1856
      %v1889 = vld [vmem:[%s3] sm:$0x1]
      %v1890 = vadd.f32 %v1825, %v1826
      %v1891 = vadd.f32 %v1890, %v1827
      %v1892 = vadd.f32 %v1891, %v1828
      %v1893 = vadd.f32 %v1892, %v1829
      %v1894 = vadd.f32 %v1893, %v1830
      %v1895 = vadd.f32 %v1894, %v1831
      %v1896 = vadd.f32 %v1895, %v1832
      %v1897 = vadd.f32 %v1896, %v1833
      %v1898 = vadd.f32 %v1897, %v1834
      %v1899 = vadd.f32 %v1898, %v1835
      %v1900 = vadd.f32 %v1899, %v1836
      %v1901 = vadd.f32 %v1900, %v1837
      %v1902 = vadd.f32 %v1901, %v1838
      %v1903 = vadd.f32 %v1902, %v1839
      %v1904 = vadd.f32 %v1903, %v1840
      %v1905 = vadd.f32 %v1904, %v1841
      %v1906 = vadd.f32 %v1905, %v1842
      %v1907 = vadd.f32 %v1906, %v1843
      %v1908 = vadd.f32 %v1907, %v1844
      %v1909 = vadd.f32 %v1908, %v1845
      %v1910 = vadd.f32 %v1909, %v1846
      %v1911 = vadd.f32 %v1910, %v1847
      %v1912 = vadd.f32 %v1911, %v1848
      %v1913 = vadd.f32 %v1912, %v1849
      %v1914 = vadd.f32 %v1913, %v1850
      %v1915 = vadd.f32 %v1914, %v1851
      %v1916 = vadd.f32 %v1915, %v1852
      %v1917 = vadd.f32 %v1916, %v1853
      %v1918 = vadd.f32 %v1917, %v1854
      %v1919 = vadd.f32 %v1918, %v1855
      %v1920 = vadd.f32 %v1919, %v1856
      %v1921 = vrot.slane %v1920, 4
      %v1922 = vadd.f32 %v1920, %v1921
      %v1923 = vrot.slane %v1922, 2
      %v1924 = vadd.f32 %v1922, %v1923
      %v1925 = vrot.slane %v1924, 1
      %v1926 = vadd.f32 %v1924, %v1925
      %v1927 = vadd.f32 %v1889, %v1926
      %1928 = vst [vmem:[%s3] sm:$0x1] %v1927
      %v1929 = vld [vmem:[%s3 + $0x1] sm:$0x1]
      %v1930 = vmul.f32 %v1825, %v1825
      %v1931 = vmul.f32 %v1826, %v1826
      %v1932 = vmul.f32 %v1827, %v1827
      %v1933 = vmul.f32 %v1828, %v1828
      %v1934 = vmul.f32 %v1829, %v1829
      %v1935 = vmul.f32 %v1830, %v1830
      %v1936 = vmul.f32 %v1831, %v1831
      %v1937 = vmul.f32 %v1832, %v1832
      %v1938 = vmul.f32 %v1833, %v1833
      %v1939 = vmul.f32 %v1834, %v1834
      %v1940 = vmul.f32 %v1835, %v1835
      %v1941 = vmul.f32 %v1836, %v1836
      %v1942 = vmul.f32 %v1837, %v1837
      %v1943 = vmul.f32 %v1838, %v1838
      %v1944 = vmul.f32 %v1839, %v1839
      %v1945 = vmul.f32 %v1840, %v1840
      %v1946 = vmul.f32 %v1841, %v1841
      %v1947 = vmul.f32 %v1842, %v1842
      %v1948 = vmul.f32 %v1843, %v1843
      %v1949 = vmul.f32 %v1844, %v1844
      %v1950 = vmul.f32 %v1845, %v1845
      %v1951 = vmul.f32 %v1846, %v1846
      %v1952 = vmul.f32 %v1847, %v1847
      %v1953 = vmul.f32 %v1848, %v1848
      %v1954 = vmul.f32 %v1849, %v1849
      %v1955 = vmul.f32 %v1850, %v1850
      %v1956 = vmul.f32 %v1851, %v1851
      %v1957 = vmul.f32 %v1852, %v1852
      %v1958 = vmul.f32 %v1853, %v1853
      %v1959 = vmul.f32 %v1854, %v1854
      %v1960 = vmul.f32 %v1855, %v1855
      %v1961 = vmul.f32 %v1856, %v1856
      %v1962 = vadd.f32 %v1930, %v1931
      %v1963 = vadd.f32 %v1962, %v1932
      %v1964 = vadd.f32 %v1963, %v1933
      %v1965 = vadd.f32 %v1964, %v1934
      %v1966 = vadd.f32 %v1965, %v1935
      %v1967 = vadd.f32 %v1966, %v1936
      %v1968 = vadd.f32 %v1967, %v1937
      %v1969 = vadd.f32 %v1968, %v1938
      %v1970 = vadd.f32 %v1969, %v1939
      %v1971 = vadd.f32 %v1970, %v1940
      %v1972 = vadd.f32 %v1971, %v1941
      %v1973 = vadd.f32 %v1972, %v1942
      %v1974 = vadd.f32 %v1973, %v1943
      %v1975 = vadd.f32 %v1974, %v1944
      %v1976 = vadd.f32 %v1975, %v1945
      %v1977 = vadd.f32 %v1976, %v1946
      %v1978 = vadd.f32 %v1977, %v1947
      %v1979 = vadd.f32 %v1978, %v1948
      %v1980 = vadd.f32 %v1979, %v1949
      %v1981 = vadd.f32 %v1980, %v1950
      %v1982 = vadd.f32 %v1981, %v1951
      %v1983 = vadd.f32 %v1982, %v1952
      %v1984 = vadd.f32 %v1983, %v1953
      %v1985 = vadd.f32 %v1984, %v1954
      %v1986 = vadd.f32 %v1985, %v1955
      %v1987 = vadd.f32 %v1986, %v1956
      %v1988 = vadd.f32 %v1987, %v1957
      %v1989 = vadd.f32 %v1988, %v1958
      %v1990 = vadd.f32 %v1989, %v1959
      %v1991 = vadd.f32 %v1990, %v1960
      %v1992 = vadd.f32 %v1991, %v1961
      %v1993 = vrot.slane %v1992, 4
      %v1994 = vadd.f32 %v1992, %v1993
      %v1995 = vrot.slane %v1994, 2
      %v1996 = vadd.f32 %v1994, %v1995
      %v1997 = vrot.slane %v1996, 1
      %v1998 = vadd.f32 %v1996, %v1997
      %v1999 = vadd.f32 %v1929, %v1998
      %2000 = vst [vmem:[%s3 + $0x1] sm:$0x1] %v1999
      %p2001 = scmp.lt.s32.totalorder %s15, 1
      %s2002 = scalar_select %p2001, %s15, 1
      %s2003 = smul.addr %s2002, 32
      %s2004 = smul.addr %s2003, 8
      %s2005 = scalar_lea.vmem %s2, %s2004
      // Predicated region
      $region33: #{resnet_block.3} parent=27 // pred_check
        %p2006 = pneg %p80
      $region34: #{resnet_block.3} parent=27 // pred_check_branch
        %2008 = sbr.rel (%p2006) target = $region36
      $region35: #{resnet_block.3} parent=27 // pred_region
        _
      $region36: #{resnet_block.3} parent=27 // pred_fallthru
        _
      // Predicated region
      $region37: #{resnet_block.3} parent=27 // pred_check
        %p2009 = pneg %p101
      $region38: #{resnet_block.3} parent=27 // pred_check_branch
        %2011 = sbr.rel (%p2009) target = $region40
      $region39: #{resnet_block.3} parent=27 // pred_region
        _
      $region40: #{resnet_block.3} parent=27 // pred_fallthru
        _
      // Predicated region
      $region41: #{resnet_block.3} parent=27 // pred_check
        %p2012 = pneg %p101
      $region42: #{resnet_block.3} parent=27 // pred_check_branch
        %2014 = sbr.rel (%p2012) target = $region44
      $region43: #{resnet_block.3} parent=27 // pred_region
        _
      $region44: #{resnet_block.3} parent=27 // pred_fallthru
        _
    $region28: #{resnet_block.3} parent=5 // pred_fallthru
      _
    %p2015 = scmp.le.s32.totalorder 2, %s10
    // Predicated region
    $region45: #{resnet_block.3} parent=5 // pred_check
      %p2016 = pneg %p2015
    $region46: #{resnet_block.3} parent=5 // pred_check_branch
      %2018 = sbr.rel (%p2016) target = $region48
    $region47: #{resnet_block.3} parent=5 // pred_region
      %s2019 = ssub.s32 %s10, 2
      // Predicated region
      $region49: #{resnet_block.3} parent=47 // pred_check
        %p2020 = pneg %p86
      $region50: #{resnet_block.3} parent=47 // pred_check_branch
        %2022 = sbr.rel (%p2020) target = $region52
      $region51: #{resnet_block.3} parent=47 // pred_region
        %p2023 = scmp.lt.s32.totalorder %s16, 1
        %s2024 = scalar_select %p2023, %s16, 1
        %s2025 = smul.addr %s2024, 32
        %s2026 = smul.addr %s2025, 8
        %s2027 = scalar_lea.vmem %s2, %s2026
      $region52: #{resnet_block.3} parent=47 // pred_fallthru
        _
    $region48: #{resnet_block.3} parent=5 // pred_fallthru
      _
  $region6: #{resnet_block.3} parent=0 // loop_footer
    %s14 = sadd.s32 1, %s10
  $region7: #{resnet_block.3} parent=0 // loop_footer_branch
    %9 = sbr.rel target = $region3
  $region8: #{resnet_block.3} parent=0 // loop_exit
    _

// kernel: resnet_block.4
$region0: #{resnet_block.4}
  #allocation0 [shape = 'u32[]', space=smem, size = 0x4, offset = 0x4, fixed_abs, tag = 'smem constant byte address 0x4 - core index']
  #allocation1 [shape = 'u32[72,128]{1,0:T(1,128)}', space=vmem, size = 0x9000, scoped, tag = 'internal scratch']
  #allocation2 [shape = 'f32[18,18,128]{2,1,0:T(8,128)}', space=vmem, size = 0x36000, scoped, tag = 'scratch operand']
  %s0 = inlined_call_operand.vmem [shape: f32[2,16,16,128], index: 0, kind: input, shape index: {}]
  %s1 = inlined_call_operand.vmem [shape: f32[2,128], index: 1, kind: input, shape index: {}]
  %s2 = inlined_call_operand.vmem [shape: f32[1,128], index: 2, kind: input, shape index: {}]
  %s3 = inlined_call_operand.vmem [shape: f32[1,128], index: 3, kind: input, shape index: {}]
  %s4 = inlined_call_operand.vmem [shape: f32[9,128,128], index: 4, kind: input, shape index: {}]
  %s5 = inlined_call_operand.vmem [shape: f32[2,16,16,128], index: 5, kind: output, shape index: {0}]
  %s6 = inlined_call_operand.vmem [shape: f32[2,128], index: 6, kind: output, shape index: {1}]
  %7 = xla_tuple %s5, %s6
  %s8 = sld [smem:[#allocation0]]
  $region65: #{resnet_block.4} parent=0
    _
  %s10 = ssub.s32 1, %s8
  %s11 = scalar_select 0, %s10, %s8
  loop: start=0, step=1, limit=4
  $region2: #{resnet_block.4} parent=0 // loop_pre_header
    _
  $region3: #{resnet_block.4} parent=0 // loop_header
    %s13 = sphi 0, %s17
    %p14 = scmp.ge.s32.totalorder %s13, 4
    %s23 = sphi 0, %s25
    %s26 = sphi 0, %s23
    %s27 = sphi 0, %s26
    %s43 = sphi 0, %s27
    %s47 = sphi 0, %s47
    %s49 = sphi 0, %s47
    %s50 = sphi 0, %s49
    %s64 = sphi 0, %s50
    %s68 = sphi 0, %s68
    %s70 = sphi 0, %s68
    %s71 = sphi 0, %s70
    %s85 = sphi 0, %s71
    %s89 = sphi 0, %s89
    %s91 = sphi 0, %s89
    %s92 = sphi 0, %s91
    %s106 = sphi 0, %s92
    %s110 = sphi 0, %s110
    %s112 = sphi 0, %s110
    %s113 = sphi 0, %s112
    %s127 = sphi 0, %s113
    %s133 = sphi 0, %s135
    %s136 = sphi 0, %s133
    %s137 = sphi 0, %s136
    %s153 = sphi 0, %s137
    %s157 = sphi 0, %s157
    %s159 = sphi 0, %s157
    %s160 = sphi 0, %s159
    %s174 = sphi 0, %s160
  $region4: #{resnet_block.4} parent=0 // loop_header_branch
    %16 = sbr.rel (%p14) target = $region8
  $region5: #{resnet_block.4} parent=0 // loop_body
    %s18 = ssub.s32 %s13, 1
    %s19 = ssub.s32 %s13, 2
    %s20 = sadd.s32 %s13, 1
    %s21 = ssub.s32 %s13, %s20
    %p22 = scmp.eq.s32.totalorder %s21, 0
    %s24 = sadd.s32 %s23, 1
    %s25 = scalar_select %p22, %s23, %s24
    %p28 = pneg %p22
    %p29 = scmp.eq.s32.totalorder %s13, 1
    %p30 = por %p28, %p29
    %p31 = scmp.ne.s32.totalorder %s23, %s26
    %p32 = scmp.eq.s32.totalorder %s13, 0
    %p33 = por %p31, %p32
    %p34 = scmp.ne.s32.totalorder %s23, %s26
    %p35 = scmp.eq.s32.totalorder %s18, 1
    %p36 = por %p34, %p35
    %p37 = scmp.ne.s32.totalorder %s26, %s27
    %p38 = scmp.eq.s32.totalorder %s18, 0
    %p39 = por %p37, %p38
    %p40 = scmp.ne.s32.totalorder %s26, %s27
    %p41 = scmp.eq.s32.totalorder %s19, 1
    %p42 = por %p40, %p41
    %p44 = scmp.ne.s32.totalorder %s27, %s43
    %p45 = scmp.eq.s32.totalorder %s19, 0
    %p46 = por %p44, %p45
    %s48 = sadd.s32 %s47, 1
    %p51 = scmp.eq.s32.totalorder %s13, 1
    %p52 = scmp.ne.s32.totalorder %s47, %s49
    %p53 = scmp.eq.s32.totalorder %s13, 0
    %p54 = por %p52, %p53
    %p55 = scmp.ne.s32.totalorder %s47, %s49
    %p56 = scmp.eq.s32.totalorder %s18, 1
    %p57 = por %p55, %p56
    %p58 = scmp.ne.s32.totalorder %s49, %s50
    %p59 = scmp.eq.s32.totalorder %s18, 0
    %p60 = por %p58, %p59
    %p61 = scmp.ne.s32.totalorder %s49, %s50
    %p62 = scmp.eq.s32.totalorder %s19, 1
    %p63 = por %p61, %p62
    %p65 = scmp.ne.s32.totalorder %s50, %s64
    %p66 = scmp.eq.s32.totalorder %s19, 0
    %p67 = por %p65, %p66
    %s69 = sadd.s32 %s68, 1
    %p72 = scmp.eq.s32.totalorder %s13, 1
    %p73 = scmp.ne.s32.totalorder %s68, %s70
    %p74 = scmp.eq.s32.totalorder %s13, 0
    %p75 = por %p73, %p74
    %p76 = scmp.ne.s32.totalorder %s68, %s70
    %p77 = scmp.eq.s32.totalorder %s18, 1
    %p78 = por %p76, %p77
    %p79 = scmp.ne.s32.totalorder %s70, %s71
    %p80 = scmp.eq.s32.totalorder %s18, 0
    %p81 = por %p79, %p80
    %p82 = scmp.ne.s32.totalorder %s70, %s71
    %p83 = scmp.eq.s32.totalorder %s19, 1
    %p84 = por %p82, %p83
    %p86 = scmp.ne.s32.totalorder %s71, %s85
    %p87 = scmp.eq.s32.totalorder %s19, 0
    %p88 = por %p86, %p87
    %s90 = sadd.s32 %s89, 1
    %p93 = scmp.eq.s32.totalorder %s13, 1
    %p94 = scmp.ne.s32.totalorder %s89, %s91
    %p95 = scmp.eq.s32.totalorder %s13, 0
    %p96 = por %p94, %p95
    %p97 = scmp.ne.s32.totalorder %s89, %s91
    %p98 = scmp.eq.s32.totalorder %s18, 1
    %p99 = por %p97, %p98
    %p100 = scmp.ne.s32.totalorder %s91, %s92
    %p101 = scmp.eq.s32.totalorder %s18, 0
    %p102 = por %p100, %p101
    %p103 = scmp.ne.s32.totalorder %s91, %s92
    %p104 = scmp.eq.s32.totalorder %s19, 1
    %p105 = por %p103, %p104
    %p107 = scmp.ne.s32.totalorder %s92, %s106
    %p108 = scmp.eq.s32.totalorder %s19, 0
    %p109 = por %p107, %p108
    %s111 = sadd.s32 %s110, 1
    %p114 = scmp.eq.s32.totalorder %s13, 1
    %p115 = scmp.ne.s32.totalorder %s110, %s112
    %p116 = scmp.eq.s32.totalorder %s13, 0
    %p117 = por %p115, %p116
    %p118 = scmp.ne.s32.totalorder %s110, %s112
    %p119 = scmp.eq.s32.totalorder %s18, 1
    %p120 = por %p118, %p119
    %p121 = scmp.ne.s32.totalorder %s112, %s113
    %p122 = scmp.eq.s32.totalorder %s18, 0
    %p123 = por %p121, %p122
    %p124 = scmp.ne.s32.totalorder %s112, %s113
    %p125 = scmp.eq.s32.totalorder %s19, 1
    %p126 = por %p124, %p125
    %p128 = scmp.ne.s32.totalorder %s113, %s127
    %p129 = scmp.eq.s32.totalorder %s19, 0
    %p130 = por %p128, %p129
    %s131 = ssub.s32 %s13, %s20
    %p132 = scmp.eq.s32.totalorder %s131, 0
    %s134 = sadd.s32 %s133, 1
    %s135 = scalar_select %p132, %s133, %s134
    %p138 = pneg %p132
    %p139 = scmp.eq.s32.totalorder %s13, 1
    %p140 = por %p138, %p139
    %p141 = scmp.ne.s32.totalorder %s133, %s136
    %p142 = scmp.eq.s32.totalorder %s13, 0
    %p143 = por %p141, %p142
    %p144 = scmp.ne.s32.totalorder %s133, %s136
    %p145 = scmp.eq.s32.totalorder %s18, 1
    %p146 = por %p144, %p145
    %p147 = scmp.ne.s32.totalorder %s136, %s137
    %p148 = scmp.eq.s32.totalorder %s18, 0
    %p149 = por %p147, %p148
    %p150 = scmp.ne.s32.totalorder %s136, %s137
    %p151 = scmp.eq.s32.totalorder %s19, 1
    %p152 = por %p150, %p151
    %p154 = scmp.ne.s32.totalorder %s137, %s153
    %p155 = scmp.eq.s32.totalorder %s19, 0
    %p156 = por %p154, %p155
    %s158 = sadd.s32 %s157, 1
    %p161 = scmp.eq.s32.totalorder %s13, 1
    %p162 = scmp.ne.s32.totalorder %s157, %s159
    %p163 = scmp.eq.s32.totalorder %s13, 0
    %p164 = por %p162, %p163
    %p165 = scmp.ne.s32.totalorder %s157, %s159
    %p166 = scmp.eq.s32.totalorder %s18, 1
    %p167 = por %p165, %p166
    %p168 = scmp.ne.s32.totalorder %s159, %s160
    %p169 = scmp.eq.s32.totalorder %s18, 0
    %p170 = por %p168, %p169
    %p171 = scmp.ne.s32.totalorder %s159, %s160
    %p172 = scmp.eq.s32.totalorder %s19, 1
    %p173 = por %p171, %p172
    %p175 = scmp.ne.s32.totalorder %s160, %s174
    %p176 = scmp.eq.s32.totalorder %s19, 0
    %p177 = por %p175, %p176
    %p178 = scmp.le.s32.totalorder 1, %s13
    %p179 = scmp.lt.s32.totalorder %s13, 3
    %p180 = pnand %p178, %p179
    %p181 = pneg %p180
    // Predicated region
    $region9: #{resnet_block.4} parent=5 // pred_check
      _
    $region10: #{resnet_block.4} parent=5 // pred_check_branch
      %183 = sbr.rel (%p180) target = $region12
    $region11: #{resnet_block.4} parent=5 // pred_region
      %s184 = ssub.s32 %s13, 1
      // Predicated region
      $region13: #{resnet_block.4} parent=11 // pred_check
        %p185 = pneg %p60
      $region14: #{resnet_block.4} parent=11 // pred_check_branch
        %187 = sbr.rel (%p185) target = $region16
      $region15: #{resnet_block.4} parent=11 // pred_region
        _
      $region16: #{resnet_block.4} parent=11 // pred_fallthru
        _
      // Predicated region
      $region17: #{resnet_block.4} parent=11 // pred_check
        %p188 = pneg %p81
      $region18: #{resnet_block.4} parent=11 // pred_check_branch
        %190 = sbr.rel (%p188) target = $region20
      $region19: #{resnet_block.4} parent=11 // pred_region
        _
      $region20: #{resnet_block.4} parent=11 // pred_fallthru
        _
      // Predicated region
      $region21: #{resnet_block.4} parent=11 // pred_check
        %p191 = pneg %p102
      $region22: #{resnet_block.4} parent=11 // pred_check_branch
        %193 = sbr.rel (%p191) target = $region24
      $region23: #{resnet_block.4} parent=11 // pred_region
        _
      $region24: #{resnet_block.4} parent=11 // pred_fallthru
        _
      // Predicated region
      $region25: #{resnet_block.4} parent=11 // pred_check
        %p194 = pneg %p123
      $region26: #{resnet_block.4} parent=11 // pred_check_branch
        %196 = sbr.rel (%p194) target = $region28
      $region27: #{resnet_block.4} parent=11 // pred_region
        _
      $region28: #{resnet_block.4} parent=11 // pred_fallthru
        _
    $region12: #{resnet_block.4} parent=5 // pred_fallthru
      _
    %p197 = scmp.lt.s32.totalorder %s13, 2
    // Predicated region
    $region29: #{resnet_block.4} parent=5 // pred_check
      %p198 = pneg %p197
    $region30: #{resnet_block.4} parent=5 // pred_check_branch
      %200 = sbr.rel (%p198) target = $region32
    $region31: #{resnet_block.4} parent=5 // pred_region
      // Predicated region
      $region33: #{resnet_block.4} parent=31 // pred_check
        %p201 = pneg %p33
      $region34: #{resnet_block.4} parent=31 // pred_check_branch
        %203 = sbr.rel (%p201) target = $region36
      $region35: #{resnet_block.4} parent=31 // pred_region
        %p204 = scmp.lt.s32.totalorder %s13, 1
        %s205 = scalar_select %p204, %s13, 1
        %s206 = smul.addr %s205, 32
        %s207 = smul.addr %s206, 8
        %s208 = scalar_lea.vmem %s0, %s207
      $region36: #{resnet_block.4} parent=31 // pred_fallthru
        _
    $region32: #{resnet_block.4} parent=5 // pred_fallthru
      _
    %p209 = scmp.le.s32.totalorder 1, %s13
    %p210 = scmp.lt.s32.totalorder %s13, 3
    %p211 = pnand %p209, %p210
    %p212 = pneg %p211
    // Predicated region
    $region37: #{resnet_block.4} parent=5 // pred_check
      _
    $region38: #{resnet_block.4} parent=5 // pred_check_branch
      %214 = sbr.rel (%p211) target = $region40
    $region39: #{resnet_block.4} parent=5 // pred_region
      %s215 = ssub.s32 %s13, 1
      %p216 = scmp.lt.s32.totalorder %s18, 1
      %s217 = scalar_select %p216, %s18, 1
      %s218 = smul.addr %s217, 32
      %s219 = smul.addr %s218, 8
      %s220 = scalar_lea.vmem %s0, %s219
      %p221 = pneg %p39
      %p222 = pneg %p36
      %p223 = pneg %p60
      %p224 = pneg %p57
      %p225 = pneg %p81
      %p226 = pneg %p78
      %p227 = pneg %p102
      %p228 = pneg %p99
      %p229 = pneg %p123
      %p230 = pneg %p120
      %p231 = pneg %p149
      %p232 = pneg %p146
      %p233 = scmp.lt.s32.totalorder %s18, 1
      %s234 = scalar_select %p233, %s18, 1
      %s235 = smul.addr %s234, 32
      %s236 = smul.addr %s235, 8
      %s237 = scalar_lea.vmem %s5, %s236
      %p238 = pneg %p170
      %p239 = pneg %p167
      %p240 = scmp.lt.s32.totalorder %s18, 1
      %s241 = scalar_select %p240, %s18, 1
      %s242 = smul.addr %s241, 32
      %s243 = smul.addr %s242, 8
      %s244 = scalar_lea.vmem %s0, %s243
      %p245 = scmp.lt.s32.totalorder %s18, 1
      %s246 = scalar_select %p245, %s18, 1
      %s247 = smul.addr %s246, 32
      %s248 = smul.addr %s247, 8
      %s249 = scalar_lea.vmem %s5, %s248
      %p250 = scmp.eq.s32.totalorder %s18, 0
      // Predicated region
      $region41: #{resnet_block.4} parent=39 // pred_check
        %p251 = pneg %p250
      $region42: #{resnet_block.4} parent=39 // pred_check_branch
        %253 = sbr.rel (%p251) target = $region44
      $region43: #{resnet_block.4} parent=39 // pred_region
        %254 = vst [vmem:[%s6] sm:$0x3] 0.0
        %255 = vst [vmem:[#allocation2] sm:$0xff] 0.0
        %256 = vst [vmem:[#allocation2 + $0x8] sm:$0xff] 0.0
        %257 = vst [vmem:[#allocation2 + $0x10] sm:$0x3] 0.0
        %258 = vst [vmem:[#allocation2 + $0x18] sm:$0xff] 0.0
        %259 = vst [vmem:[#allocation2 + $0x20] sm:$0xff] 0.0
        %260 = vst [vmem:[#allocation2 + $0x28] sm:$0x3] 0.0
        %261 = vst [vmem:[#allocation2 + $0x30] sm:$0xff] 0.0
        %262 = vst [vmem:[#allocation2 + $0x38] sm:$0xff] 0.0
        %263 = vst [vmem:[#allocation2 + $0x40] sm:$0x3] 0.0
        %264 = vst [vmem:[#allocation2 + $0x48] sm:$0xff] 0.0
        %265 = vst [vmem:[#allocation2 + $0x50] sm:$0xff] 0.0
        %266 = vst [vmem:[#allocation2 + $0x58] sm:$0x3] 0.0
        %267 = vst [vmem:[#allocation2 + $0x60] sm:$0xff] 0.0
        %268 = vst [vmem:[#allocation2 + $0x68] sm:$0xff] 0.0
        %269 = vst [vmem:[#allocation2 + $0x70] sm:$0x3] 0.0
        %270 = vst [vmem:[#allocation2 + $0x78] sm:$0xff] 0.0
        %271 = vst [vmem:[#allocation2 + $0x80] sm:$0xff] 0.0
        %272 = vst [vmem:[#allocation2 + $0x88] sm:$0x3] 0.0
        %273 = vst [vmem:[#allocation2 + $0x90] sm:$0xff] 0.0
        %274 = vst [vmem:[#allocation2 + $0x98] sm:$0xff] 0.0
        %275 = vst [vmem:[#allocation2 + $0xa0] sm:$0x3] 0.0
        %276 = vst [vmem:[#allocation2 + $0xa8] sm:$0xff] 0.0
        %277 = vst [vmem:[#allocation2 + $0xb0] sm:$0xff] 0.0
        %278 = vst [vmem:[#allocation2 + $0xb8] sm:$0x3] 0.0
        %279 = vst [vmem:[#allocation2 + $0xc0] sm:$0xff] 0.0
        %280 = vst [vmem:[#allocation2 + $0xc8] sm:$0xff] 0.0
        %281 = vst [vmem:[#allocation2 + $0xd0] sm:$0x3] 0.0
        %282 = vst [vmem:[#allocation2 + $0xd8] sm:$0xff] 0.0
        %283 = vst [vmem:[#allocation2 + $0xe0] sm:$0xff] 0.0
        %284 = vst [vmem:[#allocation2 + $0xe8] sm:$0x3] 0.0
        %285 = vst [vmem:[#allocation2 + $0xf0] sm:$0xff] 0.0
        %286 = vst [vmem:[#allocation2 + $0xf8] sm:$0xff] 0.0
        %287 = vst [vmem:[#allocation2 + $0x100] sm:$0x3] 0.0
        %288 = vst [vmem:[#allocation2 + $0x108] sm:$0xff] 0.0
        %289 = vst [vmem:[#allocation2 + $0x110] sm:$0xff] 0.0
        %290 = vst [vmem:[#allocation2 + $0x118] sm:$0x3] 0.0
        %291 = vst [vmem:[#allocation2 + $0x120] sm:$0xff] 0.0
        %292 = vst [vmem:[#allocation2 + $0x128] sm:$0xff] 0.0
        %293 = vst [vmem:[#allocation2 + $0x130] sm:$0x3] 0.0
        %294 = vst [vmem:[#allocation2 + $0x138] sm:$0xff] 0.0
        %295 = vst [vmem:[#allocation2 + $0x140] sm:$0xff] 0.0
        %296 = vst [vmem:[#allocation2 + $0x148] sm:$0x3] 0.0
        %297 = vst [vmem:[#allocation2 + $0x150] sm:$0xff] 0.0
        %298 = vst [vmem:[#allocation2 + $0x158] sm:$0xff] 0.0
        %299 = vst [vmem:[#allocation2 + $0x160] sm:$0x3] 0.0
        %300 = vst [vmem:[#allocation2 + $0x168] sm:$0xff] 0.0
        %301 = vst [vmem:[#allocation2 + $0x170] sm:$0xff] 0.0
        %302 = vst [vmem:[#allocation2 + $0x178] sm:$0x3] 0.0
        %303 = vst [vmem:[#allocation2 + $0x180] sm:$0xff] 0.0
        %304 = vst [vmem:[#allocation2 + $0x188] sm:$0xff] 0.0
        %305 = vst [vmem:[#allocation2 + $0x190] sm:$0x3] 0.0
        %306 = vst [vmem:[#allocation2 + $0x198] sm:$0xff] 0.0
        %307 = vst [vmem:[#allocation2 + $0x1a0] sm:$0xff] 0.0
        %308 = vst [vmem:[#allocation2 + $0x1a8] sm:$0x3] 0.0
      $region44: #{resnet_block.4} parent=39 // pred_fallthru
        _
      %v309 = vld [vmem:[%s1] sm:$0x1]
      %v310 = vmul.f32 %v309, 0.001953125
      %v311 = vld [vmem:[%s1 + $0x1] sm:$0x1]
      %v312 = vmul.f32 %v311, 0.001953125
      %v313 = vmul.f32 %v310, %v310
      %v314 = vsub.f32 %v312, %v313
      %v315 = vadd.f32 %v314, 1e-05
      %v316 = vrsqrt.pop %v315
      %v317 = vmul.f32 %v316, %v315
      %v318 = vmul.f32 %v317, %v316
      %v319 = vmul.f32 0.5, %v318
      %v320 = vsub.f32 1.5, %v319
      %v321 = vmul.f32 %v316, %v320
      %vm322 = vweird.f32 %v315
      %vm323 = vweird.f32 %v316
      %vm324 = vmor %vm322, %vm323
      %v325 = vsel %vm324, %v316, %v321
      %v326 = vld [vmem:[%s2] sm:$0x1]
      %v327 = vmul.f32 %v325, %v326
      %v328 = vld [vmem:[%s3] sm:$0x1]
      %v329 = vmul.f32 %v310, %v327
      %v330 = vsub.f32 %v328, %v329
      %v331 = vld [vmem:[%s244] sm:$0xff]
      %v332 = vld [vmem:[%s244 + $0x8] sm:$0xff]
      %v333 = vld [vmem:[%s244 + $0x10] sm:$0xff]
      %v334 = vld [vmem:[%s244 + $0x18] sm:$0xff]
      %v335 = vld [vmem:[%s244 + $0x20] sm:$0xff]
      %v336 = vld [vmem:[%s244 + $0x28] sm:$0xff]
      %v337 = vld [vmem:[%s244 + $0x30] sm:$0xff]
      %v338 = vld [vmem:[%s244 + $0x38] sm:$0xff]
      %v339 = vld [vmem:[%s244 + $0x40] sm:$0xff]
      %v340 = vld [vmem:[%s244 + $0x48] sm:$0xff]
      %v341 = vld [vmem:[%s244 + $0x50] sm:$0xff]
      %v342 = vld [vmem:[%s244 + $0x58] sm:$0xff]
      %v343 = vld [vmem:[%s244 + $0x60] sm:$0xff]
      %v344 = vld [vmem:[%s244 + $0x68] sm:$0xff]
      %v345 = vld [vmem:[%s244 + $0x70] sm:$0xff]
      %v346 = vld [vmem:[%s244 + $0x78] sm:$0xff]
      %v347 = vld [vmem:[%s244 + $0x80] sm:$0xff]
      %v348 = vld [vmem:[%s244 + $0x88] sm:$0xff]
      %v349 = vld [vmem:[%s244 + $0x90] sm:$0xff]
      %v350 = vld [vmem:[%s244 + $0x98] sm:$0xff]
      %v351 = vld [vmem:[%s244 + $0xa0] sm:$0xff]
      %v352 = vld [vmem:[%s244 + $0xa8] sm:$0xff]
      %v353 = vld [vmem:[%s244 + $0xb0] sm:$0xff]
      %v354 = vld [vmem:[%s244 + $0xb8] sm:$0xff]
      %v355 = vld [vmem:[%s244 + $0xc0] sm:$0xff]
      %v356 = vld [vmem:[%s244 + $0xc8] sm:$0xff]
      %v357 = vld [vmem:[%s244 + $0xd0] sm:$0xff]
      %v358 = vld [vmem:[%s244 + $0xd8] sm:$0xff]
      %v359 = vld [vmem:[%s244 + $0xe0] sm:$0xff]
      %v360 = vld [vmem:[%s244 + $0xe8] sm:$0xff]
      %v361 = vld [vmem:[%s244 + $0xf0] sm:$0xff]
      %v362 = vld [vmem:[%s244 + $0xf8] sm:$0xff]
      %v363 = vperm.slane %v327, 0
      %v364 = vmul.f32 %v331, %v363
      %v365 = vmul.f32 %v332, %v363
      %v366 = vmul.f32 %v333, %v363
      %v367 = vmul.f32 %v334, %v363
      %v368 = vmul.f32 %v335, %v363
      %v369 = vmul.f32 %v336, %v363
      %v370 = vmul.f32 %v337, %v363
      %v371 = vmul.f32 %v338, %v363
      %v372 = vmul.f32 %v339, %v363
      %v373 = vmul.f32 %v340, %v363
      %v374 = vmul.f32 %v341, %v363
      %v375 = vmul.f32 %v342, %v363
      %v376 = vmul.f32 %v343, %v363
      %v377 = vmul.f32 %v344, %v363
      %v378 = vmul.f32 %v345, %v363
      %v379 = vmul.f32 %v346, %v363
      %v380 = vmul.f32 %v347, %v363
      %v381 = vmul.f32 %v348, %v363
      %v382 = vmul.f32 %v349, %v363
      %v383 = vmul.f32 %v350, %v363
      %v384 = vmul.f32 %v351, %v363
      %v385 = vmul.f32 %v352, %v363
      %v386 = vmul.f32 %v353, %v363
      %v387 = vmul.f32 %v354, %v363
      %v388 = vmul.f32 %v355, %v363
      %v389 = vmul.f32 %v356, %v363
      %v390 = vmul.f32 %v357, %v363
      %v391 = vmul.f32 %v358, %v363
      %v392 = vmul.f32 %v359, %v363
      %v393 = vmul.f32 %v360, %v363
      %v394 = vmul.f32 %v361, %v363
      %v395 = vmul.f32 %v362, %v363
      %v397 = vperm.slane %v330, 0
      %v399 = vadd.f32 %v364, %v397
      %v400 = vadd.f32 %v365, %v397
      %v401 = vadd.f32 %v366, %v397
      %v402 = vadd.f32 %v367, %v397
      %v403 = vadd.f32 %v368, %v397
      %v404 = vadd.f32 %v369, %v397
      %v405 = vadd.f32 %v370, %v397
      %v406 = vadd.f32 %v371, %v397
      %v407 = vadd.f32 %v372, %v397
      %v408 = vadd.f32 %v373, %v397
      %v409 = vadd.f32 %v374, %v397
      %v410 = vadd.f32 %v375, %v397
      %v411 = vadd.f32 %v376, %v397
      %v412 = vadd.f32 %v377, %v397
      %v413 = vadd.f32 %v378, %v397
      %v414 = vadd.f32 %v379, %v397
      %v415 = vadd.f32 %v380, %v397
      %v416 = vadd.f32 %v381, %v397
      %v417 = vadd.f32 %v382, %v397
      %v418 = vadd.f32 %v383, %v397
      %v419 = vadd.f32 %v384, %v397
      %v420 = vadd.f32 %v385, %v397
      %v421 = vadd.f32 %v386, %v397
      %v422 = vadd.f32 %v387, %v397
      %v423 = vadd.f32 %v388, %v397
      %v424 = vadd.f32 %v389, %v397
      %v425 = vadd.f32 %v390, %v397
      %v426 = vadd.f32 %v391, %v397
      %v427 = vadd.f32 %v392, %v397
      %v428 = vadd.f32 %v393, %v397
      %v429 = vadd.f32 %v394, %v397
      %v430 = vadd.f32 %v395, %v397
      %v431 = vmax.f32 %v399, 0.0
      %v432 = vmax.f32 %v400, 0.0
      %v433 = vmax.f32 %v401, 0.0
      %v434 = vmax.f32 %v402, 0.0
      %v435 = vmax.f32 %v403, 0.0
      %v436 = vmax.f32 %v404, 0.0
      %v437 = vmax.f32 %v405, 0.0
      %v438 = vmax.f32 %v406, 0.0
      %v439 = vmax.f32 %v407, 0.0
      %v440 = vmax.f32 %v408, 0.0
      %v441 = vmax.f32 %v409, 0.0
      %v442 = vmax.f32 %v410, 0.0
      %v443 = vmax.f32 %v411, 0.0
      %v444 = vmax.f32 %v412, 0.0
      %v445 = vmax.f32 %v413, 0.0
      %v446 = vmax.f32 %v414, 0.0
      %v447 = vmax.f32 %v415, 0.0
      %v448 = vmax.f32 %v416, 0.0
      %v449 = vmax.f32 %v417, 0.0
      %v450 = vmax.f32 %v418, 0.0
      %v451 = vmax.f32 %v419, 0.0
      %v452 = vmax.f32 %v420, 0.0
      %v453 = vmax.f32 %v421, 0.0
      %v454 = vmax.f32 %v422, 0.0
      %v455 = vmax.f32 %v423, 0.0
      %v456 = vmax.f32 %v424, 0.0
      %v457 = vmax.f32 %v425, 0.0
      %v458 = vmax.f32 %v426, 0.0
      %v459 = vmax.f32 %v427, 0.0
      %v460 = vmax.f32 %v428, 0.0
      %v461 = vmax.f32 %v429, 0.0
      %v462 = vmax.f32 %v430, 0.0
      %s463 = scalar_lea.vmem [#allocation2], 24
      %464 = vst [vmem:[%s463 + $0x1] sm:$0xff] %v431
      %465 = vst [vmem:[%s463 + $0x9] sm:$0xff] %v432
      %466 = vst [vmem:[%s463 + $0x19] sm:$0xff] %v433
      %467 = vst [vmem:[%s463 + $0x21] sm:$0xff] %v434
      %468 = vst [vmem:[%s463 + $0x31] sm:$0xff] %v435
      %469 = vst [vmem:[%s463 + $0x39] sm:$0xff] %v436
      %470 = vst [vmem:[%s463 + $0x49] sm:$0xff] %v437
      %471 = vst [vmem:[%s463 + $0x51] sm:$0xff] %v438
      %472 = vst [vmem:[%s463 + $0x61] sm:$0xff] %v439
      %473 = vst [vmem:[%s463 + $0x69] sm:$0xff] %v440
      %474 = vst [vmem:[%s463 + $0x79] sm:$0xff] %v441
      %475 = vst [vmem:[%s463 + $0x81] sm:$0xff] %v442
      %476 = vst [vmem:[%s463 + $0x91] sm:$0xff] %v443
      %477 = vst [vmem:[%s463 + $0x99] sm:$0xff] %v444
      %478 = vst [vmem:[%s463 + $0xa9] sm:$0xff] %v445
      %479 = vst [vmem:[%s463 + $0xb1] sm:$0xff] %v446
      %480 = vst [vmem:[%s463 + $0xc1] sm:$0xff] %v447
      %481 = vst [vmem:[%s463 + $0xc9] sm:$0xff] %v448
      %482 = vst [vmem:[%s463 + $0xd9] sm:$0xff] %v449
      %483 = vst [vmem:[%s463 + $0xe1] sm:$0xff] %v450
      %484 = vst [vmem:[%s463 + $0xf1] sm:$0xff] %v451
      %485 = vst [vmem:[%s463 + $0xf9] sm:$0xff] %v452
      %486 = vst [vmem:[%s463 + $0x109] sm:$0xff] %v453
      %487 = vst [vmem:[%s463 + $0x111] sm:$0xff] %v454
      %488 = vst [vmem:[%s463 + $0x121] sm:$0xff] %v455
      %489 = vst [vmem:[%s463 + $0x129] sm:$0xff] %v456
      %490 = vst [vmem:[%s463 + $0x139] sm:$0xff] %v457
      %491 = vst [vmem:[%s463 + $0x141] sm:$0xff] %v458
      %492 = vst [vmem:[%s463 + $0x151] sm:$0xff] %v459
      %493 = vst [vmem:[%s463 + $0x159] sm:$0xff] %v460
      %494 = vst [vmem:[%s463 + $0x169] sm:$0xff] %v461
      %495 = vst [vmem:[%s463 + $0x171] sm:$0xff] %v462
      %v496 = vld [vmem:[#allocation2] sm:$0xff]
      %v497 = vld [vmem:[#allocation2 + $0x8] sm:$0xff]
      %v498 = vld [vmem:[#allocation2 + $0x18] sm:$0xff]
      %v499 = vld [vmem:[#allocation2 + $0x20] sm:$0xff]
      %v500 = vld [vmem:[#allocation2 + $0x30] sm:$0xff]
      %v501 = vld [vmem:[#allocation2 + $0x38] sm:$0xff]
      %v502 = vld [vmem:[#allocation2 + $0x48] sm:$0xff]
      %v503 = vld [vmem:[#allocation2 + $0x50] sm:$0xff]
      %v504 = vld [vmem:[#allocation2 + $0x60] sm:$0xff]
      %v505 = vld [vmem:[#allocation2 + $0x68] sm:$0xff]
      %v506 = vld [vmem:[#allocation2 + $0x78] sm:$0xff]
      %v507 = vld [vmem:[#allocation2 + $0x80] sm:$0xff]
      %v508 = vld [vmem:[#allocation2 + $0x90] sm:$0xff]
      %v509 = vld [vmem:[#allocation2 + $0x98] sm:$0xff]
      %v510 = vld [vmem:[#allocation2 + $0xa8] sm:$0xff]
      %v511 = vld [vmem:[#allocation2 + $0xb0] sm:$0xff]
      %v512 = vld [vmem:[#allocation2 + $0xc0] sm:$0xff]
      %v513 = vld [vmem:[#allocation2 + $0xc8] sm:$0xff]
      %v514 = vld [vmem:[#allocation2 + $0xd8] sm:$0xff]
      %v515 = vld [vmem:[#allocation2 + $0xe0] sm:$0xff]
      %v516 = vld [vmem:[#allocation2 + $0xf0] sm:$0xff]
      %v517 = vld [vmem:[#allocation2 + $0xf8] sm:$0xff]
      %v518 = vld [vmem:[#allocation2 + $0x108] sm:$0xff]
      %v519 = vld [vmem:[#allocation2 + $0x110] sm:$0xff]
      %v520 = vld [vmem:[#allocation2 + $0x120] sm:$0xff]
      %v521 = vld [vmem:[#allocation2 + $0x128] sm:$0xff]
      %v522 = vld [vmem:[#allocation2 + $0x138] sm:$0xff]
      %v523 = vld [vmem:[#allocation2 + $0x140] sm:$0xff]
      %v524 = vld [vmem:[#allocation2 + $0x150] sm:$0xff]
      %v525 = vld [vmem:[#allocation2 + $0x158] sm:$0xff]
      %v526 = vld [vmem:[#allocation2 + $0x168] sm:$0xff]
      %v527 = vld [vmem:[#allocation2 + $0x170] sm:$0xff]
      %v528 = vld [vmem:[%s4] sm:$0xff]
      %v529 = vld [vmem:[%s4 + $0x8] sm:$0xff]
      %v530 = vld [vmem:[%s4 + $0x10] sm:$0xff]
      %v531 = vld [vmem:[%s4 + $0x18] sm:$0xff]
      %v532 = vld [vmem:[%s4 + $0x20] sm:$0xff]
      %v533 = vld [vmem:[%s4 + $0x28] sm:$0xff]
      %v534 = vld [vmem:[%s4 + $0x30] sm:$0xff]
      %v535 = vld [vmem:[%s4 + $0x38] sm:$0xff]
      %v536 = vld [vmem:[%s4 + $0x40] sm:$0xff]
      %v537 = vld [vmem:[%s4 + $0x48] sm:$0xff]
      %v538 = vld [vmem:[%s4 + $0x50] sm:$0xff]
      %v539 = vld [vmem:[%s4 + $0x58] sm:$0xff]
      %v540 = vld [vmem:[%s4 + $0x60] sm:$0xff]
      %v541 = vld [vmem:[%s4 + $0x68] sm:$0xff]
      %v542 = vld [vmem:[%s4 + $0x70] sm:$0xff]
      %v543 = vld [vmem:[%s4 + $0x78] sm:$0xff]
      %v544 = vld [vmem:[#allocation2 + $0x1] sm:$0xff]
      %v545 = vld [vmem:[#allocation2 + $0x9] sm:$0xff]
      %v546 = vld [vmem:[#allocation2 + $0x19] sm:$0xff]
      %v547 = vld [vmem:[#allocation2 + $0x21] sm:$0xff]
      %v548 = vld [vmem:[#allocation2 + $0x31] sm:$0xff]
      %v549 = vld [vmem:[#allocation2 + $0x39] sm:$0xff]
      %v550 = vld [vmem:[#allocation2 + $0x49] sm:$0xff]
      %v551 = vld [vmem:[#allocation2 + $0x51] sm:$0xff]
      %v552 = vld [vmem:[#allocation2 + $0x61] sm:$0xff]
      %v553 = vld [vmem:[#allocation2 + $0x69] sm:$0xff]
      %v554 = vld [vmem:[#allocation2 + $0x79] sm:$0xff]
      %v555 = vld [vmem:[#allocation2 + $0x81] sm:$0xff]
      %v556 = vld [vmem:[#allocation2 + $0x91] sm:$0xff]
      %v557 = vld [vmem:[#allocation2 + $0x99] sm:$0xff]
      %v558 = vld [vmem:[#allocation2 + $0xa9] sm:$0xff]
      %v559 = vld [vmem:[#allocation2 + $0xb1] sm:$0xff]
      %v560 = vld [vmem:[#allocation2 + $0xc1] sm:$0xff]
      %v561 = vld [vmem:[#allocation2 + $0xc9] sm:$0xff]
      %v562 = vld [vmem:[#allocation2 + $0xd9] sm:$0xff]
      %v563 = vld [vmem:[#allocation2 + $0xe1] sm:$0xff]
      %v564 = vld [vmem:[#allocation2 + $0xf1] sm:$0xff]
      %v565 = vld [vmem:[#allocation2 + $0xf9] sm:$0xff]
      %v566 = vld [vmem:[#allocation2 + $0x109] sm:$0xff]
      %v567 = vld [vmem:[#allocation2 + $0x111] sm:$0xff]
      %v568 = vld [vmem:[#allocation2 + $0x121] sm:$0xff]
      %v569 = vld [vmem:[#allocation2 + $0x129] sm:$0xff]
      %v570 = vld [vmem:[#allocation2 + $0x139] sm:$0xff]
      %v571 = vld [vmem:[#allocation2 + $0x141] sm:$0xff]
      %v572 = vld [vmem:[#allocation2 + $0x151] sm:$0xff]
      %v573 = vld [vmem:[#allocation2 + $0x159] sm:$0xff]
      %v574 = vld [vmem:[#allocation2 + $0x169] sm:$0xff]
      %v575 = vld [vmem:[#allocation2 + $0x171] sm:$0xff]
      %s576 = scalar_lea.vmem %s4, 128
      %v577 = vld [vmem:[%s576] sm:$0xff]
      %v578 = vld [vmem:[%s576 + $0x8] sm:$0xff]
      %v579 = vld [vmem:[%s576 + $0x10] sm:$0xff]
      %v580 = vld [vmem:[%s576 + $0x18] sm:$0xff]
      %v581 = vld [vmem:[%s576 + $0x20] sm:$0xff]
      %v582 = vld [vmem:[%s576 + $0x28] sm:$0xff]
      %v583 = vld [vmem:[%s576 + $0x30] sm:$0xff]
      %v584 = vld [vmem:[%s576 + $0x38] sm:$0xff]
      %v585 = vld [vmem:[%s576 + $0x40] sm:$0xff]
      %v586 = vld [vmem:[%s576 + $0x48] sm:$0xff]
      %v587 = vld [vmem:[%s576 + $0x50] sm:$0xff]
      %v588 = vld [vmem:[%s576 + $0x58] sm:$0xff]
      %v589 = vld [vmem:[%s576 + $0x60] sm:$0xff]
      %v590 = vld [vmem:[%s576 + $0x68] sm:$0xff]
      %v591 = vld [vmem:[%s576 + $0x70] sm:$0xff]
      %v592 = vld [vmem:[%s576 + $0x78] sm:$0xff]
      %593 = vmatpush.msra.mxu0 %v592
      %594 = vmatpush.msra.mxu0 %v591
      %595 = vmatpush.msra.mxu0 %v590
      %596 = vmatpush.msra.mxu0 %v589
      %597 = vmatpush.msra.mxu0 %v588
      %598 = vmatpush.msra.mxu0 %v587
      %599 = vmatpush.msra.mxu0 %v586
      %600 = vmatpush.msra.mxu0 %v585
      %601 = vmatpush.msra.mxu0 %v584
      %602 = vmatpush.msra.mxu0 %v583
      %603 = vmatpush.msra.mxu0 %v582
      %604 = vmatpush.msra.mxu0 %v581
      %605 = vmatpush.msra.mxu0 %v580
      %606 = vmatpush.msra.mxu0 %v579
      %607 = vmatpush.msra.mxu0 %v578
      %608 = vmatpush.msra.mxu0 %v577
      %609 = vmatmul.f32.gmra.mxu0 %v544
      %v610 = vpop.f32.mrf.mxu0
      %v611 = vadd.f32 0.0, %v610
      %612 = vmatmul.f32.gmra.mxu0 %v545
      %v613 = vpop.f32.mrf.mxu0
      %v614 = vadd.f32 0.0, %v613
      %615 = vmatmul.f32.gmra.mxu0 %v546
      %v616 = vpop.f32.mrf.mxu0
      %v617 = vadd.f32 0.0, %v616
      %618 = vmatmul.f32.gmra.mxu0 %v547
      %v619 = vpop.f32.mrf.mxu0
      %v620 = vadd.f32 0.0, %v619
      %621 = vmatmul.f32.gmra.mxu0 %v548
      %v622 = vpop.f32.mrf.mxu0
      %v623 = vadd.f32 0.0, %v622
      %624 = vmatmul.f32.gmra.mxu0 %v549
      %v625 = vpop.f32.mrf.mxu0
      %v626 = vadd.f32 0.0, %v625
      %627 = vmatmul.f32.gmra.mxu0 %v550
      %v628 = vpop.f32.mrf.mxu0
      %v629 = vadd.f32 0.0, %v628
      %630 = vmatmul.f32.gmra.mxu0 %v551
      %v631 = vpop.f32.mrf.mxu0
      %v632 = vadd.f32 0.0, %v631
      %633 = vmatmul.f32.gmra.mxu0 %v552
      %v634 = vpop.f32.mrf.mxu0
      %v635 = vadd.f32 0.0, %v634
      %636 = vmatmul.f32.gmra.mxu0 %v553
      %v637 = vpop.f32.mrf.mxu0
      %v638 = vadd.f32 0.0, %v637
      %639 = vmatmul.f32.gmra.mxu0 %v554
      %v640 = vpop.f32.mrf.mxu0
      %v641 = vadd.f32 0.0, %v640
      %642 = vmatmul.f32.gmra.mxu0 %v555
      %v643 = vpop.f32.mrf.mxu0
      %v644 = vadd.f32 0.0, %v643
      %645 = vmatmul.f32.gmra.mxu0 %v556
      %v646 = vpop.f32.mrf.mxu0
      %v647 = vadd.f32 0.0, %v646
      %648 = vmatmul.f32.gmra.mxu0 %v557
      %v649 = vpop.f32.mrf.mxu0
      %v650 = vadd.f32 0.0, %v649
      %651 = vmatmul.f32.gmra.mxu0 %v558
      %v652 = vpop.f32.mrf.mxu0
      %v653 = vadd.f32 0.0, %v652
      %654 = vmatmul.f32.gmra.mxu0 %v559
      %v655 = vpop.f32.mrf.mxu0
      %v656 = vadd.f32 0.0, %v655
      %657 = vmatmul.f32.gmra.mxu0 %v560
      %v658 = vpop.f32.mrf.mxu0
      %v659 = vadd.f32 0.0, %v658
      %660 = vmatmul.f32.gmra.mxu0 %v561
      %v661 = vpop.f32.mrf.mxu0
      %v662 = vadd.f32 0.0, %v661
      %663 = vmatmul.f32.gmra.mxu0 %v562
      %v664 = vpop.f32.mrf.mxu0
      %v665 = vadd.f32 0.0, %v664
      %666 = vmatmul.f32.gmra.mxu0 %v563
      %v667 = vpop.f32.mrf.mxu0
      %v668 = vadd.f32 0.0, %v667
      %669 = vmatmul.f32.gmra.mxu0 %v564
      %v670 = vpop.f32.mrf.mxu0
      %v671 = vadd.f32 0.0, %v670
      %672 = vmatmul.f32.gmra.mxu0 %v565
      %v673 = vpop.f32.mrf.mxu0
      %v674 = vadd.f32 0.0, %v673
      %675 = vmatmul.f32.gmra.mxu0 %v566
      %v676 = vpop.f32.mrf.mxu0
      %v677 = vadd.f32 0.0, %v676
      %678 = vmatmul.f32.gmra.mxu0 %v567
      %v679 = vpop.f32.mrf.mxu0
      %v680 = vadd.f32 0.0, %v679
      %681 = vmatmul.f32.gmra.mxu0 %v568
      %v682 = vpop.f32.mrf.mxu0
      %v683 = vadd.f32 0.0, %v682
      %684 = vmatmul.f32.gmra.mxu0 %v569
      %v685 = vpop.f32.mrf.mxu0
      %v686 = vadd.f32 0.0, %v685
      %687 = vmatmul.f32.gmra.mxu0 %v570
      %v688 = vpop.f32.mrf.mxu0
      %v689 = vadd.f32 0.0, %v688
      %690 = vmatmul.f32.gmra.mxu0 %v571
      %v691 = vpop.f32.mrf.mxu0
      %v692 = vadd.f32 0.0, %v691
      %693 = vmatmul.f32.gmra.mxu0 %v572
      %v694 = vpop.f32.mrf.mxu0
      %v695 = vadd.f32 0.0, %v694
      %696 = vmatmul.f32.gmra.mxu0 %v573
      %v697 = vpop.f32.mrf.mxu0
      %v698 = vadd.f32 0.0, %v697
      %699 = vmatmul.f32.gmra.mxu0 %v574
      %v700 = vpop.f32.mrf.mxu0
      %v701 = vadd.f32 0.0, %v700
      %702 = vmatmul.f32.gmra.mxu0 %v575
      %v703 = vpop.f32.mrf.mxu0
      %v704 = vadd.f32 0.0, %v703
      %705 = vdwg.mxu0
      %706 = vmatpush.msra.mxu0 %v543
      %707 = vmatpush.msra.mxu0 %v542
      %708 = vmatpush.msra.mxu0 %v541
      %709 = vmatpush.msra.mxu0 %v540
      %710 = vmatpush.msra.mxu0 %v539
      %711 = vmatpush.msra.mxu0 %v538
      %712 = vmatpush.msra.mxu0 %v537
      %713 = vmatpush.msra.mxu0 %v536
      %714 = vmatpush.msra.mxu0 %v535
      %715 = vmatpush.msra.mxu0 %v534
      %716 = vmatpush.msra.mxu0 %v533
      %717 = vmatpush.msra.mxu0 %v532
      %718 = vmatpush.msra.mxu0 %v531
      %719 = vmatpush.msra.mxu0 %v530
      %720 = vmatpush.msra.mxu0 %v529
      %721 = vmatpush.msra.mxu0 %v528
      %722 = vmatmul.f32.gmra.mxu0 %v496
      %v723 = vpop.f32.mrf.mxu0
      %v724 = vadd.f32 %v611, %v723
      %725 = vmatmul.f32.gmra.mxu0 %v497
      %v726 = vpop.f32.mrf.mxu0
      %v727 = vadd.f32 %v614, %v726
      %728 = vmatmul.f32.gmra.mxu0 %v498
      %v729 = vpop.f32.mrf.mxu0
      %v730 = vadd.f32 %v617, %v729
      %731 = vmatmul.f32.gmra.mxu0 %v499
      %v732 = vpop.f32.mrf.mxu0
      %v733 = vadd.f32 %v620, %v732
      %734 = vmatmul.f32.gmra.mxu0 %v500
      %v735 = vpop.f32.mrf.mxu0
      %v736 = vadd.f32 %v623, %v735
      %737 = vmatmul.f32.gmra.mxu0 %v501
      %v738 = vpop.f32.mrf.mxu0
      %v739 = vadd.f32 %v626, %v738
      %740 = vmatmul.f32.gmra.mxu0 %v502
      %v741 = vpop.f32.mrf.mxu0
      %v742 = vadd.f32 %v629, %v741
      %743 = vmatmul.f32.gmra.mxu0 %v503
      %v744 = vpop.f32.mrf.mxu0
      %v745 = vadd.f32 %v632, %v744
      %746 = vmatmul.f32.gmra.mxu0 %v504
      %v747 = vpop.f32.mrf.mxu0
      %v748 = vadd.f32 %v635, %v747
      %749 = vmatmul.f32.gmra.mxu0 %v505
      %v750 = vpop.f32.mrf.mxu0
      %v751 = vadd.f32 %v638, %v750
      %752 = vmatmul.f32.gmra.mxu0 %v506
      %v753 = vpop.f32.mrf.mxu0
      %v754 = vadd.f32 %v641, %v753
      %755 = vmatmul.f32.gmra.mxu0 %v507
      %v756 = vpop.f32.mrf.mxu0
      %v757 = vadd.f32 %v644, %v756
      %758 = vmatmul.f32.gmra.mxu0 %v508
      %v759 = vpop.f32.mrf.mxu0
      %v760 = vadd.f32 %v647, %v759
      %761 = vmatmul.f32.gmra.mxu0 %v509
      %v762 = vpop.f32.mrf.mxu0
      %v763 = vadd.f32 %v650, %v762
      %764 = vmatmul.f32.gmra.mxu0 %v510
      %v765 = vpop.f32.mrf.mxu0
      %v766 = vadd.f32 %v653, %v765
      %767 = vmatmul.f32.gmra.mxu0 %v511
      %v768 = vpop.f32.mrf.mxu0
      %v769 = vadd.f32 %v656, %v768
      %770 = vmatmul.f32.gmra.mxu0 %v512
      %v771 = vpop.f32.mrf.mxu0
      %v772 = vadd.f32 %v659, %v771
      %773 = vmatmul.f32.gmra.mxu0 %v513
      %v774 = vpop.f32.mrf.mxu0
      %v775 = vadd.f32 %v662, %v774
      %776 = vmatmul.f32.gmra.mxu0 %v514
      %v777 = vpop.f32.mrf.mxu0
      %v778 = vadd.f32 %v665, %v777
      %779 = vmatmul.f32.gmra.mxu0 %v515
      %v780 = vpop.f32.mrf.mxu0
      %v781 = vadd.f32 %v668, %v780
      %782 = vmatmul.f32.gmra.mxu0 %v516
      %v783 = vpop.f32.mrf.mxu0
      %v784 = vadd.f32 %v671, %v783
      %785 = vmatmul.f32.gmra.mxu0 %v517
      %v786 = vpop.f32.mrf.mxu0
      %v787 = vadd.f32 %v674, %v786
      %788 = vmatmul.f32.gmra.mxu0 %v518
      %v789 = vpop.f32.mrf.mxu0
      %v790 = vadd.f32 %v677, %v789
      %791 = vmatmul.f32.gmra.mxu0 %v519
      %v792 = vpop.f32.mrf.mxu0
      %v793 = vadd.f32 %v680, %v792
      %794 = vmatmul.f32.gmra.mxu0 %v520
      %v795 = vpop.f32.mrf.mxu0
      %v796 = vadd.f32 %v683, %v795
      %797 = vmatmul.f32.gmra.mxu0 %v521
      %v798 = vpop.f32.mrf.mxu0
      %v799 = vadd.f32 %v686, %v798
      %800 = vmatmul.f32.gmra.mxu0 %v522
      %v801 = vpop.f32.mrf.mxu0
      %v802 = vadd.f32 %v689, %v801
      %803 = vmatmul.f32.gmra.mxu0 %v523
      %v804 = vpop.f32.mrf.mxu0
      %v805 = vadd.f32 %v692, %v804
      %806 = vmatmul.f32.gmra.mxu0 %v524
      %v807 = vpop.f32.mrf.mxu0
      %v808 = vadd.f32 %v695, %v807
      %809 = vmatmul.f32.gmra.mxu0 %v525
      %v810 = vpop.f32.mrf.mxu0
      %v811 = vadd.f32 %v698, %v810
      %812 = vmatmul.f32.gmra.mxu0 %v526
      %v813 = vpop.f32.mrf.mxu0
      %v814 = vadd.f32 %v701, %v813
      %815 = vmatmul.f32.gmra.mxu0 %v527
      %v816 = vpop.f32.mrf.mxu0
      %v817 = vadd.f32 %v704, %v816
      %818 = vdwg.mxu0
      %v819 = vld [vmem:[#allocation2 + $0x2] sm:$0xff]
      %v820 = vld [vmem:[#allocation2 + $0xa] sm:$0xff]
      %v821 = vld [vmem:[#allocation2 + $0x1a] sm:$0xff]
      %v822 = vld [vmem:[#allocation2 + $0x22] sm:$0xff]
      %v823 = vld [vmem:[#allocation2 + $0x32] sm:$0xff]
      %v824 = vld [vmem:[#allocation2 + $0x3a] sm:$0xff]
      %v825 = vld [vmem:[#allocation2 + $0x4a] sm:$0xff]
      %v826 = vld [vmem:[#allocation2 + $0x52] sm:$0xff]
      %v827 = vld [vmem:[#allocation2 + $0x62] sm:$0xff]
      %v828 = vld [vmem:[#allocation2 + $0x6a] sm:$0xff]
      %v829 = vld [vmem:[#allocation2 + $0x7a] sm:$0xff]
      %v830 = vld [vmem:[#allocation2 + $0x82] sm:$0xff]
      %v831 = vld [vmem:[#allocation2 + $0x92] sm:$0xff]
      %v832 = vld [vmem:[#allocation2 + $0x9a] sm:$0xff]
      %v833 = vld [vmem:[#allocation2 + $0xaa] sm:$0xff]
      %v834 = vld [vmem:[#allocation2 + $0xb2] sm:$0xff]
      %v835 = vld [vmem:[#allocation2 + $0xc2] sm:$0xff]
      %v836 = vld [vmem:[#allocation2 + $0xca] sm:$0xff]
      %v837 = vld [vmem:[#allocation2 + $0xda] sm:$0xff]
      %v838 = vld [vmem:[#allocation2 + $0xe2] sm:$0xff]
      %v839 = vld [vmem:[#allocation2 + $0xf2] sm:$0xff]
      %v840 = vld [vmem:[#allocation2 + $0xfa] sm:$0xff]
      %v841 = vld [vmem:[#allocation2 + $0x10a] sm:$0xff]
      %v842 = vld [vmem:[#allocation2 + $0x112] sm:$0xff]
      %v843 = vld [vmem:[#allocation2 + $0x122] sm:$0xff]
      %v844 = vld [vmem:[#allocation2 + $0x12a] sm:$0xff]
      %v845 = vld [vmem:[#allocation2 + $0x13a] sm:$0xff]
      %v846 = vld [vmem:[#allocation2 + $0x142] sm:$0xff]
      %v847 = vld [vmem:[#allocation2 + $0x152] sm:$0xff]
      %v848 = vld [vmem:[#allocation2 + $0x15a] sm:$0xff]
      %v849 = vld [vmem:[#allocation2 + $0x16a] sm:$0xff]
      %v850 = vld [vmem:[#allocation2 + $0x172] sm:$0xff]
      %s851 = scalar_lea.vmem %s4, 256
      %v852 = vld [vmem:[%s851] sm:$0xff]
      %v853 = vld [vmem:[%s851 + $0x8] sm:$0xff]
      %v854 = vld [vmem:[%s851 + $0x10] sm:$0xff]
      %v855 = vld [vmem:[%s851 + $0x18] sm:$0xff]
      %v856 = vld [vmem:[%s851 + $0x20] sm:$0xff]
      %v857 = vld [vmem:[%s851 + $0x28] sm:$0xff]
      %v858 = vld [vmem:[%s851 + $0x30] sm:$0xff]
      %v859 = vld [vmem:[%s851 + $0x38] sm:$0xff]
      %v860 = vld [vmem:[%s851 + $0x40] sm:$0xff]
      %v861 = vld [vmem:[%s851 + $0x48] sm:$0xff]
      %v862 = vld [vmem:[%s851 + $0x50] sm:$0xff]
      %v863 = vld [vmem:[%s851 + $0x58] sm:$0xff]
      %v864 = vld [vmem:[%s851 + $0x60] sm:$0xff]
      %v865 = vld [vmem:[%s851 + $0x68] sm:$0xff]
      %v866 = vld [vmem:[%s851 + $0x70] sm:$0xff]
      %v867 = vld [vmem:[%s851 + $0x78] sm:$0xff]
      %868 = vmatpush.msra.mxu0 %v867
      %869 = vmatpush.msra.mxu0 %v866
      %870 = vmatpush.msra.mxu0 %v865
      %871 = vmatpush.msra.mxu0 %v864
      %872 = vmatpush.msra.mxu0 %v863
      %873 = vmatpush.msra.mxu0 %v862
      %874 = vmatpush.msra.mxu0 %v861
      %875 = vmatpush.msra.mxu0 %v860
      %876 = vmatpush.msra.mxu0 %v859
      %877 = vmatpush.msra.mxu0 %v858
      %878 = vmatpush.msra.mxu0 %v857
      %879 = vmatpush.msra.mxu0 %v856
      %880 = vmatpush.msra.mxu0 %v855
      %881 = vmatpush.msra.mxu0 %v854
      %882 = vmatpush.msra.mxu0 %v853
      %883 = vmatpush.msra.mxu0 %v852
      %884 = vmatmul.f32.gmra.mxu0 %v819
      %v885 = vpop.f32.mrf.mxu0
      %v886 = vadd.f32 0.0, %v885
      %887 = vmatmul.f32.gmra.mxu0 %v820
      %v888 = vpop.f32.mrf.mxu0
      %v889 = vadd.f32 0.0, %v888
      %890 = vmatmul.f32.gmra.mxu0 %v821
      %v891 = vpop.f32.mrf.mxu0
      %v892 = vadd.f32 0.0, %v891
      %893 = vmatmul.f32.gmra.mxu0 %v822
      %v894 = vpop.f32.mrf.mxu0
      %v895 = vadd.f32 0.0, %v894
      %896 = vmatmul.f32.gmra.mxu0 %v823
      %v897 = vpop.f32.mrf.mxu0
      %v898 = vadd.f32 0.0, %v897
      %899 = vmatmul.f32.gmra.mxu0 %v824
      %v900 = vpop.f32.mrf.mxu0
      %v901 = vadd.f32 0.0, %v900
      %902 = vmatmul.f32.gmra.mxu0 %v825
      %v903 = vpop.f32.mrf.mxu0
      %v904 = vadd.f32 0.0, %v903
      %905 = vmatmul.f32.gmra.mxu0 %v826
      %v906 = vpop.f32.mrf.mxu0
      %v907 = vadd.f32 0.0, %v906
      %908 = vmatmul.f32.gmra.mxu0 %v827
      %v909 = vpop.f32.mrf.mxu0
      %v910 = vadd.f32 0.0, %v909
      %911 = vmatmul.f32.gmra.mxu0 %v828
      %v912 = vpop.f32.mrf.mxu0
      %v913 = vadd.f32 0.0, %v912
      %914 = vmatmul.f32.gmra.mxu0 %v829
      %v915 = vpop.f32.mrf.mxu0
      %v916 = vadd.f32 0.0, %v915
      %917 = vmatmul.f32.gmra.mxu0 %v830
      %v918 = vpop.f32.mrf.mxu0
      %v919 = vadd.f32 0.0, %v918
      %920 = vmatmul.f32.gmra.mxu0 %v831
      %v921 = vpop.f32.mrf.mxu0
      %v922 = vadd.f32 0.0, %v921
      %923 = vmatmul.f32.gmra.mxu0 %v832
      %v924 = vpop.f32.mrf.mxu0
      %v925 = vadd.f32 0.0, %v924
      %926 = vmatmul.f32.gmra.mxu0 %v833
      %v927 = vpop.f32.mrf.mxu0
      %v928 = vadd.f32 0.0, %v927
      %929 = vmatmul.f32.gmra.mxu0 %v834
      %v930 = vpop.f32.mrf.mxu0
      %v931 = vadd.f32 0.0, %v930
      %932 = vmatmul.f32.gmra.mxu0 %v835
      %v933 = vpop.f32.mrf.mxu0
      %v934 = vadd.f32 0.0, %v933
      %935 = vmatmul.f32.gmra.mxu0 %v836
      %v936 = vpop.f32.mrf.mxu0
      %v937 = vadd.f32 0.0, %v936
      %938 = vmatmul.f32.gmra.mxu0 %v837
      %v939 = vpop.f32.mrf.mxu0
      %v940 = vadd.f32 0.0, %v939
      %941 = vmatmul.f32.gmra.mxu0 %v838
      %v942 = vpop.f32.mrf.mxu0
      %v943 = vadd.f32 0.0, %v942
      %944 = vmatmul.f32.gmra.mxu0 %v839
      %v945 = vpop.f32.mrf.mxu0
      %v946 = vadd.f32 0.0, %v945
      %947 = vmatmul.f32.gmra.mxu0 %v840
      %v948 = vpop.f32.mrf.mxu0
      %v949 = vadd.f32 0.0, %v948
      %950 = vmatmul.f32.gmra.mxu0 %v841
      %v951 = vpop.f32.mrf.mxu0
      %v952 = vadd.f32 0.0, %v951
      %953 = vmatmul.f32.gmra.mxu0 %v842
      %v954 = vpop.f32.mrf.mxu0
      %v955 = vadd.f32 0.0, %v954
      %956 = vmatmul.f32.gmra.mxu0 %v843
      %v957 = vpop.f32.mrf.mxu0
      %v958 = vadd.f32 0.0, %v957
      %959 = vmatmul.f32.gmra.mxu0 %v844
      %v960 = vpop.f32.mrf.mxu0
      %v961 = vadd.f32 0.0, %v960
      %962 = vmatmul.f32.gmra.mxu0 %v845
      %v963 = vpop.f32.mrf.mxu0
      %v964 = vadd.f32 0.0, %v963
      %965 = vmatmul.f32.gmra.mxu0 %v846
      %v966 = vpop.f32.mrf.mxu0
      %v967 = vadd.f32 0.0, %v966
      %968 = vmatmul.f32.gmra.mxu0 %v847
      %v969 = vpop.f32.mrf.mxu0
      %v970 = vadd.f32 0.0, %v969
      %971 = vmatmul.f32.gmra.mxu0 %v848
      %v972 = vpop.f32.mrf.mxu0
      %v973 = vadd.f32 0.0, %v972
      %974 = vmatmul.f32.gmra.mxu0 %v849
      %v975 = vpop.f32.mrf.mxu0
      %v976 = vadd.f32 0.0, %v975
      %977 = vmatmul.f32.gmra.mxu0 %v850
      %v978 = vpop.f32.mrf.mxu0
      %v979 = vadd.f32 0.0, %v978
      %980 = vdwg.mxu0
      %v981 = vadd.f32 %v724, %v886
      %v982 = vadd.f32 %v727, %v889
      %v983 = vadd.f32 %v730, %v892
      %v984 = vadd.f32 %v733, %v895
      %v985 = vadd.f32 %v736, %v898
      %v986 = vadd.f32 %v739, %v901
      %v987 = vadd.f32 %v742, %v904
      %v988 = vadd.f32 %v745, %v907
      %v989 = vadd.f32 %v748, %v910
      %v990 = vadd.f32 %v751, %v913
      %v991 = vadd.f32 %v754, %v916
      %v992 = vadd.f32 %v757, %v919
      %v993 = vadd.f32 %v760, %v922
      %v994 = vadd.f32 %v763, %v925
      %v995 = vadd.f32 %v766, %v928
      %v996 = vadd.f32 %v769, %v931
      %v997 = vadd.f32 %v772, %v934
      %v998 = vadd.f32 %v775, %v937
      %v999 = vadd.f32 %v778, %v940
      %v1000 = vadd.f32 %v781, %v943
      %v1001 = vadd.f32 %v784, %v946
      %v1002 = vadd.f32 %v787, %v949
      %v1003 = vadd.f32 %v790, %v952
      %v1004 = vadd.f32 %v793, %v955
      %v1005 = vadd.f32 %v796, %v958
      %v1006 = vadd.f32 %v799, %v961
      %v1007 = vadd.f32 %v802, %v964
      %v1008 = vadd.f32 %v805, %v967
      %v1009 = vadd.f32 %v808, %v970
      %v1010 = vadd.f32 %v811, %v973
      %v1011 = vadd.f32 %v814, %v976
      %v1012 = vadd.f32 %v817, %v979
      %v1013 = vld [vmem:[%s463] sm:$0xff]
      %v1014 = vld [vmem:[%s463 + $0x8] sm:$0xff]
      %v1015 = vld [vmem:[%s463 + $0x18] sm:$0xff]
      %v1016 = vld [vmem:[%s463 + $0x20] sm:$0xff]
      %v1017 = vld [vmem:[%s463 + $0x30] sm:$0xff]
      %v1018 = vld [vmem:[%s463 + $0x38] sm:$0xff]
      %v1019 = vld [vmem:[%s463 + $0x48] sm:$0xff]
      %v1020 = vld [vmem:[%s463 + $0x50] sm:$0xff]
      %v1021 = vld [vmem:[%s463 + $0x60] sm:$0xff]
      %v1022 = vld [vmem:[%s463 + $0x68] sm:$0xff]
      %v1023 = vld [vmem:[%s463 + $0x78] sm:$0xff]
      %v1024 = vld [vmem:[%s463 + $0x80] sm:$0xff]
      %v1025 = vld [vmem:[%s463 + $0x90] sm:$0xff]
      %v1026 = vld [vmem:[%s463 + $0x98] sm:$0xff]
      %v1027 = vld [vmem:[%s463 + $0xa8] sm:$0xff]
      %v1028 = vld [vmem:[%s463 + $0xb0] sm:$0xff]
      %v1029 = vld [vmem:[%s463 + $0xc0] sm:$0xff]
      %v1030 = vld [vmem:[%s463 + $0xc8] sm:$0xff]
      %v1031 = vld [vmem:[%s463 + $0xd8] sm:$0xff]
      %v1032 = vld [vmem:[%s463 + $0xe0] sm:$0xff]
      %v1033 = vld [vmem:[%s463 + $0xf0] sm:$0xff]
      %v1034 = vld [vmem:[%s463 + $0xf8] sm:$0xff]
      %v1035 = vld [vmem:[%s463 + $0x108] sm:$0xff]
      %v1036 = vld [vmem:[%s463 + $0x110] sm:$0xff]
      %v1037 = vld [vmem:[%s463 + $0x120] sm:$0xff]
      %v1038 = vld [vmem:[%s463 + $0x128] sm:$0xff]
      %v1039 = vld [vmem:[%s463 + $0x138] sm:$0xff]
      %v1040 = vld [vmem:[%s463 + $0x140] sm:$0xff]
      %v1041 = vld [vmem:[%s463 + $0x150] sm:$0xff]
      %v1042 = vld [vmem:[%s463 + $0x158] sm:$0xff]
      %v1043 = vld [vmem:[%s463 + $0x168] sm:$0xff]
      %v1044 = vld [vmem:[%s463 + $0x170] sm:$0xff]
      %s1045 = scalar_lea.vmem %s4, 384
      %v1046 = vld [vmem:[%s1045] sm:$0xff]
      %v1047 = vld [vmem:[%s1045 + $0x8] sm:$0xff]
      %v1048 = vld [vmem:[%s1045 + $0x10] sm:$0xff]
      %v1049 = vld [vmem:[%s1045 + $0x18] sm:$0xff]
      %v1050 = vld [vmem:[%s1045 + $0x20] sm:$0xff]
      %v1051 = vld [vmem:[%s1045 + $0x28] sm:$0xff]
      %v1052 = vld [vmem:[%s1045 + $0x30] sm:$0xff]
      %v1053 = vld [vmem:[%s1045 + $0x38] sm:$0xff]
      %v1054 = vld [vmem:[%s1045 + $0x40] sm:$0xff]
      %v1055 = vld [vmem:[%s1045 + $0x48] sm:$0xff]
      %v1056 = vld [vmem:[%s1045 + $0x50] sm:$0xff]
      %v1057 = vld [vmem:[%s1045 + $0x58] sm:$0xff]
      %v1058 = vld [vmem:[%s1045 + $0x60] sm:$0xff]
      %v1059 = vld [vmem:[%s1045 + $0x68] sm:$0xff]
      %v1060 = vld [vmem:[%s1045 + $0x70] sm:$0xff]
      %v1061 = vld [vmem:[%s1045 + $0x78] sm:$0xff]
      %1062 = vmatpush.msra.mxu0 %v1061
      %1063 = vmatpush.msra.mxu0 %v1060
      %1064 = vmatpush.msra.mxu0 %v1059
      %1065 = vmatpush.msra.mxu0 %v1058
      %1066 = vmatpush.msra.mxu0 %v1057
      %1067 = vmatpush.msra.mxu0 %v1056
      %1068 = vmatpush.msra.mxu0 %v1055
      %1069 = vmatpush.msra.mxu0 %v1054
      %1070 = vmatpush.msra.mxu0 %v1053
      %1071 = vmatpush.msra.mxu0 %v1052
      %1072 = vmatpush.msra.mxu0 %v1051
      %1073 = vmatpush.msra.mxu0 %v1050
      %1074 = vmatpush.msra.mxu0 %v1049
      %1075 = vmatpush.msra.mxu0 %v1048
      %1076 = vmatpush.msra.mxu0 %v1047
      %1077 = vmatpush.msra.mxu0 %v1046
      %1078 = vmatmul.f32.gmra.mxu0 %v1013
      %v1079 = vpop.f32.mrf.mxu0
      %v1080 = vadd.f32 0.0, %v1079
      %1081 = vmatmul.f32.gmra.mxu0 %v1014
      %v1082 = vpop.f32.mrf.mxu0
      %v1083 = vadd.f32 0.0, %v1082
      %1084 = vmatmul.f32.gmra.mxu0 %v1015
      %v1085 = vpop.f32.mrf.mxu0
      %v1086 = vadd.f32 0.0, %v1085
      %1087 = vmatmul.f32.gmra.mxu0 %v1016
      %v1088 = vpop.f32.mrf.mxu0
      %v1089 = vadd.f32 0.0, %v1088
      %1090 = vmatmul.f32.gmra.mxu0 %v1017
      %v1091 = vpop.f32.mrf.mxu0
      %v1092 = vadd.f32 0.0, %v1091
      %1093 = vmatmul.f32.gmra.mxu0 %v1018
      %v1094 = vpop.f32.mrf.mxu0
      %v1095 = vadd.f32 0.0, %v1094
      %1096 = vmatmul.f32.gmra.mxu0 %v1019
      %v1097 = vpop.f32.mrf.mxu0
      %v1098 = vadd.f32 0.0, %v1097
      %1099 = vmatmul.f32.gmra.mxu0 %v1020
      %v1100 = vpop.f32.mrf.mxu0
      %v1101 = vadd.f32 0.0, %v1100
      %1102 = vmatmul.f32.gmra.mxu0 %v1021
      %v1103 = vpop.f32.mrf.mxu0
      %v1104 = vadd.f32 0.0, %v1103
      %1105 = vmatmul.f32.gmra.mxu0 %v1022
      %v1106 = vpop.f32.mrf.mxu0
      %v1107 = vadd.f32 0.0, %v1106
      %1108 = vmatmul.f32.gmra.mxu0 %v1023
      %v1109 = vpop.f32.mrf.mxu0
      %v1110 = vadd.f32 0.0, %v1109
      %1111 = vmatmul.f32.gmra.mxu0 %v1024
      %v1112 = vpop.f32.mrf.mxu0
      %v1113 = vadd.f32 0.0, %v1112
      %1114 = vmatmul.f32.gmra.mxu0 %v1025
      %v1115 = vpop.f32.mrf.mxu0
      %v1116 = vadd.f32 0.0, %v1115
      %1117 = vmatmul.f32.gmra.mxu0 %v1026
      %v1118 = vpop.f32.mrf.mxu0
      %v1119 = vadd.f32 0.0, %v1118
      %1120 = vmatmul.f32.gmra.mxu0 %v1027
      %v1121 = vpop.f32.mrf.mxu0
      %v1122 = vadd.f32 0.0, %v1121
      %1123 = vmatmul.f32.gmra.mxu0 %v1028
      %v1124 = vpop.f32.mrf.mxu0
      %v1125 = vadd.f32 0.0, %v1124
      %1126 = vmatmul.f32.gmra.mxu0 %v1029
      %v1127 = vpop.f32.mrf.mxu0
      %v1128 = vadd.f32 0.0, %v1127
      %1129 = vmatmul.f32.gmra.mxu0 %v1030
      %v1130 = vpop.f32.mrf.mxu0
      %v1131 = vadd.f32 0.0, %v1130
      %1132 = vmatmul.f32.gmra.mxu0 %v1031
      %v1133 = vpop.f32.mrf.mxu0
      %v1134 = vadd.f32 0.0, %v1133
      %1135 = vmatmul.f32.gmra.mxu0 %v1032
      %v1136 = vpop.f32.mrf.mxu0
      %v1137 = vadd.f32 0.0, %v1136
      %1138 = vmatmul.f32.gmra.mxu0 %v1033
      %v1139 = vpop.f32.mrf.mxu0
      %v1140 = vadd.f32 0.0, %v1139
      %1141 = vmatmul.f32.gmra.mxu0 %v1034
      %v1142 = vpop.f32.mrf.mxu0
      %v1143 = vadd.f32 0.0, %v1142
      %1144 = vmatmul.f32.gmra.mxu0 %v1035
      %v1145 = vpop.f32.mrf.mxu0
      %v1146 = vadd.f32 0.0, %v1145
      %1147 = vmatmul.f32.gmra.mxu0 %v1036
      %v1148 = vpop.f32.mrf.mxu0
      %v1149 = vadd.f32 0.0, %v1148
      %1150 = vmatmul.f32.gmra.mxu0 %v1037
      %v1151 = vpop.f32.mrf.mxu0
      %v1152 = vadd.f32 0.0, %v1151
      %1153 = vmatmul.f32.gmra.mxu0 %v1038
      %v1154 = vpop.f32.mrf.mxu0
      %v1155 = vadd.f32 0.0, %v1154
      %1156 = vmatmul.f32.gmra.mxu0 %v1039
      %v1157 = vpop.f32.mrf.mxu0
      %v1158 = vadd.f32 0.0, %v1157
      %1159 = vmatmul.f32.gmra.mxu0 %v1040
      %v1160 = vpop.f32.mrf.mxu0
      %v1161 = vadd.f32 0.0, %v1160
      %1162 = vmatmul.f32.gmra.mxu0 %v1041
      %v1163 = vpop.f32.mrf.mxu0
      %v1164 = vadd.f32 0.0, %v1163
      %1165 = vmatmul.f32.gmra.mxu0 %v1042
      %v1166 = vpop.f32.mrf.mxu0
      %v1167 = vadd.f32 0.0, %v1166
      %1168 = vmatmul.f32.gmra.mxu0 %v1043
      %v1169 = vpop.f32.mrf.mxu0
      %v1170 = vadd.f32 0.0, %v1169
      %1171 = vmatmul.f32.gmra.mxu0 %v1044
      %v1172 = vpop.f32.mrf.mxu0
      %v1173 = vadd.f32 0.0, %v1172
      %1174 = vdwg.mxu0
      %v1175 = vadd.f32 %v981, %v1080
      %v1176 = vadd.f32 %v982, %v1083
      %v1177 = vadd.f32 %v983, %v1086
      %v1178 = vadd.f32 %v984, %v1089
      %v1179 = vadd.f32 %v985, %v1092
      %v1180 = vadd.f32 %v986, %v1095
      %v1181 = vadd.f32 %v987, %v1098
      %v1182 = vadd.f32 %v988, %v1101
      %v1183 = vadd.f32 %v989, %v1104
      %v1184 = vadd.f32 %v990, %v1107
      %v1185 = vadd.f32 %v991, %v1110
      %v1186 = vadd.f32 %v992, %v1113
      %v1187 = vadd.f32 %v993, %v1116
      %v1188 = vadd.f32 %v994, %v1119
      %v1189 = vadd.f32 %v995, %v1122
      %v1190 = vadd.f32 %v996, %v1125
      %v1191 = vadd.f32 %v997, %v1128
      %v1192 = vadd.f32 %v998, %v1131
      %v1193 = vadd.f32 %v999, %v1134
      %v1194 = vadd.f32 %v1000, %v1137
      %v1195 = vadd.f32 %v1001, %v1140
      %v1196 = vadd.f32 %v1002, %v1143
      %v1197 = vadd.f32 %v1003, %v1146
      %v1198 = vadd.f32 %v1004, %v1149
      %v1199 = vadd.f32 %v1005, %v1152
      %v1200 = vadd.f32 %v1006, %v1155
      %v1201 = vadd.f32 %v1007, %v1158
      %v1202 = vadd.f32 %v1008, %v1161
      %v1203 = vadd.f32 %v1009, %v1164
      %v1204 = vadd.f32 %v1010, %v1167
      %v1205 = vadd.f32 %v1011, %v1170
      %v1206 = vadd.f32 %v1012, %v1173
      %v1207 = vld [vmem:[%s463 + $0x1] sm:$0xff]
      %v1208 = vld [vmem:[%s463 + $0x9] sm:$0xff]
      %v1209 = vld [vmem:[%s463 + $0x19] sm:$0xff]
      %v1210 = vld [vmem:[%s463 + $0x21] sm:$0xff]
      %v1211 = vld [vmem:[%s463 + $0x31] sm:$0xff]
      %v1212 = vld [vmem:[%s463 + $0x39] sm:$0xff]
      %v1213 = vld [vmem:[%s463 + $0x49] sm:$0xff]
      %v1214 = vld [vmem:[%s463 + $0x51] sm:$0xff]
      %v1215 = vld [vmem:[%s463 + $0x61] sm:$0xff]
      %v1216 = vld [vmem:[%s463 + $0x69] sm:$0xff]
      %v1217 = vld [vmem:[%s463 + $0x79] sm:$0xff]
      %v1218 = vld [vmem:[%s463 + $0x81] sm:$0xff]
      %v1219 = vld [vmem:[%s463 + $0x91] sm:$0xff]
      %v1220 = vld [vmem:[%s463 + $0x99] sm:$0xff]
      %v1221 = vld [vmem:[%s463 + $0xa9] sm:$0xff]
      %v1222 = vld [vmem:[%s463 + $0xb1] sm:$0xff]
      %v1223 = vld [vmem:[%s463 + $0xc1] sm:$0xff]
      %v1224 = vld [vmem:[%s463 + $0xc9] sm:$0xff]
      %v1225 = vld [vmem:[%s463 + $0xd9] sm:$0xff]
      %v1226 = vld [vmem:[%s463 + $0xe1] sm:$0xff]
      %v1227 = vld [vmem:[%s463 + $0xf1] sm:$0xff]
      %v1228 = vld [vmem:[%s463 + $0xf9] sm:$0xff]
      %v1229 = vld [vmem:[%s463 + $0x109] sm:$0xff]
      %v1230 = vld [vmem:[%s463 + $0x111] sm:$0xff]
      %v1231 = vld [vmem:[%s463 + $0x121] sm:$0xff]
      %v1232 = vld [vmem:[%s463 + $0x129] sm:$0xff]
      %v1233 = vld [vmem:[%s463 + $0x139] sm:$0xff]
      %v1234 = vld [vmem:[%s463 + $0x141] sm:$0xff]
      %v1235 = vld [vmem:[%s463 + $0x151] sm:$0xff]
      %v1236 = vld [vmem:[%s463 + $0x159] sm:$0xff]
      %v1237 = vld [vmem:[%s463 + $0x169] sm:$0xff]
      %v1238 = vld [vmem:[%s463 + $0x171] sm:$0xff]
      %s1239 = scalar_lea.vmem %s4, 512
      %v1240 = vld [vmem:[%s1239] sm:$0xff]
      %v1241 = vld [vmem:[%s1239 + $0x8] sm:$0xff]
      %v1242 = vld [vmem:[%s1239 + $0x10] sm:$0xff]
      %v1243 = vld [vmem:[%s1239 + $0x18] sm:$0xff]
      %v1244 = vld [vmem:[%s1239 + $0x20] sm:$0xff]
      %v1245 = vld [vmem:[%s1239 + $0x28] sm:$0xff]
      %v1246 = vld [vmem:[%s1239 + $0x30] sm:$0xff]
      %v1247 = vld [vmem:[%s1239 + $0x38] sm:$0xff]
      %v1248 = vld [vmem:[%s1239 + $0x40] sm:$0xff]
      %v1249 = vld [vmem:[%s1239 + $0x48] sm:$0xff]
      %v1250 = vld [vmem:[%s1239 + $0x50] sm:$0xff]
      %v1251 = vld [vmem:[%s1239 + $0x58] sm:$0xff]
      %v1252 = vld [vmem:[%s1239 + $0x60] sm:$0xff]
      %v1253 = vld [vmem:[%s1239 + $0x68] sm:$0xff]
      %v1254 = vld [vmem:[%s1239 + $0x70] sm:$0xff]
      %v1255 = vld [vmem:[%s1239 + $0x78] sm:$0xff]
      %1256 = vmatpush.msra.mxu0 %v1255
      %1257 = vmatpush.msra.mxu0 %v1254
      %1258 = vmatpush.msra.mxu0 %v1253
      %1259 = vmatpush.msra.mxu0 %v1252
      %1260 = vmatpush.msra.mxu0 %v1251
      %1261 = vmatpush.msra.mxu0 %v1250
      %1262 = vmatpush.msra.mxu0 %v1249
      %1263 = vmatpush.msra.mxu0 %v1248
      %1264 = vmatpush.msra.mxu0 %v1247
      %1265 = vmatpush.msra.mxu0 %v1246
      %1266 = vmatpush.msra.mxu0 %v1245
      %1267 = vmatpush.msra.mxu0 %v1244
      %1268 = vmatpush.msra.mxu0 %v1243
      %1269 = vmatpush.msra.mxu0 %v1242
      %1270 = vmatpush.msra.mxu0 %v1241
      %1271 = vmatpush.msra.mxu0 %v1240
      %1272 = vmatmul.f32.gmra.mxu0 %v1207
      %v1273 = vpop.f32.mrf.mxu0
      %v1274 = vadd.f32 0.0, %v1273
      %1275 = vmatmul.f32.gmra.mxu0 %v1208
      %v1276 = vpop.f32.mrf.mxu0
      %v1277 = vadd.f32 0.0, %v1276
      %1278 = vmatmul.f32.gmra.mxu0 %v1209
      %v1279 = vpop.f32.mrf.mxu0
      %v1280 = vadd.f32 0.0, %v1279
      %1281 = vmatmul.f32.gmra.mxu0 %v1210
      %v1282 = vpop.f32.mrf.mxu0
      %v1283 = vadd.f32 0.0, %v1282
      %1284 = vmatmul.f32.gmra.mxu0 %v1211
      %v1285 = vpop.f32.mrf.mxu0
      %v1286 = vadd.f32 0.0, %v1285
      %1287 = vmatmul.f32.gmra.mxu0 %v1212
      %v1288 = vpop.f32.mrf.mxu0
      %v1289 = vadd.f32 0.0, %v1288
      %1290 = vmatmul.f32.gmra.mxu0 %v1213
      %v1291 = vpop.f32.mrf.mxu0
      %v1292 = vadd.f32 0.0, %v1291
      %1293 = vmatmul.f32.gmra.mxu0 %v1214
      %v1294 = vpop.f32.mrf.mxu0
      %v1295 = vadd.f32 0.0, %v1294
      %1296 = vmatmul.f32.gmra.mxu0 %v1215
      %v1297 = vpop.f32.mrf.mxu0
      %v1298 = vadd.f32 0.0, %v1297
      %1299 = vmatmul.f32.gmra.mxu0 %v1216
      %v1300 = vpop.f32.mrf.mxu0
      %v1301 = vadd.f32 0.0, %v1300
      %1302 = vmatmul.f32.gmra.mxu0 %v1217
      %v1303 = vpop.f32.mrf.mxu0
      %v1304 = vadd.f32 0.0, %v1303
      %1305 = vmatmul.f32.gmra.mxu0 %v1218
      %v1306 = vpop.f32.mrf.mxu0
      %v1307 = vadd.f32 0.0, %v1306
      %1308 = vmatmul.f32.gmra.mxu0 %v1219
      %v1309 = vpop.f32.mrf.mxu0
      %v1310 = vadd.f32 0.0, %v1309
      %1311 = vmatmul.f32.gmra.mxu0 %v1220
      %v1312 = vpop.f32.mrf.mxu0
      %v1313 = vadd.f32 0.0, %v1312
      %1314 = vmatmul.f32.gmra.mxu0 %v1221
      %v1315 = vpop.f32.mrf.mxu0
      %v1316 = vadd.f32 0.0, %v1315
      %1317 = vmatmul.f32.gmra.mxu0 %v1222
      %v1318 = vpop.f32.mrf.mxu0
      %v1319 = vadd.f32 0.0, %v1318
      %1320 = vmatmul.f32.gmra.mxu0 %v1223
      %v1321 = vpop.f32.mrf.mxu0
      %v1322 = vadd.f32 0.0, %v1321
      %1323 = vmatmul.f32.gmra.mxu0 %v1224
      %v1324 = vpop.f32.mrf.mxu0
      %v1325 = vadd.f32 0.0, %v1324
      %1326 = vmatmul.f32.gmra.mxu0 %v1225
      %v1327 = vpop.f32.mrf.mxu0
      %v1328 = vadd.f32 0.0, %v1327
      %1329 = vmatmul.f32.gmra.mxu0 %v1226
      %v1330 = vpop.f32.mrf.mxu0
      %v1331 = vadd.f32 0.0, %v1330
      %1332 = vmatmul.f32.gmra.mxu0 %v1227
      %v1333 = vpop.f32.mrf.mxu0
      %v1334 = vadd.f32 0.0, %v1333
      %1335 = vmatmul.f32.gmra.mxu0 %v1228
      %v1336 = vpop.f32.mrf.mxu0
      %v1337 = vadd.f32 0.0, %v1336
      %1338 = vmatmul.f32.gmra.mxu0 %v1229
      %v1339 = vpop.f32.mrf.mxu0
      %v1340 = vadd.f32 0.0, %v1339
      %1341 = vmatmul.f32.gmra.mxu0 %v1230
      %v1342 = vpop.f32.mrf.mxu0
      %v1343 = vadd.f32 0.0, %v1342
      %1344 = vmatmul.f32.gmra.mxu0 %v1231
      %v1345 = vpop.f32.mrf.mxu0
      %v1346 = vadd.f32 0.0, %v1345
      %1347 = vmatmul.f32.gmra.mxu0 %v1232
      %v1348 = vpop.f32.mrf.mxu0
      %v1349 = vadd.f32 0.0, %v1348
      %1350 = vmatmul.f32.gmra.mxu0 %v1233
      %v1351 = vpop.f32.mrf.mxu0
      %v1352 = vadd.f32 0.0, %v1351
      %1353 = vmatmul.f32.gmra.mxu0 %v1234
      %v1354 = vpop.f32.mrf.mxu0
      %v1355 = vadd.f32 0.0, %v1354
      %1356 = vmatmul.f32.gmra.mxu0 %v1235
      %v1357 = vpop.f32.mrf.mxu0
      %v1358 = vadd.f32 0.0, %v1357
      %1359 = vmatmul.f32.gmra.mxu0 %v1236
      %v1360 = vpop.f32.mrf.mxu0
      %v1361 = vadd.f32 0.0, %v1360
      %1362 = vmatmul.f32.gmra.mxu0 %v1237
      %v1363 = vpop.f32.mrf.mxu0
      %v1364 = vadd.f32 0.0, %v1363
      %1365 = vmatmul.f32.gmra.mxu0 %v1238
      %v1366 = vpop.f32.mrf.mxu0
      %v1367 = vadd.f32 0.0, %v1366
      %1368 = vdwg.mxu0
      %v1369 = vadd.f32 %v1175, %v1274
      %v1370 = vadd.f32 %v1176, %v1277
      %v1371 = vadd.f32 %v1177, %v1280
      %v1372 = vadd.f32 %v1178, %v1283
      %v1373 = vadd.f32 %v1179, %v1286
      %v1374 = vadd.f32 %v1180, %v1289
      %v1375 = vadd.f32 %v1181, %v1292
      %v1376 = vadd.f32 %v1182, %v1295
      %v1377 = vadd.f32 %v1183, %v1298
      %v1378 = vadd.f32 %v1184, %v1301
      %v1379 = vadd.f32 %v1185, %v1304
      %v1380 = vadd.f32 %v1186, %v1307
      %v1381 = vadd.f32 %v1187, %v1310
      %v1382 = vadd.f32 %v1188, %v1313
      %v1383 = vadd.f32 %v1189, %v1316
      %v1384 = vadd.f32 %v1190, %v1319
      %v1385 = vadd.f32 %v1191, %v1322
      %v1386 = vadd.f32 %v1192, %v1325
      %v1387 = vadd.f32 %v1193, %v1328
      %v1388 = vadd.f32 %v1194, %v1331
      %v1389 = vadd.f32 %v1195, %v1334
      %v1390 = vadd.f32 %v1196, %v1337
      %v1391 = vadd.f32 %v1197, %v1340
      %v1392 = vadd.f32 %v1198, %v1343
      %v1393 = vadd.f32 %v1199, %v1346
      %v1394 = vadd.f32 %v1200, %v1349
      %v1395 = vadd.f32 %v1201, %v1352
      %v1396 = vadd.f32 %v1202, %v1355
      %v1397 = vadd.f32 %v1203, %v1358
      %v1398 = vadd.f32 %v1204, %v1361
      %v1399 = vadd.f32 %v1205, %v1364
      %v1400 = vadd.f32 %v1206, %v1367
      %v1401 = vld [vmem:[%s463 + $0x2] sm:$0xff]
      %v1402 = vld [vmem:[%s463 + $0xa] sm:$0xff]
      %v1403 = vld [vmem:[%s463 + $0x1a] sm:$0xff]
      %v1404 = vld [vmem:[%s463 + $0x22] sm:$0xff]
      %v1405 = vld [vmem:[%s463 + $0x32] sm:$0xff]
      %v1406 = vld [vmem:[%s463 + $0x3a] sm:$0xff]
      %v1407 = vld [vmem:[%s463 + $0x4a] sm:$0xff]
      %v1408 = vld [vmem:[%s463 + $0x52] sm:$0xff]
      %v1409 = vld [vmem:[%s463 + $0x62] sm:$0xff]
      %v1410 = vld [vmem:[%s463 + $0x6a] sm:$0xff]
      %v1411 = vld [vmem:[%s463 + $0x7a] sm:$0xff]
      %v1412 = vld [vmem:[%s463 + $0x82] sm:$0xff]
      %v1413 = vld [vmem:[%s463 + $0x92] sm:$0xff]
      %v1414 = vld [vmem:[%s463 + $0x9a] sm:$0xff]
      %v1415 = vld [vmem:[%s463 + $0xaa] sm:$0xff]
      %v1416 = vld [vmem:[%s463 + $0xb2] sm:$0xff]
      %v1417 = vld [vmem:[%s463 + $0xc2] sm:$0xff]
      %v1418 = vld [vmem:[%s463 + $0xca] sm:$0xff]
      %v1419 = vld [vmem:[%s463 + $0xda] sm:$0xff]
      %v1420 = vld [vmem:[%s463 + $0xe2] sm:$0xff]
      %v1421 = vld [vmem:[%s463 + $0xf2] sm:$0xff]
      %v1422 = vld [vmem:[%s463 + $0xfa] sm:$0xff]
      %v1423 = vld [vmem:[%s463 + $0x10a] sm:$0xff]
      %v1424 = vld [vmem:[%s463 + $0x112] sm:$0xff]
      %v1425 = vld [vmem:[%s463 + $0x122] sm:$0xff]
      %v1426 = vld [vmem:[%s463 + $0x12a] sm:$0xff]
      %v1427 = vld [vmem:[%s463 + $0x13a] sm:$0xff]
      %v1428 = vld [vmem:[%s463 + $0x142] sm:$0xff]
      %v1429 = vld [vmem:[%s463 + $0x152] sm:$0xff]
      %v1430 = vld [vmem:[%s463 + $0x15a] sm:$0xff]
      %v1431 = vld [vmem:[%s463 + $0x16a] sm:$0xff]
      %v1432 = vld [vmem:[%s463 + $0x172] sm:$0xff]
      %s1433 = scalar_lea.vmem %s4, 640
      %v1434 = vld [vmem:[%s1433] sm:$0xff]
      %v1435 = vld [vmem:[%s1433 + $0x8] sm:$0xff]
      %v1436 = vld [vmem:[%s1433 + $0x10] sm:$0xff]
      %v1437 = vld [vmem:[%s1433 + $0x18] sm:$0xff]
      %v1438 = vld [vmem:[%s1433 + $0x20] sm:$0xff]
      %v1439 = vld [vmem:[%s1433 + $0x28] sm:$0xff]
      %v1440 = vld [vmem:[%s1433 + $0x30] sm:$0xff]
      %v1441 = vld [vmem:[%s1433 + $0x38] sm:$0xff]
      %v1442 = vld [vmem:[%s1433 + $0x40] sm:$0xff]
      %v1443 = vld [vmem:[%s1433 + $0x48] sm:$0xff]
      %v1444 = vld [vmem:[%s1433 + $0x50] sm:$0xff]
      %v1445 = vld [vmem:[%s1433 + $0x58] sm:$0xff]
      %v1446 = vld [vmem:[%s1433 + $0x60] sm:$0xff]
      %v1447 = vld [vmem:[%s1433 + $0x68] sm:$0xff]
      %v1448 = vld [vmem:[%s1433 + $0x70] sm:$0xff]
      %v1449 = vld [vmem:[%s1433 + $0x78] sm:$0xff]
      %1450 = vmatpush.msra.mxu0 %v1449
      %1451 = vmatpush.msra.mxu0 %v1448
      %1452 = vmatpush.msra.mxu0 %v1447
      %1453 = vmatpush.msra.mxu0 %v1446
      %1454 = vmatpush.msra.mxu0 %v1445
      %1455 = vmatpush.msra.mxu0 %v1444
      %1456 = vmatpush.msra.mxu0 %v1443
      %1457 = vmatpush.msra.mxu0 %v1442
      %1458 = vmatpush.msra.mxu0 %v1441
      %1459 = vmatpush.msra.mxu0 %v1440
      %1460 = vmatpush.msra.mxu0 %v1439
      %1461 = vmatpush.msra.mxu0 %v1438
      %1462 = vmatpush.msra.mxu0 %v1437
      %1463 = vmatpush.msra.mxu0 %v1436
      %1464 = vmatpush.msra.mxu0 %v1435
      %1465 = vmatpush.msra.mxu0 %v1434
      %1466 = vmatmul.f32.gmra.mxu0 %v1401
      %v1467 = vpop.f32.mrf.mxu0
      %v1468 = vadd.f32 0.0, %v1467
      %1469 = vmatmul.f32.gmra.mxu0 %v1402
      %v1470 = vpop.f32.mrf.mxu0
      %v1471 = vadd.f32 0.0, %v1470
      %1472 = vmatmul.f32.gmra.mxu0 %v1403
      %v1473 = vpop.f32.mrf.mxu0
      %v1474 = vadd.f32 0.0, %v1473
      %1475 = vmatmul.f32.gmra.mxu0 %v1404
      %v1476 = vpop.f32.mrf.mxu0
      %v1477 = vadd.f32 0.0, %v1476
      %1478 = vmatmul.f32.gmra.mxu0 %v1405
      %v1479 = vpop.f32.mrf.mxu0
      %v1480 = vadd.f32 0.0, %v1479
      %1481 = vmatmul.f32.gmra.mxu0 %v1406
      %v1482 = vpop.f32.mrf.mxu0
      %v1483 = vadd.f32 0.0, %v1482
      %1484 = vmatmul.f32.gmra.mxu0 %v1407
      %v1485 = vpop.f32.mrf.mxu0
      %v1486 = vadd.f32 0.0, %v1485
      %1487 = vmatmul.f32.gmra.mxu0 %v1408
      %v1488 = vpop.f32.mrf.mxu0
      %v1489 = vadd.f32 0.0, %v1488
      %1490 = vmatmul.f32.gmra.mxu0 %v1409
      %v1491 = vpop.f32.mrf.mxu0
      %v1492 = vadd.f32 0.0, %v1491
      %1493 = vmatmul.f32.gmra.mxu0 %v1410
      %v1494 = vpop.f32.mrf.mxu0
      %v1495 = vadd.f32 0.0, %v1494
      %1496 = vmatmul.f32.gmra.mxu0 %v1411
      %v1497 = vpop.f32.mrf.mxu0
      %v1498 = vadd.f32 0.0, %v1497
      %1499 = vmatmul.f32.gmra.mxu0 %v1412
      %v1500 = vpop.f32.mrf.mxu0
      %v1501 = vadd.f32 0.0, %v1500
      %1502 = vmatmul.f32.gmra.mxu0 %v1413
      %v1503 = vpop.f32.mrf.mxu0
      %v1504 = vadd.f32 0.0, %v1503
      %1505 = vmatmul.f32.gmra.mxu0 %v1414
      %v1506 = vpop.f32.mrf.mxu0
      %v1507 = vadd.f32 0.0, %v1506
      %1508 = vmatmul.f32.gmra.mxu0 %v1415
      %v1509 = vpop.f32.mrf.mxu0
      %v1510 = vadd.f32 0.0, %v1509
      %1511 = vmatmul.f32.gmra.mxu0 %v1416
      %v1512 = vpop.f32.mrf.mxu0
      %v1513 = vadd.f32 0.0, %v1512
      %1514 = vmatmul.f32.gmra.mxu0 %v1417
      %v1515 = vpop.f32.mrf.mxu0
      %v1516 = vadd.f32 0.0, %v1515
      %1517 = vmatmul.f32.gmra.mxu0 %v1418
      %v1518 = vpop.f32.mrf.mxu0
      %v1519 = vadd.f32 0.0, %v1518
      %1520 = vmatmul.f32.gmra.mxu0 %v1419
      %v1521 = vpop.f32.mrf.mxu0
      %v1522 = vadd.f32 0.0, %v1521
      %1523 = vmatmul.f32.gmra.mxu0 %v1420
      %v1524 = vpop.f32.mrf.mxu0
      %v1525 = vadd.f32 0.0, %v1524
      %1526 = vmatmul.f32.gmra.mxu0 %v1421
      %v1527 = vpop.f32.mrf.mxu0
      %v1528 = vadd.f32 0.0, %v1527
      %1529 = vmatmul.f32.gmra.mxu0 %v1422
      %v1530 = vpop.f32.mrf.mxu0
      %v1531 = vadd.f32 0.0, %v1530
      %1532 = vmatmul.f32.gmra.mxu0 %v1423
      %v1533 = vpop.f32.mrf.mxu0
      %v1534 = vadd.f32 0.0, %v1533
      %1535 = vmatmul.f32.gmra.mxu0 %v1424
      %v1536 = vpop.f32.mrf.mxu0
      %v1537 = vadd.f32 0.0, %v1536
      %1538 = vmatmul.f32.gmra.mxu0 %v1425
      %v1539 = vpop.f32.mrf.mxu0
      %v1540 = vadd.f32 0.0, %v1539
      %1541 = vmatmul.f32.gmra.mxu0 %v1426
      %v1542 = vpop.f32.mrf.mxu0
      %v1543 = vadd.f32 0.0, %v1542
      %1544 = vmatmul.f32.gmra.mxu0 %v1427
      %v1545 = vpop.f32.mrf.mxu0
      %v1546 = vadd.f32 0.0, %v1545
      %1547 = vmatmul.f32.gmra.mxu0 %v1428
      %v1548 = vpop.f32.mrf.mxu0
      %v1549 = vadd.f32 0.0, %v1548
      %1550 = vmatmul.f32.gmra.mxu0 %v1429
      %v1551 = vpop.f32.mrf.mxu0
      %v1552 = vadd.f32 0.0, %v1551
      %1553 = vmatmul.f32.gmra.mxu0 %v1430
      %v1554 = vpop.f32.mrf.mxu0
      %v1555 = vadd.f32 0.0, %v1554
      %1556 = vmatmul.f32.gmra.mxu0 %v1431
      %v1557 = vpop.f32.mrf.mxu0
      %v1558 = vadd.f32 0.0, %v1557
      %1559 = vmatmul.f32.gmra.mxu0 %v1432
      %v1560 = vpop.f32.mrf.mxu0
      %v1561 = vadd.f32 0.0, %v1560
      %1562 = vdwg.mxu0
      %v1563 = vadd.f32 %v1369, %v1468
      %v1564 = vadd.f32 %v1370, %v1471
      %v1565 = vadd.f32 %v1371, %v1474
      %v1566 = vadd.f32 %v1372, %v1477
      %v1567 = vadd.f32 %v1373, %v1480
      %v1568 = vadd.f32 %v1374, %v1483
      %v1569 = vadd.f32 %v1375, %v1486
      %v1570 = vadd.f32 %v1376, %v1489
      %v1571 = vadd.f32 %v1377, %v1492
      %v1572 = vadd.f32 %v1378, %v1495
      %v1573 = vadd.f32 %v1379, %v1498
      %v1574 = vadd.f32 %v1380, %v1501
      %v1575 = vadd.f32 %v1381, %v1504
      %v1576 = vadd.f32 %v1382, %v1507
      %v1577 = vadd.f32 %v1383, %v1510
      %v1578 = vadd.f32 %v1384, %v1513
      %v1579 = vadd.f32 %v1385, %v1516
      %v1580 = vadd.f32 %v1386, %v1519
      %v1581 = vadd.f32 %v1387, %v1522
      %v1582 = vadd.f32 %v1388, %v1525
      %v1583 = vadd.f32 %v1389, %v1528
      %v1584 = vadd.f32 %v1390, %v1531
      %v1585 = vadd.f32 %v1391, %v1534
      %v1586 = vadd.f32 %v1392, %v1537
      %v1587 = vadd.f32 %v1393, %v1540
      %v1588 = vadd.f32 %v1394, %v1543
      %v1589 = vadd.f32 %v1395, %v1546
      %v1590 = vadd.f32 %v1396, %v1549
      %v1591 = vadd.f32 %v1397, %v1552
      %v1592 = vadd.f32 %v1398, %v1555
      %v1593 = vadd.f32 %v1399, %v1558
      %v1594 = vadd.f32 %v1400, %v1561
      %s1595 = scalar_lea.vmem [#allocation2], 48
      %v1596 = vld [vmem:[%s1595] sm:$0xff]
      %v1597 = vld [vmem:[%s1595 + $0x8] sm:$0xff]
      %v1598 = vld [vmem:[%s1595 + $0x18] sm:$0xff]
      %v1599 = vld [vmem:[%s1595 + $0x20] sm:$0xff]
      %v1600 = vld [vmem:[%s1595 + $0x30] sm:$0xff]
      %v1601 = vld [vmem:[%s1595 + $0x38] sm:$0xff]
      %v1602 = vld [vmem:[%s1595 + $0x48] sm:$0xff]
      %v1603 = vld [vmem:[%s1595 + $0x50] sm:$0xff]
      %v1604 = vld [vmem:[%s1595 + $0x60] sm:$0xff]
      %v1605 = vld [vmem:[%s1595 + $0x68] sm:$0xff]
      %v1606 = vld [vmem:[%s1595 + $0x78] sm:$0xff]
      %v1607 = vld [vmem:[%s1595 + $0x80] sm:$0xff]
      %v1608 = vld [vmem:[%s1595 + $0x90] sm:$0xff]
      %v1609 = vld [vmem:[%s1595 + $0x98] sm:$0xff]
      %v1610 = vld [vmem:[%s1595 + $0xa8] sm:$0xff]
      %v1611 = vld [vmem:[%s1595 + $0xb0] sm:$0xff]
      %v1612 = vld [vmem:[%s1595 + $0xc0] sm:$0xff]
      %v1613 = vld [vmem:[%s1595 + $0xc8] sm:$0xff]
      %v1614 = vld [vmem:[%s1595 + $0xd8] sm:$0xff]
      %v1615 = vld [vmem:[%s1595 + $0xe0] sm:$0xff]
      %v1616 = vld [vmem:[%s1595 + $0xf0] sm:$0xff]
      %v1617 = vld [vmem:[%s1595 + $0xf8] sm:$0xff]
      %v1618 = vld [vmem:[%s1595 + $0x108] sm:$0xff]
      %v1619 = vld [vmem:[%s1595 + $0x110] sm:$0xff]
      %v1620 = vld [vmem:[%s1595 + $0x120] sm:$0xff]
      %v1621 = vld [vmem:[%s1595 + $0x128] sm:$0xff]
      %v1622 = vld [vmem:[%s1595 + $0x138] sm:$0xff]
      %v1623 = vld [vmem:[%s1595 + $0x140] sm:$0xff]
      %v1624 = vld [vmem:[%s1595 + $0x150] sm:$0xff]
      %v1625 = vld [vmem:[%s1595 + $0x158] sm:$0xff]
      %v1626 = vld [vmem:[%s1595 + $0x168] sm:$0xff]
      %v1627 = vld [vmem:[%s1595 + $0x170] sm:$0xff]
      %s1628 = scalar_lea.vmem %s4, 768
      %v1629 = vld [vmem:[%s1628] sm:$0xff]
      %v1630 = vld [vmem:[%s1628 + $0x8] sm:$0xff]
      %v1631 = vld [vmem:[%s1628 + $0x10] sm:$0xff]
      %v1632 = vld [vmem:[%s1628 + $0x18] sm:$0xff]
      %v1633 = vld [vmem:[%s1628 + $0x20] sm:$0xff]
      %v1634 = vld [vmem:[%s1628 + $0x28] sm:$0xff]
      %v1635 = vld [vmem:[%s1628 + $0x30] sm:$0xff]
      %v1636 = vld [vmem:[%s1628 + $0x38] sm:$0xff]
      %v1637 = vld [vmem:[%s1628 + $0x40] sm:$0xff]
      %v1638 = vld [vmem:[%s1628 + $0x48] sm:$0xff]
      %v1639 = vld [vmem:[%s1628 + $0x50] sm:$0xff]
      %v1640 = vld [vmem:[%s1628 + $0x58] sm:$0xff]
      %v1641 = vld [vmem:[%s1628 + $0x60] sm:$0xff]
      %v1642 = vld [vmem:[%s1628 + $0x68] sm:$0xff]
      %v1643 = vld [vmem:[%s1628 + $0x70] sm:$0xff]
      %v1644 = vld [vmem:[%s1628 + $0x78] sm:$0xff]
      %1645 = vmatpush.msra.mxu0 %v1644
      %1646 = vmatpush.msra.mxu0 %v1643
      %1647 = vmatpush.msra.mxu0 %v1642
      %1648 = vmatpush.msra.mxu0 %v1641
      %1649 = vmatpush.msra.mxu0 %v1640
      %1650 = vmatpush.msra.mxu0 %v1639
      %1651 = vmatpush.msra.mxu0 %v1638
      %1652 = vmatpush.msra.mxu0 %v1637
      %1653 = vmatpush.msra.mxu0 %v1636
      %1654 = vmatpush.msra.mxu0 %v1635
      %1655 = vmatpush.msra.mxu0 %v1634
      %1656 = vmatpush.msra.mxu0 %v1633
      %1657 = vmatpush.msra.mxu0 %v1632
      %1658 = vmatpush.msra.mxu0 %v1631
      %1659 = vmatpush.msra.mxu0 %v1630
      %1660 = vmatpush.msra.mxu0 %v1629
      %1661 = vmatmul.f32.gmra.mxu0 %v1596
      %v1662 = vpop.f32.mrf.mxu0
      %v1663 = vadd.f32 0.0, %v1662
      %1664 = vmatmul.f32.gmra.mxu0 %v1597
      %v1665 = vpop.f32.mrf.mxu0
      %v1666 = vadd.f32 0.0, %v1665
      %1667 = vmatmul.f32.gmra.mxu0 %v1598
      %v1668 = vpop.f32.mrf.mxu0
      %v1669 = vadd.f32 0.0, %v1668
      %1670 = vmatmul.f32.gmra.mxu0 %v1599
      %v1671 = vpop.f32.mrf.mxu0
      %v1672 = vadd.f32 0.0, %v1671
      %1673 = vmatmul.f32.gmra.mxu0 %v1600
      %v1674 = vpop.f32.mrf.mxu0
      %v1675 = vadd.f32 0.0, %v1674
      %1676 = vmatmul.f32.gmra.mxu0 %v1601
      %v1677 = vpop.f32.mrf.mxu0
      %v1678 = vadd.f32 0.0, %v1677
      %1679 = vmatmul.f32.gmra.mxu0 %v1602
      %v1680 = vpop.f32.mrf.mxu0
      %v1681 = vadd.f32 0.0, %v1680
      %1682 = vmatmul.f32.gmra.mxu0 %v1603
      %v1683 = vpop.f32.mrf.mxu0
      %v1684 = vadd.f32 0.0, %v1683
      %1685 = vmatmul.f32.gmra.mxu0 %v1604
      %v1686 = vpop.f32.mrf.mxu0
      %v1687 = vadd.f32 0.0, %v1686
      %1688 = vmatmul.f32.gmra.mxu0 %v1605
      %v1689 = vpop.f32.mrf.mxu0
      %v1690 = vadd.f32 0.0, %v1689
      %1691 = vmatmul.f32.gmra.mxu0 %v1606
      %v1692 = vpop.f32.mrf.mxu0
      %v1693 = vadd.f32 0.0, %v1692
      %1694 = vmatmul.f32.gmra.mxu0 %v1607
      %v1695 = vpop.f32.mrf.mxu0
      %v1696 = vadd.f32 0.0, %v1695
      %1697 = vmatmul.f32.gmra.mxu0 %v1608
      %v1698 = vpop.f32.mrf.mxu0
      %v1699 = vadd.f32 0.0, %v1698
      %1700 = vmatmul.f32.gmra.mxu0 %v1609
      %v1701 = vpop.f32.mrf.mxu0
      %v1702 = vadd.f32 0.0, %v1701
      %1703 = vmatmul.f32.gmra.mxu0 %v1610
      %v1704 = vpop.f32.mrf.mxu0
      %v1705 = vadd.f32 0.0, %v1704
      %1706 = vmatmul.f32.gmra.mxu0 %v1611
      %v1707 = vpop.f32.mrf.mxu0
      %v1708 = vadd.f32 0.0, %v1707
      %1709 = vmatmul.f32.gmra.mxu0 %v1612
      %v1710 = vpop.f32.mrf.mxu0
      %v1711 = vadd.f32 0.0, %v1710
      %1712 = vmatmul.f32.gmra.mxu0 %v1613
      %v1713 = vpop.f32.mrf.mxu0
      %v1714 = vadd.f32 0.0, %v1713
      %1715 = vmatmul.f32.gmra.mxu0 %v1614
      %v1716 = vpop.f32.mrf.mxu0
      %v1717 = vadd.f32 0.0, %v1716
      %1718 = vmatmul.f32.gmra.mxu0 %v1615
      %v1719 = vpop.f32.mrf.mxu0
      %v1720 = vadd.f32 0.0, %v1719
      %1721 = vmatmul.f32.gmra.mxu0 %v1616
      %v1722 = vpop.f32.mrf.mxu0
      %v1723 = vadd.f32 0.0, %v1722
      %1724 = vmatmul.f32.gmra.mxu0 %v1617
      %v1725 = vpop.f32.mrf.mxu0
      %v1726 = vadd.f32 0.0, %v1725
      %1727 = vmatmul.f32.gmra.mxu0 %v1618
      %v1728 = vpop.f32.mrf.mxu0
      %v1729 = vadd.f32 0.0, %v1728
      %1730 = vmatmul.f32.gmra.mxu0 %v1619
      %v1731 = vpop.f32.mrf.mxu0
      %v1732 = vadd.f32 0.0, %v1731
      %1733 = vmatmul.f32.gmra.mxu0 %v1620
      %v1734 = vpop.f32.mrf.mxu0
      %v1735 = vadd.f32 0.0, %v1734
      %1736 = vmatmul.f32.gmra.mxu0 %v1621
      %v1737 = vpop.f32.mrf.mxu0
      %v1738 = vadd.f32 0.0, %v1737
      %1739 = vmatmul.f32.gmra.mxu0 %v1622
      %v1740 = vpop.f32.mrf.mxu0
      %v1741 = vadd.f32 0.0, %v1740
      %1742 = vmatmul.f32.gmra.mxu0 %v1623
      %v1743 = vpop.f32.mrf.mxu0
      %v1744 = vadd.f32 0.0, %v1743
      %1745 = vmatmul.f32.gmra.mxu0 %v1624
      %v1746 = vpop.f32.mrf.mxu0
      %v1747 = vadd.f32 0.0, %v1746
      %1748 = vmatmul.f32.gmra.mxu0 %v1625
      %v1749 = vpop.f32.mrf.mxu0
      %v1750 = vadd.f32 0.0, %v1749
      %1751 = vmatmul.f32.gmra.mxu0 %v1626
      %v1752 = vpop.f32.mrf.mxu0
      %v1753 = vadd.f32 0.0, %v1752
      %1754 = vmatmul.f32.gmra.mxu0 %v1627
      %v1755 = vpop.f32.mrf.mxu0
      %v1756 = vadd.f32 0.0, %v1755
      %1757 = vdwg.mxu0
      %v1758 = vadd.f32 %v1563, %v1663
      %v1759 = vadd.f32 %v1564, %v1666
      %v1760 = vadd.f32 %v1565, %v1669
      %v1761 = vadd.f32 %v1566, %v1672
      %v1762 = vadd.f32 %v1567, %v1675
      %v1763 = vadd.f32 %v1568, %v1678
      %v1764 = vadd.f32 %v1569, %v1681
      %v1765 = vadd.f32 %v1570, %v1684
      %v1766 = vadd.f32 %v1571, %v1687
      %v1767 = vadd.f32 %v1572, %v1690
      %v1768 = vadd.f32 %v1573, %v1693
      %v1769 = vadd.f32 %v1574, %v1696
      %v1770 = vadd.f32 %v1575, %v1699
      %v1771 = vadd.f32 %v1576, %v1702
      %v1772 = vadd.f32 %v1577, %v1705
      %v1773 = vadd.f32 %v1578, %v1708
      %v1774 = vadd.f32 %v1579, %v1711
      %v1775 = vadd.f32 %v1580, %v1714
      %v1776 = vadd.f32 %v1581, %v1717
      %v1777 = vadd.f32 %v1582, %v1720
      %v1778 = vadd.f32 %v1583, %v1723
      %v1779 = vadd.f32 %v1584, %v1726
      %v1780 = vadd.f32 %v1585, %v1729
      %v1781 = vadd.f32 %v1586, %v1732
      %v1782 = vadd.f32 %v1587, %v1735
      %v1783 = vadd.f32 %v1588, %v1738
      %v1784 = vadd.f32 %v1589, %v1741
      %v1785 = vadd.f32 %v1590, %v1744
      %v1786 = vadd.f32 %v1591, %v1747
      %v1787 = vadd.f32 %v1592, %v1750
      %v1788 = vadd.f32 %v1593, %v1753
      %v1789 = vadd.f32 %v1594, %v1756
      %v1790 = vld [vmem:[%s1595 + $0x1] sm:$0xff]
      %v1791 = vld [vmem:[%s1595 + $0x9] sm:$0xff]
      %v1792 = vld [vmem:[%s1595 + $0x19] sm:$0xff]
      %v1793 = vld [vmem:[%s1595 + $0x21] sm:$0xff]
      %v1794 = vld [vmem:[%s1595 + $0x31] sm:$0xff]
      %v1795 = vld [vmem:[%s1595 + $0x39] sm:$0xff]
      %v1796 = vld [vmem:[%s1595 + $0x49] sm:$0xff]
      %v1797 = vld [vmem:[%s1595 + $0x51] sm:$0xff]
      %v1798 = vld [vmem:[%s1595 + $0x61] sm:$0xff]
      %v1799 = vld [vmem:[%s1595 + $0x69] sm:$0xff]
      %v1800 = vld [vmem:[%s1595 + $0x79] sm:$0xff]
      %v1801 = vld [vmem:[%s1595 + $0x81] sm:$0xff]
      %v1802 = vld [vmem:[%s1595 + $0x91] sm:$0xff]
      %v1803 = vld [vmem:[%s1595 + $0x99] sm:$0xff]
      %v1804 = vld [vmem:[%s1595 + $0xa9] sm:$0xff]
      %v1805 = vld [vmem:[%s1595 + $0xb1] sm:$0xff]
      %v1806 = vld [vmem:[%s1595 + $0xc1] sm:$0xff]
      %v1807 = vld [vmem:[%s1595 + $0xc9] sm:$0xff]
      %v1808 = vld [vmem:[%s1595 + $0xd9] sm:$0xff]
      %v1809 = vld [vmem:[%s1595 + $0xe1] sm:$0xff]
      %v1810 = vld [vmem:[%s1595 + $0xf1] sm:$0xff]
      %v1811 = vld [vmem:[%s1595 + $0xf9] sm:$0xff]
      %v1812 = vld [vmem:[%s1595 + $0x109] sm:$0xff]
      %v1813 = vld [vmem:[%s1595 + $0x111] sm:$0xff]
      %v1814 = vld [vmem:[%s1595 + $0x121] sm:$0xff]
      %v1815 = vld [vmem:[%s1595 + $0x129] sm:$0xff]
      %v1816 = vld [vmem:[%s1595 + $0x139] sm:$0xff]
      %v1817 = vld [vmem:[%s1595 + $0x141] sm:$0xff]
      %v1818 = vld [vmem:[%s1595 + $0x151] sm:$0xff]
      %v1819 = vld [vmem:[%s1595 + $0x159] sm:$0xff]
      %v1820 = vld [vmem:[%s1595 + $0x169] sm:$0xff]
      %v1821 = vld [vmem:[%s1595 + $0x171] sm:$0xff]
      %s1822 = scalar_lea.vmem %s4, 896
      %v1823 = vld [vmem:[%s1822] sm:$0xff]
      %v1824 = vld [vmem:[%s1822 + $0x8] sm:$0xff]
      %v1825 = vld [vmem:[%s1822 + $0x10] sm:$0xff]
      %v1826 = vld [vmem:[%s1822 + $0x18] sm:$0xff]
      %v1827 = vld [vmem:[%s1822 + $0x20] sm:$0xff]
      %v1828 = vld [vmem:[%s1822 + $0x28] sm:$0xff]
      %v1829 = vld [vmem:[%s1822 + $0x30] sm:$0xff]
      %v1830 = vld [vmem:[%s1822 + $0x38] sm:$0xff]
      %v1831 = vld [vmem:[%s1822 + $0x40] sm:$0xff]
      %v1832 = vld [vmem:[%s1822 + $0x48] sm:$0xff]
      %v1833 = vld [vmem:[%s1822 + $0x50] sm:$0xff]
      %v1834 = vld [vmem:[%s1822 + $0x58] sm:$0xff]
      %v1835 = vld [vmem:[%s1822 + $0x60] sm:$0xff]
      %v1836 = vld [vmem:[%s1822 + $0x68] sm:$0xff]
      %v1837 = vld [vmem:[%s1822 + $0x70] sm:$0xff]
      %v1838 = vld [vmem:[%s1822 + $0x78] sm:$0xff]
      %1839 = vmatpush.msra.mxu0 %v1838
      %1840 = vmatpush.msra.mxu0 %v1837
      %1841 = vmatpush.msra.mxu0 %v1836
      %1842 = vmatpush.msra.mxu0 %v1835
      %1843 = vmatpush.msra.mxu0 %v1834
      %1844 = vmatpush.msra.mxu0 %v1833
      %1845 = vmatpush.msra.mxu0 %v1832
      %1846 = vmatpush.msra.mxu0 %v1831
      %1847 = vmatpush.msra.mxu0 %v1830
      %1848 = vmatpush.msra.mxu0 %v1829
      %1849 = vmatpush.msra.mxu0 %v1828
      %1850 = vmatpush.msra.mxu0 %v1827
      %1851 = vmatpush.msra.mxu0 %v1826
      %1852 = vmatpush.msra.mxu0 %v1825
      %1853 = vmatpush.msra.mxu0 %v1824
      %1854 = vmatpush.msra.mxu0 %v1823
      %1855 = vmatmul.f32.gmra.mxu0 %v1790
      %v1856 = vpop.f32.mrf.mxu0
      %v1857 = vadd.f32 0.0, %v1856
      %1858 = vmatmul.f32.gmra.mxu0 %v1791
      %v1859 = vpop.f32.mrf.mxu0
      %v1860 = vadd.f32 0.0, %v1859
      %1861 = vmatmul.f32.gmra.mxu0 %v1792
      %v1862 = vpop.f32.mrf.mxu0
      %v1863 = vadd.f32 0.0, %v1862
      %1864 = vmatmul.f32.gmra.mxu0 %v1793
      %v1865 = vpop.f32.mrf.mxu0
      %v1866 = vadd.f32 0.0, %v1865
      %1867 = vmatmul.f32.gmra.mxu0 %v1794
      %v1868 = vpop.f32.mrf.mxu0
      %v1869 = vadd.f32 0.0, %v1868
      %1870 = vmatmul.f32.gmra.mxu0 %v1795
      %v1871 = vpop.f32.mrf.mxu0
      %v1872 = vadd.f32 0.0, %v1871
      %1873 = vmatmul.f32.gmra.mxu0 %v1796
      %v1874 = vpop.f32.mrf.mxu0
      %v1875 = vadd.f32 0.0, %v1874
      %1876 = vmatmul.f32.gmra.mxu0 %v1797
      %v1877 = vpop.f32.mrf.mxu0
      %v1878 = vadd.f32 0.0, %v1877
      %1879 = vmatmul.f32.gmra.mxu0 %v1798
      %v1880 = vpop.f32.mrf.mxu0
      %v1881 = vadd.f32 0.0, %v1880
      %1882 = vmatmul.f32.gmra.mxu0 %v1799
      %v1883 = vpop.f32.mrf.mxu0
      %v1884 = vadd.f32 0.0, %v1883
      %1885 = vmatmul.f32.gmra.mxu0 %v1800
      %v1886 = vpop.f32.mrf.mxu0
      %v1887 = vadd.f32 0.0, %v1886
      %1888 = vmatmul.f32.gmra.mxu0 %v1801
      %v1889 = vpop.f32.mrf.mxu0
      %v1890 = vadd.f32 0.0, %v1889
      %1891 = vmatmul.f32.gmra.mxu0 %v1802
      %v1892 = vpop.f32.mrf.mxu0
      %v1893 = vadd.f32 0.0, %v1892
      %1894 = vmatmul.f32.gmra.mxu0 %v1803
      %v1895 = vpop.f32.mrf.mxu0
      %v1896 = vadd.f32 0.0, %v1895
      %1897 = vmatmul.f32.gmra.mxu0 %v1804
      %v1898 = vpop.f32.mrf.mxu0
      %v1899 = vadd.f32 0.0, %v1898
      %1900 = vmatmul.f32.gmra.mxu0 %v1805
      %v1901 = vpop.f32.mrf.mxu0
      %v1902 = vadd.f32 0.0, %v1901
      %1903 = vmatmul.f32.gmra.mxu0 %v1806
      %v1904 = vpop.f32.mrf.mxu0
      %v1905 = vadd.f32 0.0, %v1904
      %1906 = vmatmul.f32.gmra.mxu0 %v1807
      %v1907 = vpop.f32.mrf.mxu0
      %v1908 = vadd.f32 0.0, %v1907
      %1909 = vmatmul.f32.gmra.mxu0 %v1808
      %v1910 = vpop.f32.mrf.mxu0
      %v1911 = vadd.f32 0.0, %v1910
      %1912 = vmatmul.f32.gmra.mxu0 %v1809
      %v1913 = vpop.f32.mrf.mxu0
      %v1914 = vadd.f32 0.0, %v1913
      %1915 = vmatmul.f32.gmra.mxu0 %v1810
      %v1916 = vpop.f32.mrf.mxu0
      %v1917 = vadd.f32 0.0, %v1916
      %1918 = vmatmul.f32.gmra.mxu0 %v1811
      %v1919 = vpop.f32.mrf.mxu0
      %v1920 = vadd.f32 0.0, %v1919
      %1921 = vmatmul.f32.gmra.mxu0 %v1812
      %v1922 = vpop.f32.mrf.mxu0
      %v1923 = vadd.f32 0.0, %v1922
      %1924 = vmatmul.f32.gmra.mxu0 %v1813
      %v1925 = vpop.f32.mrf.mxu0
      %v1926 = vadd.f32 0.0, %v1925
      %1927 = vmatmul.f32.gmra.mxu0 %v1814
      %v1928 = vpop.f32.mrf.mxu0
      %v1929 = vadd.f32 0.0, %v1928
      %1930 = vmatmul.f32.gmra.mxu0 %v1815
      %v1931 = vpop.f32.mrf.mxu0
      %v1932 = vadd.f32 0.0, %v1931
      %1933 = vmatmul.f32.gmra.mxu0 %v1816
      %v1934 = vpop.f32.mrf.mxu0
      %v1935 = vadd.f32 0.0, %v1934
      %1936 = vmatmul.f32.gmra.mxu0 %v1817
      %v1937 = vpop.f32.mrf.mxu0
      %v1938 = vadd.f32 0.0, %v1937
      %1939 = vmatmul.f32.gmra.mxu0 %v1818
      %v1940 = vpop.f32.mrf.mxu0
      %v1941 = vadd.f32 0.0, %v1940
      %1942 = vmatmul.f32.gmra.mxu0 %v1819
      %v1943 = vpop.f32.mrf.mxu0
      %v1944 = vadd.f32 0.0, %v1943
      %1945 = vmatmul.f32.gmra.mxu0 %v1820
      %v1946 = vpop.f32.mrf.mxu0
      %v1947 = vadd.f32 0.0, %v1946
      %1948 = vmatmul.f32.gmra.mxu0 %v1821
      %v1949 = vpop.f32.mrf.mxu0
      %v1950 = vadd.f32 0.0, %v1949
      %1951 = vdwg.mxu0
      %v1952 = vadd.f32 %v1758, %v1857
      %v1953 = vadd.f32 %v1759, %v1860
      %v1954 = vadd.f32 %v1760, %v1863
      %v1955 = vadd.f32 %v1761, %v1866
      %v1956 = vadd.f32 %v1762, %v1869
      %v1957 = vadd.f32 %v1763, %v1872
      %v1958 = vadd.f32 %v1764, %v1875
      %v1959 = vadd.f32 %v1765, %v1878
      %v1960 = vadd.f32 %v1766, %v1881
      %v1961 = vadd.f32 %v1767, %v1884
      %v1962 = vadd.f32 %v1768, %v1887
      %v1963 = vadd.f32 %v1769, %v1890
      %v1964 = vadd.f32 %v1770, %v1893
      %v1965 = vadd.f32 %v1771, %v1896
      %v1966 = vadd.f32 %v1772, %v1899
      %v1967 = vadd.f32 %v1773, %v1902
      %v1968 = vadd.f32 %v1774, %v1905
      %v1969 = vadd.f32 %v1775, %v1908
      %v1970 = vadd.f32 %v1776, %v1911
      %v1971 = vadd.f32 %v1777, %v1914
      %v1972 = vadd.f32 %v1778, %v1917
      %v1973 = vadd.f32 %v1779, %v1920
      %v1974 = vadd.f32 %v1780, %v1923
      %v1975 = vadd.f32 %v1781, %v1926
      %v1976 = vadd.f32 %v1782, %v1929
      %v1977 = vadd.f32 %v1783, %v1932
      %v1978 = vadd.f32 %v1784, %v1935
      %v1979 = vadd.f32 %v1785, %v1938
      %v1980 = vadd.f32 %v1786, %v1941
      %v1981 = vadd.f32 %v1787, %v1944
      %v1982 = vadd.f32 %v1788, %v1947
      %v1983 = vadd.f32 %v1789, %v1950
      %v1984 = vld [vmem:[%s1595 + $0x2] sm:$0xff]
      %v1985 = vld [vmem:[%s1595 + $0xa] sm:$0xff]
      %v1986 = vld [vmem:[%s1595 + $0x1a] sm:$0xff]
      %v1987 = vld [vmem:[%s1595 + $0x22] sm:$0xff]
      %v1988 = vld [vmem:[%s1595 + $0x32] sm:$0xff]
      %v1989 = vld [vmem:[%s1595 + $0x3a] sm:$0xff]
      %v1990 = vld [vmem:[%s1595 + $0x4a] sm:$0xff]
      %v1991 = vld [vmem:[%s1595 + $0x52] sm:$0xff]
      %v1992 = vld [vmem:[%s1595 + $0x62] sm:$0xff]
      %v1993 = vld [vmem:[%s1595 + $0x6a] sm:$0xff]
      %v1994 = vld [vmem:[%s1595 + $0x7a] sm:$0xff]
      %v1995 = vld [vmem:[%s1595 + $0x82] sm:$0xff]
      %v1996 = vld [vmem:[%s1595 + $0x92] sm:$0xff]
      %v1997 = vld [vmem:[%s1595 + $0x9a] sm:$0xff]
      %v1998 = vld [vmem:[%s1595 + $0xaa] sm:$0xff]
      %v1999 = vld [vmem:[%s1595 + $0xb2] sm:$0xff]
      %v2000 = vld [vmem:[%s1595 + $0xc2] sm:$0xff]
      %v2001 = vld [vmem:[%s1595 + $0xca] sm:$0xff]
      %v2002 = vld [vmem:[%s1595 + $0xda] sm:$0xff]
      %v2003 = vld [vmem:[%s1595 + $0xe2] sm:$0xff]
      %v2004 = vld [vmem:[%s1595 + $0xf2] sm:$0xff]
      %v2005 = vld [vmem:[%s1595 + $0xfa] sm:$0xff]
      %v2006 = vld [vmem:[%s1595 + $0x10a] sm:$0xff]
      %v2007 = vld [vmem:[%s1595 + $0x112] sm:$0xff]
      %v2008 = vld [vmem:[%s1595 + $0x122] sm:$0xff]
      %v2009 = vld [vmem:[%s1595 + $0x12a] sm:$0xff]
      %v2010 = vld [vmem:[%s1595 + $0x13a] sm:$0xff]
      %v2011 = vld [vmem:[%s1595 + $0x142] sm:$0xff]
      %v2012 = vld [vmem:[%s1595 + $0x152] sm:$0xff]
      %v2013 = vld [vmem:[%s1595 + $0x15a] sm:$0xff]
      %v2014 = vld [vmem:[%s1595 + $0x16a] sm:$0xff]
      %v2015 = vld [vmem:[%s1595 + $0x172] sm:$0xff]
      %s2016 = scalar_lea.vmem %s4, 1024
      %v2017 = vld [vmem:[%s2016] sm:$0xff]
      %v2018 = vld [vmem:[%s2016 + $0x8] sm:$0xff]
      %v2019 = vld [vmem:[%s2016 + $0x10] sm:$0xff]
      %v2020 = vld [vmem:[%s2016 + $0x18] sm:$0xff]
      %v2021 = vld [vmem:[%s2016 + $0x20] sm:$0xff]
      %v2022 = vld [vmem:[%s2016 + $0x28] sm:$0xff]
      %v2023 = vld [vmem:[%s2016 + $0x30] sm:$0xff]
      %v2024 = vld [vmem:[%s2016 + $0x38] sm:$0xff]
      %v2025 = vld [vmem:[%s2016 + $0x40] sm:$0xff]
      %v2026 = vld [vmem:[%s2016 + $0x48] sm:$0xff]
      %v2027 = vld [vmem:[%s2016 + $0x50] sm:$0xff]
      %v2028 = vld [vmem:[%s2016 + $0x58] sm:$0xff]
      %v2029 = vld [vmem:[%s2016 + $0x60] sm:$0xff]
      %v2030 = vld [vmem:[%s2016 + $0x68] sm:$0xff]
      %v2031 = vld [vmem:[%s2016 + $0x70] sm:$0xff]
      %v2032 = vld [vmem:[%s2016 + $0x78] sm:$0xff]
      %2033 = vmatpush.msra.mxu0 %v2032
      %2034 = vmatpush.msra.mxu0 %v2031
      %2035 = vmatpush.msra.mxu0 %v2030
      %2036 = vmatpush.msra.mxu0 %v2029
      %2037 = vmatpush.msra.mxu0 %v2028
      %2038 = vmatpush.msra.mxu0 %v2027
      %2039 = vmatpush.msra.mxu0 %v2026
      %2040 = vmatpush.msra.mxu0 %v2025
      %2041 = vmatpush.msra.mxu0 %v2024
      %2042 = vmatpush.msra.mxu0 %v2023
      %2043 = vmatpush.msra.mxu0 %v2022
      %2044 = vmatpush.msra.mxu0 %v2021
      %2045 = vmatpush.msra.mxu0 %v2020
      %2046 = vmatpush.msra.mxu0 %v2019
      %2047 = vmatpush.msra.mxu0 %v2018
      %2048 = vmatpush.msra.mxu0 %v2017
      %2049 = vmatmul.f32.gmra.mxu0 %v1984
      %v2050 = vpop.f32.mrf.mxu0
      %v2051 = vadd.f32 0.0, %v2050
      %2052 = vmatmul.f32.gmra.mxu0 %v1985
      %v2053 = vpop.f32.mrf.mxu0
      %v2054 = vadd.f32 0.0, %v2053
      %2055 = vmatmul.f32.gmra.mxu0 %v1986
      %v2056 = vpop.f32.mrf.mxu0
      %v2057 = vadd.f32 0.0, %v2056
      %2058 = vmatmul.f32.gmra.mxu0 %v1987
      %v2059 = vpop.f32.mrf.mxu0
      %v2060 = vadd.f32 0.0, %v2059
      %2061 = vmatmul.f32.gmra.mxu0 %v1988
      %v2062 = vpop.f32.mrf.mxu0
      %v2063 = vadd.f32 0.0, %v2062
      %2064 = vmatmul.f32.gmra.mxu0 %v1989
      %v2065 = vpop.f32.mrf.mxu0
      %v2066 = vadd.f32 0.0, %v2065
      %2067 = vmatmul.f32.gmra.mxu0 %v1990
      %v2068 = vpop.f32.mrf.mxu0
      %v2069 = vadd.f32 0.0, %v2068
      %2070 = vmatmul.f32.gmra.mxu0 %v1991
      %v2071 = vpop.f32.mrf.mxu0
      %v2072 = vadd.f32 0.0, %v2071
      %2073 = vmatmul.f32.gmra.mxu0 %v1992
      %v2074 = vpop.f32.mrf.mxu0
      %v2075 = vadd.f32 0.0, %v2074
      %2076 = vmatmul.f32.gmra.mxu0 %v1993
      %v2077 = vpop.f32.mrf.mxu0
      %v2078 = vadd.f32 0.0, %v2077
      %2079 = vmatmul.f32.gmra.mxu0 %v1994
      %v2080 = vpop.f32.mrf.mxu0
      %v2081 = vadd.f32 0.0, %v2080
      %2082 = vmatmul.f32.gmra.mxu0 %v1995
      %v2083 = vpop.f32.mrf.mxu0
      %v2084 = vadd.f32 0.0, %v2083
      %2085 = vmatmul.f32.gmra.mxu0 %v1996
      %v2086 = vpop.f32.mrf.mxu0
      %v2087 = vadd.f32 0.0, %v2086
      %2088 = vmatmul.f32.gmra.mxu0 %v1997
      %v2089 = vpop.f32.mrf.mxu0
      %v2090 = vadd.f32 0.0, %v2089
      %2091 = vmatmul.f32.gmra.mxu0 %v1998
      %v2092 = vpop.f32.mrf.mxu0
      %v2093 = vadd.f32 0.0, %v2092
      %2094 = vmatmul.f32.gmra.mxu0 %v1999
      %v2095 = vpop.f32.mrf.mxu0
      %v2096 = vadd.f32 0.0, %v2095
      %2097 = vmatmul.f32.gmra.mxu0 %v2000
      %v2098 = vpop.f32.mrf.mxu0
      %v2099 = vadd.f32 0.0, %v2098
      %2100 = vmatmul.f32.gmra.mxu0 %v2001
      %v2101 = vpop.f32.mrf.mxu0
      %v2102 = vadd.f32 0.0, %v2101
      %2103 = vmatmul.f32.gmra.mxu0 %v2002
      %v2104 = vpop.f32.mrf.mxu0
      %v2105 = vadd.f32 0.0, %v2104
      %2106 = vmatmul.f32.gmra.mxu0 %v2003
      %v2107 = vpop.f32.mrf.mxu0
      %v2108 = vadd.f32 0.0, %v2107
      %2109 = vmatmul.f32.gmra.mxu0 %v2004
      %v2110 = vpop.f32.mrf.mxu0
      %v2111 = vadd.f32 0.0, %v2110
      %2112 = vmatmul.f32.gmra.mxu0 %v2005
      %v2113 = vpop.f32.mrf.mxu0
      %v2114 = vadd.f32 0.0, %v2113
      %2115 = vmatmul.f32.gmra.mxu0 %v2006
      %v2116 = vpop.f32.mrf.mxu0
      %v2117 = vadd.f32 0.0, %v2116
      %2118 = vmatmul.f32.gmra.mxu0 %v2007
      %v2119 = vpop.f32.mrf.mxu0
      %v2120 = vadd.f32 0.0, %v2119
      %2121 = vmatmul.f32.gmra.mxu0 %v2008
      %v2122 = vpop.f32.mrf.mxu0
      %v2123 = vadd.f32 0.0, %v2122
      %2124 = vmatmul.f32.gmra.mxu0 %v2009
      %v2125 = vpop.f32.mrf.mxu0
      %v2126 = vadd.f32 0.0, %v2125
      %2127 = vmatmul.f32.gmra.mxu0 %v2010
      %v2128 = vpop.f32.mrf.mxu0
      %v2129 = vadd.f32 0.0, %v2128
      %2130 = vmatmul.f32.gmra.mxu0 %v2011
      %v2131 = vpop.f32.mrf.mxu0
      %v2132 = vadd.f32 0.0, %v2131
      %2133 = vmatmul.f32.gmra.mxu0 %v2012
      %v2134 = vpop.f32.mrf.mxu0
      %v2135 = vadd.f32 0.0, %v2134
      %2136 = vmatmul.f32.gmra.mxu0 %v2013
      %v2137 = vpop.f32.mrf.mxu0
      %v2138 = vadd.f32 0.0, %v2137
      %2139 = vmatmul.f32.gmra.mxu0 %v2014
      %v2140 = vpop.f32.mrf.mxu0
      %v2141 = vadd.f32 0.0, %v2140
      %2142 = vmatmul.f32.gmra.mxu0 %v2015
      %v2143 = vpop.f32.mrf.mxu0
      %v2144 = vadd.f32 0.0, %v2143
      %2145 = vdwg.mxu0
      %v2146 = vadd.f32 %v1952, %v2051
      %v2147 = vadd.f32 %v1953, %v2054
      %v2148 = vadd.f32 %v1954, %v2057
      %v2149 = vadd.f32 %v1955, %v2060
      %v2150 = vadd.f32 %v1956, %v2063
      %v2151 = vadd.f32 %v1957, %v2066
      %v2152 = vadd.f32 %v1958, %v2069
      %v2153 = vadd.f32 %v1959, %v2072
      %v2154 = vadd.f32 %v1960, %v2075
      %v2155 = vadd.f32 %v1961, %v2078
      %v2156 = vadd.f32 %v1962, %v2081
      %v2157 = vadd.f32 %v1963, %v2084
      %v2158 = vadd.f32 %v1964, %v2087
      %v2159 = vadd.f32 %v1965, %v2090
      %v2160 = vadd.f32 %v1966, %v2093
      %v2161 = vadd.f32 %v1967, %v2096
      %v2162 = vadd.f32 %v1968, %v2099
      %v2163 = vadd.f32 %v1969, %v2102
      %v2164 = vadd.f32 %v1970, %v2105
      %v2165 = vadd.f32 %v1971, %v2108
      %v2166 = vadd.f32 %v1972, %v2111
      %v2167 = vadd.f32 %v1973, %v2114
      %v2168 = vadd.f32 %v1974, %v2117
      %v2169 = vadd.f32 %v1975, %v2120
      %v2170 = vadd.f32 %v1976, %v2123
      %v2171 = vadd.f32 %v1977, %v2126
      %v2172 = vadd.f32 %v1978, %v2129
      %v2173 = vadd.f32 %v1979, %v2132
      %v2174 = vadd.f32 %v1980, %v2135
      %v2175 = vadd.f32 %v1981, %v2138
      %v2176 = vadd.f32 %v1982, %v2141
      %v2177 = vadd.f32 %v1983, %v2144
      %2178 = vst [vmem:[%s249] sm:$0xff] %v2146
      %2179 = vst [vmem:[%s249 + $0x8] sm:$0xff] %v2147
      %2180 = vst [vmem:[%s249 + $0x10] sm:$0xff] %v2148
      %2181 = vst [vmem:[%s249 + $0x18] sm:$0xff] %v2149
      %2182 = vst [vmem:[%s249 + $0x20] sm:$0xff] %v2150
      %2183 = vst [vmem:[%s249 + $0x28] sm:$0xff] %v2151
      %2184 = vst [vmem:[%s249 + $0x30] sm:$0xff] %v2152
      %2185 = vst [vmem:[%s249 + $0x38] sm:$0xff] %v2153
      %2186 = vst [vmem:[%s249 + $0x40] sm:$0xff] %v2154
      %2187 = vst [vmem:[%s249 + $0x48] sm:$0xff] %v2155
      %2188 = vst [vmem:[%s249 + $0x50] sm:$0xff] %v2156
      %2189 = vst [vmem:[%s249 + $0x58] sm:$0xff] %v2157
      %2190 = vst [vmem:[%s249 + $0x60] sm:$0xff] %v2158
      %2191 = vst [vmem:[%s249 + $0x68] sm:$0xff] %v2159
      %2192 = vst [vmem:[%s249 + $0x70] sm:$0xff] %v2160
      %2193 = vst [vmem:[%s249 + $0x78] sm:$0xff] %v2161
      %2194 = vst [vmem:[%s249 + $0x80] sm:$0xff] %v2162
      %2195 = vst [vmem:[%s249 + $0x88] sm:$0xff] %v2163
      %2196 = vst [vmem:[%s249 + $0x90] sm:$0xff] %v2164
      %2197 = vst [vmem:[%s249 + $0x98] sm:$0xff] %v2165
      %2198 = vst [vmem:[%s249 + $0xa0] sm:$0xff] %v2166
      %2199 = vst [vmem:[%s249 + $0xa8] sm:$0xff] %v2167
      %2200 = vst [vmem:[%s249 + $0xb0] sm:$0xff] %v2168
      %2201 = vst [vmem:[%s249 + $0xb8] sm:$0xff] %v2169
      %2202 = vst [vmem:[%s249 + $0xc0] sm:$0xff] %v2170
      %2203 = vst [vmem:[%s249 + $0xc8] sm:$0xff] %v2171
      %2204 = vst [vmem:[%s249 + $0xd0] sm:$0xff] %v2172
      %2205 = vst [vmem:[%s249 + $0xd8] sm:$0xff] %v2173
      %2206 = vst [vmem:[%s249 + $0xe0] sm:$0xff] %v2174
      %2207 = vst [vmem:[%s249 + $0xe8] sm:$0xff] %v2175
      %2208 = vst [vmem:[%s249 + $0xf0] sm:$0xff] %v2176
      %2209 = vst [vmem:[%s249 + $0xf8] sm:$0xff] %v2177
      %v2210 = vld [vmem:[%s6] sm:$0x1]
      %v2211 = vadd.f32 %v2146, %v2147
      %v2212 = vadd.f32 %v2211, %v2148
      %v2213 = vadd.f32 %v2212, %v2149
      %v2214 = vadd.f32 %v2213, %v2150
      %v2215 = vadd.f32 %v2214, %v2151
      %v2216 = vadd.f32 %v2215, %v2152
      %v2217 = vadd.f32 %v2216, %v2153
      %v2218 = vadd.f32 %v2217, %v2154
      %v2219 = vadd.f32 %v2218, %v2155
      %v2220 = vadd.f32 %v2219, %v2156
      %v2221 = vadd.f32 %v2220, %v2157
      %v2222 = vadd.f32 %v2221, %v2158
      %v2223 = vadd.f32 %v2222, %v2159
      %v2224 = vadd.f32 %v2223, %v2160
      %v2225 = vadd.f32 %v2224, %v2161
      %v2226 = vadd.f32 %v2225, %v2162
      %v2227 = vadd.f32 %v2226, %v2163
      %v2228 = vadd.f32 %v2227, %v2164
      %v2229 = vadd.f32 %v2228, %v2165
      %v2230 = vadd.f32 %v2229, %v2166
      %v2231 = vadd.f32 %v2230, %v2167
      %v2232 = vadd.f32 %v2231, %v2168
      %v2233 = vadd.f32 %v2232, %v2169
      %v2234 = vadd.f32 %v2233, %v2170
      %v2235 = vadd.f32 %v2234, %v2171
      %v2236 = vadd.f32 %v2235, %v2172
      %v2237 = vadd.f32 %v2236, %v2173
      %v2238 = vadd.f32 %v2237, %v2174
      %v2239 = vadd.f32 %v2238, %v2175
      %v2240 = vadd.f32 %v2239, %v2176
      %v2241 = vadd.f32 %v2240, %v2177
      %v2242 = vrot.slane %v2241, 4
      %v2243 = vadd.f32 %v2241, %v2242
      %v2244 = vrot.slane %v2243, 2
      %v2245 = vadd.f32 %v2243, %v2244
      %v2246 = vrot.slane %v2245, 1
      %v2247 = vadd.f32 %v2245, %v2246
      %v2248 = vadd.f32 %v2210, %v2247
      %2249 = vst [vmem:[%s6] sm:$0x1] %v2248
      %v2250 = vld [vmem:[%s6 + $0x1] sm:$0x1]
      %v2251 = vmul.f32 %v2146, %v2146
      %v2252 = vmul.f32 %v2147, %v2147
      %v2253 = vmul.f32 %v2148, %v2148
      %v2254 = vmul.f32 %v2149, %v2149
      %v2255 = vmul.f32 %v2150, %v2150
      %v2256 = vmul.f32 %v2151, %v2151
      %v2257 = vmul.f32 %v2152, %v2152
      %v2258 = vmul.f32 %v2153, %v2153
      %v2259 = vmul.f32 %v2154, %v2154
      %v2260 = vmul.f32 %v2155, %v2155
      %v2261 = vmul.f32 %v2156, %v2156
      %v2262 = vmul.f32 %v2157, %v2157
      %v2263 = vmul.f32 %v2158, %v2158
      %v2264 = vmul.f32 %v2159, %v2159
      %v2265 = vmul.f32 %v2160, %v2160
      %v2266 = vmul.f32 %v2161, %v2161
      %v2267 = vmul.f32 %v2162, %v2162
      %v2268 = vmul.f32 %v2163, %v2163
      %v2269 = vmul.f32 %v2164, %v2164
      %v2270 = vmul.f32 %v2165, %v2165
      %v2271 = vmul.f32 %v2166, %v2166
      %v2272 = vmul.f32 %v2167, %v2167
      %v2273 = vmul.f32 %v2168, %v2168
      %v2274 = vmul.f32 %v2169, %v2169
      %v2275 = vmul.f32 %v2170, %v2170
      %v2276 = vmul.f32 %v2171, %v2171
      %v2277 = vmul.f32 %v2172, %v2172
      %v2278 = vmul.f32 %v2173, %v2173
      %v2279 = vmul.f32 %v2174, %v2174
      %v2280 = vmul.f32 %v2175, %v2175
      %v2281 = vmul.f32 %v2176, %v2176
      %v2282 = vmul.f32 %v2177, %v2177
      %v2283 = vadd.f32 %v2251, %v2252
      %v2284 = vadd.f32 %v2283, %v2253
      %v2285 = vadd.f32 %v2284, %v2254
      %v2286 = vadd.f32 %v2285, %v2255
      %v2287 = vadd.f32 %v2286, %v2256
      %v2288 = vadd.f32 %v2287, %v2257
      %v2289 = vadd.f32 %v2288, %v2258
      %v2290 = vadd.f32 %v2289, %v2259
      %v2291 = vadd.f32 %v2290, %v2260
      %v2292 = vadd.f32 %v2291, %v2261
      %v2293 = vadd.f32 %v2292, %v2262
      %v2294 = vadd.f32 %v2293, %v2263
      %v2295 = vadd.f32 %v2294, %v2264
      %v2296 = vadd.f32 %v2295, %v2265
      %v2297 = vadd.f32 %v2296, %v2266
      %v2298 = vadd.f32 %v2297, %v2267
      %v2299 = vadd.f32 %v2298, %v2268
      %v2300 = vadd.f32 %v2299, %v2269
      %v2301 = vadd.f32 %v2300, %v2270
      %v2302 = vadd.f32 %v2301, %v2271
      %v2303 = vadd.f32 %v2302, %v2272
      %v2304 = vadd.f32 %v2303, %v2273
      %v2305 = vadd.f32 %v2304, %v2274
      %v2306 = vadd.f32 %v2305, %v2275
      %v2307 = vadd.f32 %v2306, %v2276
      %v2308 = vadd.f32 %v2307, %v2277
      %v2309 = vadd.f32 %v2308, %v2278
      %v2310 = vadd.f32 %v2309, %v2279
      %v2311 = vadd.f32 %v2310, %v2280
      %v2312 = vadd.f32 %v2311, %v2281
      %v2313 = vadd.f32 %v2312, %v2282
      %v2314 = vrot.slane %v2313, 4
      %v2315 = vadd.f32 %v2313, %v2314
      %v2316 = vrot.slane %v2315, 2
      %v2317 = vadd.f32 %v2315, %v2316
      %v2318 = vrot.slane %v2317, 1
      %v2319 = vadd.f32 %v2317, %v2318
      %v2320 = vadd.f32 %v2250, %v2319
      %2321 = vst [vmem:[%s6 + $0x1] sm:$0x1] %v2320
      %p2322 = scmp.lt.s32.totalorder %s18, 1
      %s2323 = scalar_select %p2322, %s18, 1
      %s2324 = smul.addr %s2323, 32
      %s2325 = smul.addr %s2324, 8
      %s2326 = scalar_lea.vmem %s5, %s2325
      // Predicated region
      $region45: #{resnet_block.4} parent=39 // pred_check
        %p2327 = pneg %p146
      $region46: #{resnet_block.4} parent=39 // pred_check_branch
        %2329 = sbr.rel (%p2327) target = $region48
      $region47: #{resnet_block.4} parent=39 // pred_region
        _
      $region48: #{resnet_block.4} parent=39 // pred_fallthru
        _
      // Predicated region
      $region49: #{resnet_block.4} parent=39 // pred_check
        %p2330 = pneg %p167
      $region50: #{resnet_block.4} parent=39 // pred_check_branch
        %2332 = sbr.rel (%p2330) target = $region52
      $region51: #{resnet_block.4} parent=39 // pred_region
        _
      $region52: #{resnet_block.4} parent=39 // pred_fallthru
        _
      // Predicated region
      $region53: #{resnet_block.4} parent=39 // pred_check
        %p2333 = pneg %p167
      $region54: #{resnet_block.4} parent=39 // pred_check_branch
        %2335 = sbr.rel (%p2333) target = $region56
      $region55: #{resnet_block.4} parent=39 // pred_region
        _
      $region56: #{resnet_block.4} parent=39 // pred_fallthru
        _
    $region40: #{resnet_block.4} parent=5 // pred_fallthru
      _
    %p2336 = scmp.le.s32.totalorder 2, %s13
    // Predicated region
    $region57: #{resnet_block.4} parent=5 // pred_check
      %p2337 = pneg %p2336
    $region58: #{resnet_block.4} parent=5 // pred_check_branch
      %2339 = sbr.rel (%p2337) target = $region60
    $region59: #{resnet_block.4} parent=5 // pred_region
      %s2340 = ssub.s32 %s13, 2
      // Predicated region
      $region61: #{resnet_block.4} parent=59 // pred_check
        %p2341 = pneg %p152
      $region62: #{resnet_block.4} parent=59 // pred_check_branch
        %2343 = sbr.rel (%p2341) target = $region64
      $region63: #{resnet_block.4} parent=59 // pred_region
        %p2344 = scmp.lt.s32.totalorder %s19, 1
        %s2345 = scalar_select %p2344, %s19, 1
        %s2346 = smul.addr %s2345, 32
        %s2347 = smul.addr %s2346, 8
        %s2348 = scalar_lea.vmem %s5, %s2347
      $region64: #{resnet_block.4} parent=59 // pred_fallthru
        _
    $region60: #{resnet_block.4} parent=5 // pred_fallthru
      _
  $region6: #{resnet_block.4} parent=0 // loop_footer
    %s17 = sadd.s32 1, %s13
  $region7: #{resnet_block.4} parent=0 // loop_footer_branch
    %12 = sbr.rel target = $region3
  $region8: #{resnet_block.4} parent=0 // loop_exit
    _

</llo_original>
